<compile_context>
chip_gen: v7x
topology: tpu7x:2x2x1
jax: 0.10.0
libtpu: 0.0.40
codegen_flags: <defaults>
</compile_context>

<pallas_src>
import jax
import jax.numpy as jnp
from jax.experimental import pallas as pl
from jax.experimental.pallas import tpu as pltpu

HIDDEN = 64       # model hidden size (LSTM + fc)
HP = 128          # padded hidden size (lane-aligned)


# ----------------------------------------------------------------------------
# Kernel: full forward (LSTM recurrence + heads + better-ear max + mapping)
# ----------------------------------------------------------------------------
def _word_conf_kernel(
    x_ref,      # (T*BP, 1)   f32  time-major flattened padded confidences
    len_ref,    # (BP, 1)     i32  valid lengths (clamped to [1,T]; 0 = pad row)
    w_ref,      # (HP, 6HP)   f32  [W_hh | W_fc | W1] packed along lanes
    vec_ref,    # (1, 12HP)   f32  [w_ih | b_lstm | b_fc | b1 | w2 | (b2,a,b,0..)]
    out_ref,    # (BH, 1)     f32  mapped predictions (first B rows valid)
    xb_ref,     # (T*BP, 4HP) f32  VMEM scratch: hoisted input contribution
):
    TB = x_ref.shape[0]
    HPk = w_ref.shape[0]
    GH = 4 * HPk                       # packed gate width (i|f|g|o)
    BP = len_ref.shape[0]              # padded 2*ear batch rows (multiple of 16)
    T = TB // BP
    BH = BP // 2                       # rows per ear (multiple of 8)

    lengths = len_ref[...]             # (BP, 1) int32

    # --- packed operand slices (all static, 128-lane aligned) ---------------
    w_hh = w_ref[:, 0:GH]                          # (HP, 4HP)
    w_fc = w_ref[:, GH:GH + HPk]                   # (HP, HP)
    w1 = w_ref[:, GH + HPk:GH + 2 * HPk]           # (HP, HP)

    w_ih = vec_ref[:, 0:GH]                        # (1, 4HP)
    b_lstm = vec_ref[:, GH:2 * GH]                 # (1, 4HP)
    off = 2 * GH
    b_fc = vec_ref[:, off:off + HPk]               # (1, HP)
    b1 = vec_ref[:, off + HPk:off + 2 * HPk]       # (1, HP)
    w2_row = vec_ref[:, off + 2 * HPk:off + 3 * HPk]   # (1, HP)
    t0 = off + 3 * HPk
    b2 = vec_ref[:, t0 + 0:t0 + 1]                 # (1, 1)
    a_map = vec_ref[:, t0 + 1:t0 + 2]              # (1, 1)
    b_map = vec_ref[:, t0 + 2:t0 + 3]              # (1, 1)

    # --- hoist input contribution into VMEM scratch (not vregs) -------------
    # xb[t*BP + j] = x[t, j] * W_ih + (b_ih + b_hh), computed as one MXU outer
    # product.  Per-step reads below are static, sublane-aligned slabs.
    xb_ref[...] = (
        jnp.dot(x_ref[...], w_ih, preferred_element_type=jnp.float32) + b_lstm)

    def sigm(z):  # numerically stable sigmoid, single EUP op
        return 0.5 * (jnp.tanh(0.5 * z) + 1.0)

    h = jnp.zeros((BP, HPk), jnp.float32)
    c = jnp.zeros((BP, HPk), jnp.float32)
    last_h = jnp.zeros((BP, HPk), jnp.float32)

    # Statically unrolled LSTM recurrence (T small & static).  Padded
    # timesteps / rows are computed but never captured (mask t == length-1),
    # matching pack_padded_sequence semantics for the last valid output.
    # Padded hidden lanes [64:128) stay exactly zero (zero weights/biases ->
    # f=0.5, g=0 -> c=h=0).
    for t in range(T):
        xbt = xb_ref[pl.ds(t * BP, BP), :]                         # (BP, 4HP)
        gates = xbt + jnp.dot(h, w_hh, preferred_element_type=jnp.float32)
        i_g = sigm(gates[:, 0 * HPk:1 * HPk])
        f_g = sigm(gates[:, 1 * HPk:2 * HPk])
        g_g = jnp.tanh(gates[:, 2 * HPk:3 * HPk])
        o_g = sigm(gates[:, 3 * HPk:4 * HPk])
        c = f_g * c + i_g * g_g
        h = o_g * jnp.tanh(c)
        last_h = jnp.where(lengths == (t + 1), h, last_h)

    # LSTMModel.fc : Linear(H, H) + ReLU   (padded lanes -> relu(0) = 0)
    feat = jnp.maximum(
        jnp.dot(last_h, w_fc, preferred_element_type=jnp.float32) + b_fc, 0.0)

    # predictor : Linear(H,16) + ReLU + Linear(16,1)
    hid = jnp.maximum(
        jnp.dot(feat, w1, preferred_element_type=jnp.float32) + b1, 0.0)
    # last Linear(16,1) as VPU mul + lane reduce (no N=1 MXU pass)
    pred = jnp.sum(hid * w2_row, axis=-1, keepdims=True) + b2      # (BP, 1)

    # better ear = elementwise max of left / right predictions
    # (sublane-aligned split: left in rows [0,BH), right in rows [BH,BP))
    better = jnp.maximum(pred[:BH, :], pred[BH:, :])               # (BH, 1)

    # MappingLayer: 1/(1+exp(a*x+b)) == 0.5*(1 - tanh((a*x+b)/2))  (no overflow)
    z = a_map * better + b_map
    out_ref[...] = 0.5 * (1.0 - jnp.tanh(0.5 * z))


# ----------------------------------------------------------------------------
# One-time parameter packing (call once at parameter-load time, NOT per call)
# ----------------------------------------------------------------------------
def pack_params(params):
    (w_ih, w_hh, b_ih, b_hh, w_fc, b_fc, w1, b1, w2, b2, a_map, b_map) = params
    H = w_hh.shape[1]          # 64
    P1 = w1.shape[0]           # 16 (predictor hidden)
    G = 4

    def pad_gate_cols(m):      # (rows, 4H) gate-major -> (rows, 4*HP)
        r = m.shape[0]
        return jnp.pad(m.reshape(r, G, H),
                       ((0, 0), (0, 0), (0, HP - H))).reshape(r, G * HP)

    w_ih_p = pad_gate_cols(w_ih.reshape(1, G * H))                    # (1, 4HP)
    b_lstm_p = pad_gate_cols((b_ih + b_hh).reshape(1, G * H))         # (1, 4HP)
    w_hh_p = jnp.pad(pad_gate_cols(w_hh.T), ((0, HP - H), (0, 0)))    # (HP, 4HP)

    w_fc_p = jnp.pad(w_fc.T, ((0, HP - H), (0, HP - H)))              # (HP, HP)
    b_fc_p = jnp.pad(b_fc.reshape(1, H), ((0, 0), (0, HP - H)))       # (1, HP)
    w1_p = jnp.pad(w1.T, ((0, HP - H), (0, HP - P1)))                 # (HP, HP)
    b1_p = jnp.pad(b1.reshape(1, P1), ((0, 0), (0, HP - P1)))         # (1, HP)
    w2_row = jnp.pad(w2.reshape(1, P1), ((0, 0), (0, HP - P1)))       # (1, HP)

    tail = jnp.zeros((1, HP), jnp.float32)
    tail = tail.at[0, 0].set(b2[0])
    tail = tail.at[0, 1].set(a_map)
    tail = tail.at[0, 2].set(b_map)

    w_packed = jnp.concatenate([w_hh_p, w_fc_p, w1_p], axis=1)        # (HP, 6HP)
    vec_packed = jnp.concatenate(
        [w_ih_p, b_lstm_p, b_fc_p, b1_p, w2_row, tail], axis=1)       # (1, 12HP)
    return w_packed, vec_packed


# ----------------------------------------------------------------------------
# Wrapper: input layout plumbing + pallas_call (packed params passed in)
# ----------------------------------------------------------------------------
@jax.jit
def word_confidence_be_forward(conf_l, conf_r, len_l, len_r, w_packed, vec_packed):
    """conf_l/conf_r: (B, T) padded word confidences; len_l/len_r: (B,) lengths."""
    B, T = conf_l.shape
    BH = ((B + 7) // 8) * 8          # rows per ear, sublane-aligned
    BP = 2 * BH                      # total padded batch rows

    def pad_ear(conf, lens):
        lens = jnp.clip(lens.astype(jnp.int32), 1, T)   # guard length > T / < 1
        conf = jnp.pad(conf.astype(jnp.float32), ((0, BH - B), (0, 0)))
        lens = jnp.pad(lens, (0, BH - B))                # pad rows: len 0 -> ignored
        return conf, lens

    cl, ll = pad_ear(conf_l, len_l)
    cr, lr = pad_ear(conf_r, len_r)
    x = jnp.concatenate([cl, cr], axis=0)                       # (BP, T)
    lens = jnp.concatenate([ll, lr], axis=0).reshape(BP, 1)     # (BP, 1)
    x_col = x.T.reshape(T * BP, 1)   # time-major flattened column

    vmem = pl.BlockSpec(memory_space=pltpu.MemorySpace.VMEM)
    out = pl.pallas_call(
        _word_conf_kernel,
        out_shape=jax.ShapeDtypeStruct((BH, 1), jnp.float32),
        in_specs=[vmem] * 4,
        out_specs=vmem,
        scratch_shapes=[pltpu.VMEM((T * BP, 4 * HP), jnp.float32)],
        compiler_params=pltpu.CompilerParams(
            vmem_limit_bytes=16 * 1024 * 1024),
    )(x_col, lens, w_packed, vec_packed)
    return out[:B, :]


# ----------------------------------------------------------------------------
# Pure-JAX reference (unpadded, straightforward) for a sanity check
# ----------------------------------------------------------------------------
def _reference(conf_l, conf_r, len_l, len_r, params):
    (w_ih, w_hh, b_ih, b_hh, w_fc, b_fc, w1, b1, w2, b2, a_map, b_map) = params
    H = w_hh.shape[1]

    def run_ear(x, lens):
        B, T = x.shape
        h = jnp.zeros((B, H), jnp.float32)
        c = jnp.zeros((B, H), jnp.float32)
        last_h = jnp.zeros((B, H), jnp.float32)
        for t in range(T):
            gates = x[:, t:t + 1] @ w_ih.T + h @ w_hh.T + b_ih + b_hh
            i_g = jax.nn.sigmoid(gates[:, :H])
            f_g = jax.nn.sigmoid(gates[:, H:2 * H])
            g_g = jnp.tanh(gates[:, 2 * H:3 * H])
            o_g = jax.nn.sigmoid(gates[:, 3 * H:])
            c = f_g * c + i_g * g_g
            h = o_g * jnp.tanh(c)
            last_h = jnp.where((lens == t + 1)[:, None], h, last_h)
        feat = jnp.maximum(last_h @ w_fc.T + b_fc, 0.0)
        hid = jnp.maximum(feat @ w1.T + b1, 0.0)
        return hid @ w2.T + b2

    pred_l = run_ear(conf_l, len_l)
    pred_r = run_ear(conf_r, len_r)
    better = jnp.maximum(pred_l, pred_r)
    return 1.0 / (1.0 + jnp.exp(a_map * better + b_map))


# ----------------------------------------------------------------------------
# Deterministic parameter init (shapes from WordConfidence_BE.__init__)
# ----------------------------------------------------------------------------
def init_params(key, hidden=HIDDEN):
    ks = jax.random.split(key, 10)
    s = 0.1
    w_ih = jax.random.normal(ks[0], (4 * hidden, 1), jnp.float32) * s
    w_hh = jax.random.normal(ks[1], (4 * hidden, hidden), jnp.float32) * s
    b_ih = jax.random.normal(ks[2], (4 * hidden,), jnp.float32) * s
    b_hh = jax.random.normal(ks[3], (4 * hidden,), jnp.float32) * s
    w_fc = jax.random.normal(ks[4], (hidden, hidden), jnp.float32) * s
    b_fc = jax.random.normal(ks[5], (hidden,), jnp.float32) * s
    w1 = jax.random.normal(ks[6], (16, hidden), jnp.float32) * s
    b1 = jax.random.normal(ks[7], (16,), jnp.float32) * s
    w2 = jax.random.normal(ks[8], (1, 16), jnp.float32) * s
    b2 = jax.random.normal(ks[9], (1,), jnp.float32) * s
    a_map = jnp.array(0.5, jnp.float32)
    b_map = jnp.array(0.5, jnp.float32)
    return (w_ih, w_hh, b_ih, b_hh, w_fc, b_fc, w1, b1, w2, b2, a_map, b_map)


if __name__ == "__main__":
    key = jax.random.PRNGKey(0)
    k_param, k_l, k_r = jax.random.split(key, 3)

    B, T = 2, 8
    params = init_params(k_param, hidden=HIDDEN)

    # Synthetic padded word-confidence sequences (stand-in for ASR output).
    conf_l = jax.random.uniform(k_l, (B, T), jnp.float32)
    conf_r = jax.random.uniform(k_r, (B, T), jnp.float32)
    len_l = jnp.array([5, 8], jnp.int32)   # lengths >= 1 (module substitutes [0.0]
    len_r = jnp.array([8, 3], jnp.int32)   # for empty transcripts)
    # zero out padding like pad_sequence would
    t_idx = jnp.arange(T)[None, :]
    conf_l = jnp.where(t_idx < len_l[:, None], conf_l, 0.0)
    conf_r = jnp.where(t_idx < len_r[:, None], conf_r, 0.0)

    # Pack/pad weights ONCE at parameter-load time (not inside the per-call jit).
    w_packed, vec_packed = pack_params(params)
    w_packed = jax.block_until_ready(w_packed)
    vec_packed = jax.block_until_ready(vec_packed)

    pred = word_confidence_be_forward(conf_l, conf_r, len_l, len_r,
                                      w_packed, vec_packed)
    pred = jax.block_until_ready(pred)

    ref = _reference(conf_l, conf_r, len_l, len_r, params)
    assert pred.shape == (B, 1)
    assert jnp.allclose(pred, ref, rtol=1e-2, atol=1e-2), (pred, ref)

    print("KERNEL_OK")
</pallas_src>

<mosaic_0001>
module attributes {stable_mosaic.version = 11 : i64} {
  func.func @_word_conf_kernel(%arg0: memref<128x1xf32, #tpu.memory_space<vmem>>, %arg1: memref<16x1xi32, #tpu.memory_space<vmem>>, %arg2: memref<128x768xf32, #tpu.memory_space<vmem>>, %arg3: memref<1x1536xf32, #tpu.memory_space<vmem>>, %arg4: memref<8x1xf32, #tpu.memory_space<vmem>>, %arg5: memref<128x512xf32, #tpu.memory_space<vmem>>) attributes {dimension_semantics = [], scalar_prefetch = 0 : i64, scratch_operands = 1 : i64, tpu.core_type = #tpu.core_type<tc>} {
    %c0 = arith.constant 0 : index
    %c0_0 = arith.constant 0 : index
    %0 = vector.load %arg1[%c0, %c0_0] : memref<16x1xi32, #tpu.memory_space<vmem>>, vector<16x1xi32>
    %c0_1 = arith.constant 0 : index
    %c0_2 = arith.constant 0 : index
    %1 = vector.load %arg2[%c0_1, %c0_2] : memref<128x768xf32, #tpu.memory_space<vmem>>, vector<128x512xf32>
    %c0_3 = arith.constant 0 : index
    %c512 = arith.constant 512 : index
    %2 = vector.load %arg2[%c0_3, %c512] : memref<128x768xf32, #tpu.memory_space<vmem>>, vector<128x128xf32>
    %c0_4 = arith.constant 0 : index
    %c640 = arith.constant 640 : index
    %3 = vector.load %arg2[%c0_4, %c640] : memref<128x768xf32, #tpu.memory_space<vmem>>, vector<128x128xf32>
    %c0_5 = arith.constant 0 : index
    %c0_6 = arith.constant 0 : index
    %4 = vector.load %arg3[%c0_5, %c0_6] : memref<1x1536xf32, #tpu.memory_space<vmem>>, vector<1x512xf32>
    %c0_7 = arith.constant 0 : index
    %c512_8 = arith.constant 512 : index
    %5 = vector.load %arg3[%c0_7, %c512_8] : memref<1x1536xf32, #tpu.memory_space<vmem>>, vector<1x512xf32>
    %c0_9 = arith.constant 0 : index
    %c1024 = arith.constant 1024 : index
    %6 = vector.load %arg3[%c0_9, %c1024] : memref<1x1536xf32, #tpu.memory_space<vmem>>, vector<1x128xf32>
    %c0_10 = arith.constant 0 : index
    %c1152 = arith.constant 1152 : index
    %7 = vector.load %arg3[%c0_10, %c1152] : memref<1x1536xf32, #tpu.memory_space<vmem>>, vector<1x128xf32>
    %c0_11 = arith.constant 0 : index
    %c1280 = arith.constant 1280 : index
    %8 = vector.load %arg3[%c0_11, %c1280] : memref<1x1536xf32, #tpu.memory_space<vmem>>, vector<1x128xf32>
    %c0_12 = arith.constant 0 : index
    %c1408 = arith.constant 1408 : index
    %9 = vector.load %arg3[%c0_12, %c1408] : memref<1x1536xf32, #tpu.memory_space<vmem>>, vector<1x1xf32>
    %c0_13 = arith.constant 0 : index
    %c1409 = arith.constant 1409 : index
    %10 = vector.load %arg3[%c0_13, %c1409] : memref<1x1536xf32, #tpu.memory_space<vmem>>, vector<1x1xf32>
    %c0_14 = arith.constant 0 : index
    %c1410 = arith.constant 1410 : index
    %11 = vector.load %arg3[%c0_14, %c1410] : memref<1x1536xf32, #tpu.memory_space<vmem>>, vector<1x1xf32>
    %c0_15 = arith.constant 0 : index
    %c0_16 = arith.constant 0 : index
    %12 = vector.load %arg0[%c0_15, %c0_16] : memref<128x1xf32, #tpu.memory_space<vmem>>, vector<128x1xf32>
    %cst = arith.constant dense<0.000000e+00> : vector<128x512xf32>
    %13 = tpu.matmul %12, %4, %cst {dimension_numbers = #tpu.dot_dimension_numbers<[1], [0], [0], [1], [0, 0, 1, 1], [], []>} : vector<128x1xf32>, vector<1x512xf32>, vector<128x512xf32> -> vector<128x512xf32>
    %14 = vector.broadcast %5 : vector<1x512xf32> to vector<128x512xf32>
    %15 = arith.addf %13, %14 : vector<128x512xf32>
    %c0_17 = arith.constant 0 : index
    %c0_18 = arith.constant 0 : index
    %16 = vector.load %arg5[%c0_17, %c0_18] : memref<128x512xf32, #tpu.memory_space<vmem>>, vector<128x512xf32>
    tpu.vector_store %arg5[%c0_17, %c0_18], %15 {strides = array<i32>} : memref<128x512xf32, #tpu.memory_space<vmem>>, vector<128x512xf32>,
    %cst_19 = arith.constant 0.000000e+00 : f32
    %17 = vector.broadcast %cst_19 : f32 to vector<16x128xf32>
    %cst_20 = arith.constant 0.000000e+00 : f32
    %18 = vector.broadcast %cst_20 : f32 to vector<16x128xf32>
    %cst_21 = arith.constant 0.000000e+00 : f32
    %19 = vector.broadcast %cst_21 : f32 to vector<16x128xf32>
    %c0_22 = arith.constant 0 : index
    %c0_23 = arith.constant 0 : index
    %20 = vector.load %arg5[%c0_22, %c0_23] : memref<128x512xf32, #tpu.memory_space<vmem>>, vector<16x512xf32>
    %cst_24 = arith.constant dense<0.000000e+00> : vector<16x512xf32>
    %21 = tpu.matmul %17, %1, %cst_24 {dimension_numbers = #tpu.dot_dimension_numbers<[1], [0], [0], [1], [0, 0, 1, 1], [], []>} : vector<16x128xf32>, vector<128x512xf32>, vector<16x512xf32> -> vector<16x512xf32>
    %22 = arith.addf %20, %21 : vector<16x512xf32>
    %23 = vector.extract_strided_slice %22 {offsets = [0, 0], sizes = [16, 128], strides = [1, 1]} : vector<16x512xf32> to vector<16x128xf32>
    %cst_25 = arith.constant 5.000000e-01 : f32
    %24 = vector.broadcast %cst_25 : f32 to vector<16x128xf32>
    %25 = arith.mulf %24, %23 : vector<16x128xf32>
    %26 = math.tanh %25 : vector<16x128xf32>
    %cst_26 = arith.constant 1.000000e+00 : f32
    %27 = vector.broadcast %cst_26 : f32 to vector<16x128xf32>
    %28 = arith.addf %26, %27 : vector<16x128xf32>
    %cst_27 = arith.constant 5.000000e-01 : f32
    %29 = vector.broadcast %cst_27 : f32 to vector<16x128xf32>
    %30 = arith.mulf %29, %28 : vector<16x128xf32>
    %31 = vector.extract_strided_slice %22 {offsets = [0, 128], sizes = [16, 128], strides = [1, 1]} : vector<16x512xf32> to vector<16x128xf32>
    %cst_28 = arith.constant 5.000000e-01 : f32
    %32 = vector.broadcast %cst_28 : f32 to vector<16x128xf32>
    %33 = arith.mulf %32, %31 : vector<16x128xf32>
    %34 = math.tanh %33 : vector<16x128xf32>
    %cst_29 = arith.constant 1.000000e+00 : f32
    %35 = vector.broadcast %cst_29 : f32 to vector<16x128xf32>
    %36 = arith.addf %34, %35 : vector<16x128xf32>
    %cst_30 = arith.constant 5.000000e-01 : f32
    %37 = vector.broadcast %cst_30 : f32 to vector<16x128xf32>
    %38 = arith.mulf %37, %36 : vector<16x128xf32>
    %39 = vector.extract_strided_slice %22 {offsets = [0, 256], sizes = [16, 128], strides = [1, 1]} : vector<16x512xf32> to vector<16x128xf32>
    %40 = math.tanh %39 : vector<16x128xf32>
    %41 = vector.extract_strided_slice %22 {offsets = [0, 384], sizes = [16, 128], strides = [1, 1]} : vector<16x512xf32> to vector<16x128xf32>
    %cst_31 = arith.constant 5.000000e-01 : f32
    %42 = vector.broadcast %cst_31 : f32 to vector<16x128xf32>
    %43 = arith.mulf %42, %41 : vector<16x128xf32>
    %44 = math.tanh %43 : vector<16x128xf32>
    %cst_32 = arith.constant 1.000000e+00 : f32
    %45 = vector.broadcast %cst_32 : f32 to vector<16x128xf32>
    %46 = arith.addf %44, %45 : vector<16x128xf32>
    %cst_33 = arith.constant 5.000000e-01 : f32
    %47 = vector.broadcast %cst_33 : f32 to vector<16x128xf32>
    %48 = arith.mulf %47, %46 : vector<16x128xf32>
    %49 = arith.mulf %38, %18 : vector<16x128xf32>
    %50 = arith.mulf %30, %40 : vector<16x128xf32>
    %51 = arith.addf %49, %50 : vector<16x128xf32>
    %52 = math.tanh %51 : vector<16x128xf32>
    %53 = arith.mulf %48, %52 : vector<16x128xf32>
    %c1_i32 = arith.constant 1 : i32
    %54 = vector.broadcast %c1_i32 : i32 to vector<16x1xi32>
    %55 = arith.cmpi eq, %0, %54 : vector<16x1xi32>
    %56 = vector.shape_cast %55 : vector<16x1xi1> to vector<16x1xi1>
    %57 = vector.broadcast %56 : vector<16x1xi1> to vector<16x128xi1>
    %58 = arith.select %57, %53, %19 : vector<16x128xi1>, vector<16x128xf32>
    %c16 = arith.constant 16 : index
    %c0_34 = arith.constant 0 : index
    %59 = vector.load %arg5[%c16, %c0_34] : memref<128x512xf32, #tpu.memory_space<vmem>>, vector<16x512xf32>
    %cst_35 = arith.constant dense<0.000000e+00> : vector<16x512xf32>
    %60 = tpu.matmul %53, %1, %cst_35 {dimension_numbers = #tpu.dot_dimension_numbers<[1], [0], [0], [1], [0, 0, 1, 1], [], []>} : vector<16x128xf32>, vector<128x512xf32>, vector<16x512xf32> -> vector<16x512xf32>
    %61 = arith.addf %59, %60 : vector<16x512xf32>
    %62 = vector.extract_strided_slice %61 {offsets = [0, 0], sizes = [16, 128], strides = [1, 1]} : vector<16x512xf32> to vector<16x128xf32>
    %cst_36 = arith.constant 5.000000e-01 : f32
    %63 = vector.broadcast %cst_36 : f32 to vector<16x128xf32>
    %64 = arith.mulf %63, %62 : vector<16x128xf32>
    %65 = math.tanh %64 : vector<16x128xf32>
    %cst_37 = arith.constant 1.000000e+00 : f32
    %66 = vector.broadcast %cst_37 : f32 to vector<16x128xf32>
    %67 = arith.addf %65, %66 : vector<16x128xf32>
    %cst_38 = arith.constant 5.000000e-01 : f32
    %68 = vector.broadcast %cst_38 : f32 to vector<16x128xf32>
    %69 = arith.mulf %68, %67 : vector<16x128xf32>
    %70 = vector.extract_strided_slice %61 {offsets = [0, 128], sizes = [16, 128], strides = [1, 1]} : vector<16x512xf32> to vector<16x128xf32>
    %cst_39 = arith.constant 5.000000e-01 : f32
    %71 = vector.broadcast %cst_39 : f32 to vector<16x128xf32>
    %72 = arith.mulf %71, %70 : vector<16x128xf32>
    %73 = math.tanh %72 : vector<16x128xf32>
    %cst_40 = arith.constant 1.000000e+00 : f32
    %74 = vector.broadcast %cst_40 : f32 to vector<16x128xf32>
    %75 = arith.addf %73, %74 : vector<16x128xf32>
    %cst_41 = arith.constant 5.000000e-01 : f32
    %76 = vector.broadcast %cst_41 : f32 to vector<16x128xf32>
    %77 = arith.mulf %76, %75 : vector<16x128xf32>
    %78 = vector.extract_strided_slice %61 {offsets = [0, 256], sizes = [16, 128], strides = [1, 1]} : vector<16x512xf32> to vector<16x128xf32>
    %79 = math.tanh %78 : vector<16x128xf32>
    %80 = vector.extract_strided_slice %61 {offsets = [0, 384], sizes = [16, 128], strides = [1, 1]} : vector<16x512xf32> to vector<16x128xf32>
    %cst_42 = arith.constant 5.000000e-01 : f32
    %81 = vector.broadcast %cst_42 : f32 to vector<16x128xf32>
    %82 = arith.mulf %81, %80 : vector<16x128xf32>
    %83 = math.tanh %82 : vector<16x128xf32>
    %cst_43 = arith.constant 1.000000e+00 : f32
    %84 = vector.broadcast %cst_43 : f32 to vector<16x128xf32>
    %85 = arith.addf %83, %84 : vector<16x128xf32>
    %cst_44 = arith.constant 5.000000e-01 : f32
    %86 = vector.broadcast %cst_44 : f32 to vector<16x128xf32>
    %87 = arith.mulf %86, %85 : vector<16x128xf32>
    %88 = arith.mulf %77, %51 : vector<16x128xf32>
    %89 = arith.mulf %69, %79 : vector<16x128xf32>
    %90 = arith.addf %88, %89 : vector<16x128xf32>
    %91 = math.tanh %90 : vector<16x128xf32>
    %92 = arith.mulf %87, %91 : vector<16x128xf32>
    %c2_i32 = arith.constant 2 : i32
    %93 = vector.broadcast %c2_i32 : i32 to vector<16x1xi32>
    %94 = arith.cmpi eq, %0, %93 : vector<16x1xi32>
    %95 = vector.shape_cast %94 : vector<16x1xi1> to vector<16x1xi1>
    %96 = vector.broadcast %95 : vector<16x1xi1> to vector<16x128xi1>
    %97 = arith.select %96, %92, %58 : vector<16x128xi1>, vector<16x128xf32>
    %c32 = arith.constant 32 : index
    %c0_45 = arith.constant 0 : index
    %98 = vector.load %arg5[%c32, %c0_45] : memref<128x512xf32, #tpu.memory_space<vmem>>, vector<16x512xf32>
    %cst_46 = arith.constant dense<0.000000e+00> : vector<16x512xf32>
    %99 = tpu.matmul %92, %1, %cst_46 {dimension_numbers = #tpu.dot_dimension_numbers<[1], [0], [0], [1], [0, 0, 1, 1], [], []>} : vector<16x128xf32>, vector<128x512xf32>, vector<16x512xf32> -> vector<16x512xf32>
    %100 = arith.addf %98, %99 : vector<16x512xf32>
    %101 = vector.extract_strided_slice %100 {offsets = [0, 0], sizes = [16, 128], strides = [1, 1]} : vector<16x512xf32> to vector<16x128xf32>
    %cst_47 = arith.constant 5.000000e-01 : f32
    %102 = vector.broadcast %cst_47 : f32 to vector<16x128xf32>
    %103 = arith.mulf %102, %101 : vector<16x128xf32>
    %104 = math.tanh %103 : vector<16x128xf32>
    %cst_48 = arith.constant 1.000000e+00 : f32
    %105 = vector.broadcast %cst_48 : f32 to vector<16x128xf32>
    %106 = arith.addf %104, %105 : vector<16x128xf32>
    %cst_49 = arith.constant 5.000000e-01 : f32
    %107 = vector.broadcast %cst_49 : f32 to vector<16x128xf32>
    %108 = arith.mulf %107, %106 : vector<16x128xf32>
    %109 = vector.extract_strided_slice %100 {offsets = [0, 128], sizes = [16, 128], strides = [1, 1]} : vector<16x512xf32> to vector<16x128xf32>
    %cst_50 = arith.constant 5.000000e-01 : f32
    %110 = vector.broadcast %cst_50 : f32 to vector<16x128xf32>
    %111 = arith.mulf %110, %109 : vector<16x128xf32>
    %112 = math.tanh %111 : vector<16x128xf32>
    %cst_51 = arith.constant 1.000000e+00 : f32
    %113 = vector.broadcast %cst_51 : f32 to vector<16x128xf32>
    %114 = arith.addf %112, %113 : vector<16x128xf32>
    %cst_52 = arith.constant 5.000000e-01 : f32
    %115 = vector.broadcast %cst_52 : f32 to vector<16x128xf32>
    %116 = arith.mulf %115, %114 : vector<16x128xf32>
    %117 = vector.extract_strided_slice %100 {offsets = [0, 256], sizes = [16, 128], strides = [1, 1]} : vector<16x512xf32> to vector<16x128xf32>
    %118 = math.tanh %117 : vector<16x128xf32>
    %119 = vector.extract_strided_slice %100 {offsets = [0, 384], sizes = [16, 128], strides = [1, 1]} : vector<16x512xf32> to vector<16x128xf32>
    %cst_53 = arith.constant 5.000000e-01 : f32
    %120 = vector.broadcast %cst_53 : f32 to vector<16x128xf32>
    %121 = arith.mulf %120, %119 : vector<16x128xf32>
    %122 = math.tanh %121 : vector<16x128xf32>
    %cst_54 = arith.constant 1.000000e+00 : f32
    %123 = vector.broadcast %cst_54 : f32 to vector<16x128xf32>
    %124 = arith.addf %122, %123 : vector<16x128xf32>
    %cst_55 = arith.constant 5.000000e-01 : f32
    %125 = vector.broadcast %cst_55 : f32 to vector<16x128xf32>
    %126 = arith.mulf %125, %124 : vector<16x128xf32>
    %127 = arith.mulf %116, %90 : vector<16x128xf32>
    %128 = arith.mulf %108, %118 : vector<16x128xf32>
    %129 = arith.addf %127, %128 : vector<16x128xf32>
    %130 = math.tanh %129 : vector<16x128xf32>
    %131 = arith.mulf %126, %130 : vector<16x128xf32>
    %c3_i32 = arith.constant 3 : i32
    %132 = vector.broadcast %c3_i32 : i32 to vector<16x1xi32>
    %133 = arith.cmpi eq, %0, %132 : vector<16x1xi32>
    %134 = vector.shape_cast %133 : vector<16x1xi1> to vector<16x1xi1>
    %135 = vector.broadcast %134 : vector<16x1xi1> to vector<16x128xi1>
    %136 = arith.select %135, %131, %97 : vector<16x128xi1>, vector<16x128xf32>
    %c48 = arith.constant 48 : index
    %c0_56 = arith.constant 0 : index
    %137 = vector.load %arg5[%c48, %c0_56] : memref<128x512xf32, #tpu.memory_space<vmem>>, vector<16x512xf32>
    %cst_57 = arith.constant dense<0.000000e+00> : vector<16x512xf32>
    %138 = tpu.matmul %131, %1, %cst_57 {dimension_numbers = #tpu.dot_dimension_numbers<[1], [0], [0], [1], [0, 0, 1, 1], [], []>} : vector<16x128xf32>, vector<128x512xf32>, vector<16x512xf32> -> vector<16x512xf32>
    %139 = arith.addf %137, %138 : vector<16x512xf32>
    %140 = vector.extract_strided_slice %139 {offsets = [0, 0], sizes = [16, 128], strides = [1, 1]} : vector<16x512xf32> to vector<16x128xf32>
    %cst_58 = arith.constant 5.000000e-01 : f32
    %141 = vector.broadcast %cst_58 : f32 to vector<16x128xf32>
    %142 = arith.mulf %141, %140 : vector<16x128xf32>
    %143 = math.tanh %142 : vector<16x128xf32>
    %cst_59 = arith.constant 1.000000e+00 : f32
    %144 = vector.broadcast %cst_59 : f32 to vector<16x128xf32>
    %145 = arith.addf %143, %144 : vector<16x128xf32>
    %cst_60 = arith.constant 5.000000e-01 : f32
    %146 = vector.broadcast %cst_60 : f32 to vector<16x128xf32>
    %147 = arith.mulf %146, %145 : vector<16x128xf32>
    %148 = vector.extract_strided_slice %139 {offsets = [0, 128], sizes = [16, 128], strides = [1, 1]} : vector<16x512xf32> to vector<16x128xf32>
    %cst_61 = arith.constant 5.000000e-01 : f32
    %149 = vector.broadcast %cst_61 : f32 to vector<16x128xf32>
    %150 = arith.mulf %149, %148 : vector<16x128xf32>
    %151 = math.tanh %150 : vector<16x128xf32>
    %cst_62 = arith.constant 1.000000e+00 : f32
    %152 = vector.broadcast %cst_62 : f32 to vector<16x128xf32>
    %153 = arith.addf %151, %152 : vector<16x128xf32>
    %cst_63 = arith.constant 5.000000e-01 : f32
    %154 = vector.broadcast %cst_63 : f32 to vector<16x128xf32>
    %155 = arith.mulf %154, %153 : vector<16x128xf32>
    %156 = vector.extract_strided_slice %139 {offsets = [0, 256], sizes = [16, 128], strides = [1, 1]} : vector<16x512xf32> to vector<16x128xf32>
    %157 = math.tanh %156 : vector<16x128xf32>
    %158 = vector.extract_strided_slice %139 {offsets = [0, 384], sizes = [16, 128], strides = [1, 1]} : vector<16x512xf32> to vector<16x128xf32>
    %cst_64 = arith.constant 5.000000e-01 : f32
    %159 = vector.broadcast %cst_64 : f32 to vector<16x128xf32>
    %160 = arith.mulf %159, %158 : vector<16x128xf32>
    %161 = math.tanh %160 : vector<16x128xf32>
    %cst_65 = arith.constant 1.000000e+00 : f32
    %162 = vector.broadcast %cst_65 : f32 to vector<16x128xf32>
    %163 = arith.addf %161, %162 : vector<16x128xf32>
    %cst_66 = arith.constant 5.000000e-01 : f32
    %164 = vector.broadcast %cst_66 : f32 to vector<16x128xf32>
    %165 = arith.mulf %164, %163 : vector<16x128xf32>
    %166 = arith.mulf %155, %129 : vector<16x128xf32>
    %167 = arith.mulf %147, %157 : vector<16x128xf32>
    %168 = arith.addf %166, %167 : vector<16x128xf32>
    %169 = math.tanh %168 : vector<16x128xf32>
    %170 = arith.mulf %165, %169 : vector<16x128xf32>
    %c4_i32 = arith.constant 4 : i32
    %171 = vector.broadcast %c4_i32 : i32 to vector<16x1xi32>
    %172 = arith.cmpi eq, %0, %171 : vector<16x1xi32>
    %173 = vector.shape_cast %172 : vector<16x1xi1> to vector<16x1xi1>
    %174 = vector.broadcast %173 : vector<16x1xi1> to vector<16x128xi1>
    %175 = arith.select %174, %170, %136 : vector<16x128xi1>, vector<16x128xf32>
    %c64 = arith.constant 64 : index
    %c0_67 = arith.constant 0 : index
    %176 = vector.load %arg5[%c64, %c0_67] : memref<128x512xf32, #tpu.memory_space<vmem>>, vector<16x512xf32>
    %cst_68 = arith.constant dense<0.000000e+00> : vector<16x512xf32>
    %177 = tpu.matmul %170, %1, %cst_68 {dimension_numbers = #tpu.dot_dimension_numbers<[1], [0], [0], [1], [0, 0, 1, 1], [], []>} : vector<16x128xf32>, vector<128x512xf32>, vector<16x512xf32> -> vector<16x512xf32>
    %178 = arith.addf %176, %177 : vector<16x512xf32>
    %179 = vector.extract_strided_slice %178 {offsets = [0, 0], sizes = [16, 128], strides = [1, 1]} : vector<16x512xf32> to vector<16x128xf32>
    %cst_69 = arith.constant 5.000000e-01 : f32
    %180 = vector.broadcast %cst_69 : f32 to vector<16x128xf32>
    %181 = arith.mulf %180, %179 : vector<16x128xf32>
    %182 = math.tanh %181 : vector<16x128xf32>
    %cst_70 = arith.constant 1.000000e+00 : f32
    %183 = vector.broadcast %cst_70 : f32 to vector<16x128xf32>
    %184 = arith.addf %182, %183 : vector<16x128xf32>
    %cst_71 = arith.constant 5.000000e-01 : f32
    %185 = vector.broadcast %cst_71 : f32 to vector<16x128xf32>
    %186 = arith.mulf %185, %184 : vector<16x128xf32>
    %187 = vector.extract_strided_slice %178 {offsets = [0, 128], sizes = [16, 128], strides = [1, 1]} : vector<16x512xf32> to vector<16x128xf32>
    %cst_72 = arith.constant 5.000000e-01 : f32
    %188 = vector.broadcast %cst_72 : f32 to vector<16x128xf32>
    %189 = arith.mulf %188, %187 : vector<16x128xf32>
    %190 = math.tanh %189 : vector<16x128xf32>
    %cst_73 = arith.constant 1.000000e+00 : f32
    %191 = vector.broadcast %cst_73 : f32 to vector<16x128xf32>
    %192 = arith.addf %190, %191 : vector<16x128xf32>
    %cst_74 = arith.constant 5.000000e-01 : f32
    %193 = vector.broadcast %cst_74 : f32 to vector<16x128xf32>
    %194 = arith.mulf %193, %192 : vector<16x128xf32>
    %195 = vector.extract_strided_slice %178 {offsets = [0, 256], sizes = [16, 128], strides = [1, 1]} : vector<16x512xf32> to vector<16x128xf32>
    %196 = math.tanh %195 : vector<16x128xf32>
    %197 = vector.extract_strided_slice %178 {offsets = [0, 384], sizes = [16, 128], strides = [1, 1]} : vector<16x512xf32> to vector<16x128xf32>
    %cst_75 = arith.constant 5.000000e-01 : f32
    %198 = vector.broadcast %cst_75 : f32 to vector<16x128xf32>
    %199 = arith.mulf %198, %197 : vector<16x128xf32>
    %200 = math.tanh %199 : vector<16x128xf32>
    %cst_76 = arith.constant 1.000000e+00 : f32
    %201 = vector.broadcast %cst_76 : f32 to vector<16x128xf32>
    %202 = arith.addf %200, %201 : vector<16x128xf32>
    %cst_77 = arith.constant 5.000000e-01 : f32
    %203 = vector.broadcast %cst_77 : f32 to vector<16x128xf32>
    %204 = arith.mulf %203, %202 : vector<16x128xf32>
    %205 = arith.mulf %194, %168 : vector<16x128xf32>
    %206 = arith.mulf %186, %196 : vector<16x128xf32>
    %207 = arith.addf %205, %206 : vector<16x128xf32>
    %208 = math.tanh %207 : vector<16x128xf32>
    %209 = arith.mulf %204, %208 : vector<16x128xf32>
    %c5_i32 = arith.constant 5 : i32
    %210 = vector.broadcast %c5_i32 : i32 to vector<16x1xi32>
    %211 = arith.cmpi eq, %0, %210 : vector<16x1xi32>
    %212 = vector.shape_cast %211 : vector<16x1xi1> to vector<16x1xi1>
    %213 = vector.broadcast %212 : vector<16x1xi1> to vector<16x128xi1>
    %214 = arith.select %213, %209, %175 : vector<16x128xi1>, vector<16x128xf32>
    %c80 = arith.constant 80 : index
    %c0_78 = arith.constant 0 : index
    %215 = vector.load %arg5[%c80, %c0_78] : memref<128x512xf32, #tpu.memory_space<vmem>>, vector<16x512xf32>
    %cst_79 = arith.constant dense<0.000000e+00> : vector<16x512xf32>
    %216 = tpu.matmul %209, %1, %cst_79 {dimension_numbers = #tpu.dot_dimension_numbers<[1], [0], [0], [1], [0, 0, 1, 1], [], []>} : vector<16x128xf32>, vector<128x512xf32>, vector<16x512xf32> -> vector<16x512xf32>
    %217 = arith.addf %215, %216 : vector<16x512xf32>
    %218 = vector.extract_strided_slice %217 {offsets = [0, 0], sizes = [16, 128], strides = [1, 1]} : vector<16x512xf32> to vector<16x128xf32>
    %cst_80 = arith.constant 5.000000e-01 : f32
    %219 = vector.broadcast %cst_80 : f32 to vector<16x128xf32>
    %220 = arith.mulf %219, %218 : vector<16x128xf32>
    %221 = math.tanh %220 : vector<16x128xf32>
    %cst_81 = arith.constant 1.000000e+00 : f32
    %222 = vector.broadcast %cst_81 : f32 to vector<16x128xf32>
    %223 = arith.addf %221, %222 : vector<16x128xf32>
    %cst_82 = arith.constant 5.000000e-01 : f32
    %224 = vector.broadcast %cst_82 : f32 to vector<16x128xf32>
    %225 = arith.mulf %224, %223 : vector<16x128xf32>
    %226 = vector.extract_strided_slice %217 {offsets = [0, 128], sizes = [16, 128], strides = [1, 1]} : vector<16x512xf32> to vector<16x128xf32>
    %cst_83 = arith.constant 5.000000e-01 : f32
    %227 = vector.broadcast %cst_83 : f32 to vector<16x128xf32>
    %228 = arith.mulf %227, %226 : vector<16x128xf32>
    %229 = math.tanh %228 : vector<16x128xf32>
    %cst_84 = arith.constant 1.000000e+00 : f32
    %230 = vector.broadcast %cst_84 : f32 to vector<16x128xf32>
    %231 = arith.addf %229, %230 : vector<16x128xf32>
    %cst_85 = arith.constant 5.000000e-01 : f32
    %232 = vector.broadcast %cst_85 : f32 to vector<16x128xf32>
    %233 = arith.mulf %232, %231 : vector<16x128xf32>
    %234 = vector.extract_strided_slice %217 {offsets = [0, 256], sizes = [16, 128], strides = [1, 1]} : vector<16x512xf32> to vector<16x128xf32>
    %235 = math.tanh %234 : vector<16x128xf32>
    %236 = vector.extract_strided_slice %217 {offsets = [0, 384], sizes = [16, 128], strides = [1, 1]} : vector<16x512xf32> to vector<16x128xf32>
    %cst_86 = arith.constant 5.000000e-01 : f32
    %237 = vector.broadcast %cst_86 : f32 to vector<16x128xf32>
    %238 = arith.mulf %237, %236 : vector<16x128xf32>
    %239 = math.tanh %238 : vector<16x128xf32>
    %cst_87 = arith.constant 1.000000e+00 : f32
    %240 = vector.broadcast %cst_87 : f32 to vector<16x128xf32>
    %241 = arith.addf %239, %240 : vector<16x128xf32>
    %cst_88 = arith.constant 5.000000e-01 : f32
    %242 = vector.broadcast %cst_88 : f32 to vector<16x128xf32>
    %243 = arith.mulf %242, %241 : vector<16x128xf32>
    %244 = arith.mulf %233, %207 : vector<16x128xf32>
    %245 = arith.mulf %225, %235 : vector<16x128xf32>
    %246 = arith.addf %244, %245 : vector<16x128xf32>
    %247 = math.tanh %246 : vector<16x128xf32>
    %248 = arith.mulf %243, %247 : vector<16x128xf32>
    %c6_i32 = arith.constant 6 : i32
    %249 = vector.broadcast %c6_i32 : i32 to vector<16x1xi32>
    %250 = arith.cmpi eq, %0, %249 : vector<16x1xi32>
    %251 = vector.shape_cast %250 : vector<16x1xi1> to vector<16x1xi1>
    %252 = vector.broadcast %251 : vector<16x1xi1> to vector<16x128xi1>
    %253 = arith.select %252, %248, %214 : vector<16x128xi1>, vector<16x128xf32>
    %c96 = arith.constant 96 : index
    %c0_89 = arith.constant 0 : index
    %254 = vector.load %arg5[%c96, %c0_89] : memref<128x512xf32, #tpu.memory_space<vmem>>, vector<16x512xf32>
    %cst_90 = arith.constant dense<0.000000e+00> : vector<16x512xf32>
    %255 = tpu.matmul %248, %1, %cst_90 {dimension_numbers = #tpu.dot_dimension_numbers<[1], [0], [0], [1], [0, 0, 1, 1], [], []>} : vector<16x128xf32>, vector<128x512xf32>, vector<16x512xf32> -> vector<16x512xf32>
    %256 = arith.addf %254, %255 : vector<16x512xf32>
    %257 = vector.extract_strided_slice %256 {offsets = [0, 0], sizes = [16, 128], strides = [1, 1]} : vector<16x512xf32> to vector<16x128xf32>
    %cst_91 = arith.constant 5.000000e-01 : f32
    %258 = vector.broadcast %cst_91 : f32 to vector<16x128xf32>
    %259 = arith.mulf %258, %257 : vector<16x128xf32>
    %260 = math.tanh %259 : vector<16x128xf32>
    %cst_92 = arith.constant 1.000000e+00 : f32
    %261 = vector.broadcast %cst_92 : f32 to vector<16x128xf32>
    %262 = arith.addf %260, %261 : vector<16x128xf32>
    %cst_93 = arith.constant 5.000000e-01 : f32
    %263 = vector.broadcast %cst_93 : f32 to vector<16x128xf32>
    %264 = arith.mulf %263, %262 : vector<16x128xf32>
    %265 = vector.extract_strided_slice %256 {offsets = [0, 128], sizes = [16, 128], strides = [1, 1]} : vector<16x512xf32> to vector<16x128xf32>
    %cst_94 = arith.constant 5.000000e-01 : f32
    %266 = vector.broadcast %cst_94 : f32 to vector<16x128xf32>
    %267 = arith.mulf %266, %265 : vector<16x128xf32>
    %268 = math.tanh %267 : vector<16x128xf32>
    %cst_95 = arith.constant 1.000000e+00 : f32
    %269 = vector.broadcast %cst_95 : f32 to vector<16x128xf32>
    %270 = arith.addf %268, %269 : vector<16x128xf32>
    %cst_96 = arith.constant 5.000000e-01 : f32
    %271 = vector.broadcast %cst_96 : f32 to vector<16x128xf32>
    %272 = arith.mulf %271, %270 : vector<16x128xf32>
    %273 = vector.extract_strided_slice %256 {offsets = [0, 256], sizes = [16, 128], strides = [1, 1]} : vector<16x512xf32> to vector<16x128xf32>
    %274 = math.tanh %273 : vector<16x128xf32>
    %275 = vector.extract_strided_slice %256 {offsets = [0, 384], sizes = [16, 128], strides = [1, 1]} : vector<16x512xf32> to vector<16x128xf32>
    %cst_97 = arith.constant 5.000000e-01 : f32
    %276 = vector.broadcast %cst_97 : f32 to vector<16x128xf32>
    %277 = arith.mulf %276, %275 : vector<16x128xf32>
    %278 = math.tanh %277 : vector<16x128xf32>
    %cst_98 = arith.constant 1.000000e+00 : f32
    %279 = vector.broadcast %cst_98 : f32 to vector<16x128xf32>
    %280 = arith.addf %278, %279 : vector<16x128xf32>
    %cst_99 = arith.constant 5.000000e-01 : f32
    %281 = vector.broadcast %cst_99 : f32 to vector<16x128xf32>
    %282 = arith.mulf %281, %280 : vector<16x128xf32>
    %283 = arith.mulf %272, %246 : vector<16x128xf32>
    %284 = arith.mulf %264, %274 : vector<16x128xf32>
    %285 = arith.addf %283, %284 : vector<16x128xf32>
    %286 = math.tanh %285 : vector<16x128xf32>
    %287 = arith.mulf %282, %286 : vector<16x128xf32>
    %c7_i32 = arith.constant 7 : i32
    %288 = vector.broadcast %c7_i32 : i32 to vector<16x1xi32>
    %289 = arith.cmpi eq, %0, %288 : vector<16x1xi32>
    %290 = vector.shape_cast %289 : vector<16x1xi1> to vector<16x1xi1>
    %291 = vector.broadcast %290 : vector<16x1xi1> to vector<16x128xi1>
    %292 = arith.select %291, %287, %253 : vector<16x128xi1>, vector<16x128xf32>
    %c112 = arith.constant 112 : index
    %c0_100 = arith.constant 0 : index
    %293 = vector.load %arg5[%c112, %c0_100] : memref<128x512xf32, #tpu.memory_space<vmem>>, vector<16x512xf32>
    %cst_101 = arith.constant dense<0.000000e+00> : vector<16x512xf32>
    %294 = tpu.matmul %287, %1, %cst_101 {dimension_numbers = #tpu.dot_dimension_numbers<[1], [0], [0], [1], [0, 0, 1, 1], [], []>} : vector<16x128xf32>, vector<128x512xf32>, vector<16x512xf32> -> vector<16x512xf32>
    %295 = arith.addf %293, %294 : vector<16x512xf32>
    %296 = vector.extract_strided_slice %295 {offsets = [0, 0], sizes = [16, 128], strides = [1, 1]} : vector<16x512xf32> to vector<16x128xf32>
    %cst_102 = arith.constant 5.000000e-01 : f32
    %297 = vector.broadcast %cst_102 : f32 to vector<16x128xf32>
    %298 = arith.mulf %297, %296 : vector<16x128xf32>
    %299 = math.tanh %298 : vector<16x128xf32>
    %cst_103 = arith.constant 1.000000e+00 : f32
    %300 = vector.broadcast %cst_103 : f32 to vector<16x128xf32>
    %301 = arith.addf %299, %300 : vector<16x128xf32>
    %cst_104 = arith.constant 5.000000e-01 : f32
    %302 = vector.broadcast %cst_104 : f32 to vector<16x128xf32>
    %303 = arith.mulf %302, %301 : vector<16x128xf32>
    %304 = vector.extract_strided_slice %295 {offsets = [0, 128], sizes = [16, 128], strides = [1, 1]} : vector<16x512xf32> to vector<16x128xf32>
    %cst_105 = arith.constant 5.000000e-01 : f32
    %305 = vector.broadcast %cst_105 : f32 to vector<16x128xf32>
    %306 = arith.mulf %305, %304 : vector<16x128xf32>
    %307 = math.tanh %306 : vector<16x128xf32>
    %cst_106 = arith.constant 1.000000e+00 : f32
    %308 = vector.broadcast %cst_106 : f32 to vector<16x128xf32>
    %309 = arith.addf %307, %308 : vector<16x128xf32>
    %cst_107 = arith.constant 5.000000e-01 : f32
    %310 = vector.broadcast %cst_107 : f32 to vector<16x128xf32>
    %311 = arith.mulf %310, %309 : vector<16x128xf32>
    %312 = vector.extract_strided_slice %295 {offsets = [0, 256], sizes = [16, 128], strides = [1, 1]} : vector<16x512xf32> to vector<16x128xf32>
    %313 = math.tanh %312 : vector<16x128xf32>
    %314 = vector.extract_strided_slice %295 {offsets = [0, 384], sizes = [16, 128], strides = [1, 1]} : vector<16x512xf32> to vector<16x128xf32>
    %cst_108 = arith.constant 5.000000e-01 : f32
    %315 = vector.broadcast %cst_108 : f32 to vector<16x128xf32>
    %316 = arith.mulf %315, %314 : vector<16x128xf32>
    %317 = math.tanh %316 : vector<16x128xf32>
    %cst_109 = arith.constant 1.000000e+00 : f32
    %318 = vector.broadcast %cst_109 : f32 to vector<16x128xf32>
    %319 = arith.addf %317, %318 : vector<16x128xf32>
    %cst_110 = arith.constant 5.000000e-01 : f32
    %320 = vector.broadcast %cst_110 : f32 to vector<16x128xf32>
    %321 = arith.mulf %320, %319 : vector<16x128xf32>
    %322 = arith.mulf %311, %285 : vector<16x128xf32>
    %323 = arith.mulf %303, %313 : vector<16x128xf32>
    %324 = arith.addf %322, %323 : vector<16x128xf32>
    %325 = math.tanh %324 : vector<16x128xf32>
    %326 = arith.mulf %321, %325 : vector<16x128xf32>
    %c8_i32 = arith.constant 8 : i32
    %327 = vector.broadcast %c8_i32 : i32 to vector<16x1xi32>
    %328 = arith.cmpi eq, %0, %327 : vector<16x1xi32>
    %329 = vector.shape_cast %328 : vector<16x1xi1> to vector<16x1xi1>
    %330 = vector.broadcast %329 : vector<16x1xi1> to vector<16x128xi1>
    %331 = arith.select %330, %326, %292 : vector<16x128xi1>, vector<16x128xf32>
    %cst_111 = arith.constant dense<0.000000e+00> : vector<16x128xf32>
    %332 = tpu.matmul %331, %2, %cst_111 {dimension_numbers = #tpu.dot_dimension_numbers<[1], [0], [0], [1], [0, 0, 1, 1], [], []>} : vector<16x128xf32>, vector<128x128xf32>, vector<16x128xf32> -> vector<16x128xf32>
    %333 = vector.broadcast %6 : vector<1x128xf32> to vector<16x128xf32>
    %334 = arith.addf %332, %333 : vector<16x128xf32>
    %cst_112 = arith.constant 0.000000e+00 : f32
    %335 = vector.broadcast %cst_112 : f32 to vector<16x128xf32>
    %336 = arith.maximumf %334, %335 : vector<16x128xf32>
    %cst_113 = arith.constant dense<0.000000e+00> : vector<16x128xf32>
    %337 = tpu.matmul %336, %3, %cst_113 {dimension_numbers = #tpu.dot_dimension_numbers<[1], [0], [0], [1], [0, 0, 1, 1], [], []>} : vector<16x128xf32>, vector<128x128xf32>, vector<16x128xf32> -> vector<16x128xf32>
    %338 = vector.broadcast %7 : vector<1x128xf32> to vector<16x128xf32>
    %339 = arith.addf %337, %338 : vector<16x128xf32>
    %cst_114 = arith.constant 0.000000e+00 : f32
    %340 = vector.broadcast %cst_114 : f32 to vector<16x128xf32>
    %341 = arith.maximumf %339, %340 : vector<16x128xf32>
    %342 = vector.broadcast %8 : vector<1x128xf32> to vector<16x128xf32>
    %343 = arith.mulf %341, %342 : vector<16x128xf32>
    %cst_115 = arith.constant dense<0.000000e+00> : vector<16xf32>
    %344 = vector.multi_reduction <add>, %343, %cst_115 [1] : vector<16x128xf32> to vector<16xf32>
    %345 = vector.shape_cast %344 : vector<16xf32> to vector<16x1xf32>
    %346 = vector.broadcast %9 : vector<1x1xf32> to vector<16x1xf32>
    %347 = arith.addf %345, %346 : vector<16x1xf32>
    %348 = vector.extract_strided_slice %347 {offsets = [0, 0], sizes = [8, 1], strides = [1, 1]} : vector<16x1xf32> to vector<8x1xf32>
    %349 = vector.extract_strided_slice %347 {offsets = [8, 0], sizes = [8, 1], strides = [1, 1]} : vector<16x1xf32> to vector<8x1xf32>
    %350 = arith.maximumf %348, %349 : vector<8x1xf32>
    %351 = vector.broadcast %10 : vector<1x1xf32> to vector<8x1xf32>
    %352 = arith.mulf %351, %350 : vector<8x1xf32>
    %353 = vector.broadcast %11 : vector<1x1xf32> to vector<8x1xf32>
    %354 = arith.addf %352, %353 : vector<8x1xf32>
    %cst_116 = arith.constant 5.000000e-01 : f32
    %355 = vector.broadcast %cst_116 : f32 to vector<8x1xf32>
    %356 = arith.mulf %355, %354 : vector<8x1xf32>
    %357 = math.tanh %356 : vector<8x1xf32>
    %cst_117 = arith.constant 1.000000e+00 : f32
    %358 = vector.broadcast %cst_117 : f32 to vector<8x1xf32>
    %359 = arith.subf %358, %357 : vector<8x1xf32>
    %cst_118 = arith.constant 5.000000e-01 : f32
    %360 = vector.broadcast %cst_118 : f32 to vector<8x1xf32>
    %361 = arith.mulf %360, %359 : vector<8x1xf32>
    %c0_119 = arith.constant 0 : index
    %c0_120 = arith.constant 0 : index
    %362 = vector.load %arg4[%c0_119, %c0_120] : memref<8x1xf32, #tpu.memory_space<vmem>>, vector<8x1xf32>
    tpu.vector_store %arg4[%c0_119, %c0_120], %361 {strides = array<i32>} : memref<8x1xf32, #tpu.memory_space<vmem>>, vector<8x1xf32>,
    return
  }
}

</mosaic_0001>

<llo_original>
// kernel: word_confidence_be_forward.1
$region0: #{word_confidence_be_forward.1}
  #allocation0 [shape = 'u32[]', space=smem, size = 0x4, offset = 0x4, fixed_abs, tag = 'smem constant byte address 0x4 - core index']
  #allocation1 [shape = 'u32[144,128]{1,0:T(1,128)}', space=vmem, size = 0x12000, scoped, tag = 'internal scratch']
  #allocation2 [shape = 'f32[128,512]{1,0:T(8,128)}', space=vmem, size = 0x40000, scoped, tag = 'scratch operand']
  %s0 = inlined_call_operand.vmem [shape: f32[128,1], index: 0, kind: input, shape index: {}]
  %s1 = inlined_call_operand.vmem [shape: s32[16,1], index: 1, kind: input, shape index: {}]
  %s2 = inlined_call_operand.hbm [shape: f32[128,768], index: 2, kind: input, shape index: {}]
  %s3 = inlined_call_operand.vmem [shape: f32[1,1536], index: 3, kind: input, shape index: {}]
  %s4 = inlined_call_operand.vmem [shape: f32[8,1], index: 4, kind: output, shape index: {}]
  %s5 = sld [smem:[#allocation0]]
  $region30: #{word_confidence_be_forward.1} parent=0
    _
  %s7 = ssub.s32 1, %s5
  %s8 = scalar_select 0, %s7, %s5
  $region1: #{word_confidence_be_forward.1} parent=0
    #allocation3 [shape = 'u8[393216]{0}', space=vmem, size = 0x60000, scoped, tag = 'input window, operand 2, single buffered']
    #allocation4 [shape = 's32[1]{0}', space=sflag, size = 0x4, scoped, tag = 'scoped memory for word_confidence_be_forward.1']
    %9 = vsyncpa [#allocation4], 0
    // Predicated region
    $region2: #{word_confidence_be_forward.1} parent=1 // pred_check
      _
    $region3: #{word_confidence_be_forward.1} parent=1 // pred_check_branch
      %11 = sbr.rel (0) target = $region5
    $region4: #{word_confidence_be_forward.1} parent=1 // pred_region
      _
    $region5: #{word_confidence_be_forward.1} parent=1 // pred_fallthru
      _
    // Predicated region
    $region6: #{word_confidence_be_forward.1} parent=1 // pred_check
      _
    $region7: #{word_confidence_be_forward.1} parent=1 // pred_check_branch
      %13 = sbr.rel (0) target = $region9
    $region8: #{word_confidence_be_forward.1} parent=1 // pred_region
      _
    $region9: #{word_confidence_be_forward.1} parent=1 // pred_fallthru
      _
    // Predicated region
    $region10: #{word_confidence_be_forward.1} parent=1 // pred_check
      _
    $region11: #{word_confidence_be_forward.1} parent=1 // pred_check_branch
      %15 = sbr.rel (0) target = $region13
    $region12: #{word_confidence_be_forward.1} parent=1 // pred_region
      %s17 = ssub.s32 12288, 12288
      %18 = vsyncadd [#allocation4], %s17
      %s19 = sshll.u32 [#allocation3], 4
      %s20 = int_to_ptr.vmem [resolvable:$true] %s19
      %25 = dma.hbm_to_vmem [thread:$0]  %s2, 12288, %s20, [#allocation4], 768, 768, 48
    $region13: #{word_confidence_be_forward.1} parent=1 // pred_fallthru
      _
    // Predicated region
    $region14: #{word_confidence_be_forward.1} parent=1 // pred_check
      _
    $region15: #{word_confidence_be_forward.1} parent=1 // pred_check_branch
      %27 = sbr.rel (0) target = $region17
    $region16: #{word_confidence_be_forward.1} parent=1 // pred_region
      _
    $region17: #{word_confidence_be_forward.1} parent=1 // pred_fallthru
      _
    // Predicated region
    $region18: #{word_confidence_be_forward.1} parent=1 // pred_check
      _
    $region19: #{word_confidence_be_forward.1} parent=1 // pred_check_branch
      %29 = sbr.rel (0) target = $region21
    $region20: #{word_confidence_be_forward.1} parent=1 // pred_region
      %30 = dma.done [#allocation4], 12288
    $region21: #{word_confidence_be_forward.1} parent=1 // pred_fallthru
      _
    %v31 = vld [vmem:[%s1] sm:$0xff]
    %v32 = vld [vmem:[%s1 + $0x8] sm:$0xff]
    %v33 = vld [vmem:[#allocation3] sm:$0xff]
    %v34 = vld [vmem:[#allocation3 + $0x8] sm:$0xff]
    %v35 = vld [vmem:[#allocation3 + $0x10] sm:$0xff]
    %v36 = vld [vmem:[#allocation3 + $0x18] sm:$0xff]
    %v37 = vld [vmem:[#allocation3 + $0x30] sm:$0xff]
    %v38 = vld [vmem:[#allocation3 + $0x38] sm:$0xff]
    %v39 = vld [vmem:[#allocation3 + $0x40] sm:$0xff]
    %v40 = vld [vmem:[#allocation3 + $0x48] sm:$0xff]
    %v41 = vld [vmem:[#allocation3 + $0x60] sm:$0xff]
    %v42 = vld [vmem:[#allocation3 + $0x68] sm:$0xff]
    %v43 = vld [vmem:[#allocation3 + $0x70] sm:$0xff]
    %v44 = vld [vmem:[#allocation3 + $0x78] sm:$0xff]
    %v45 = vld [vmem:[#allocation3 + $0x90] sm:$0xff]
    %v46 = vld [vmem:[#allocation3 + $0x98] sm:$0xff]
    %v47 = vld [vmem:[#allocation3 + $0xa0] sm:$0xff]
    %v48 = vld [vmem:[#allocation3 + $0xa8] sm:$0xff]
    %v49 = vld [vmem:[#allocation3 + $0xc0] sm:$0xff]
    %v50 = vld [vmem:[#allocation3 + $0xc8] sm:$0xff]
    %v51 = vld [vmem:[#allocation3 + $0xd0] sm:$0xff]
    %v52 = vld [vmem:[#allocation3 + $0xd8] sm:$0xff]
    %v53 = vld [vmem:[#allocation3 + $0xf0] sm:$0xff]
    %v54 = vld [vmem:[#allocation3 + $0xf8] sm:$0xff]
    %v55 = vld [vmem:[#allocation3 + $0x100] sm:$0xff]
    %v56 = vld [vmem:[#allocation3 + $0x108] sm:$0xff]
    %v57 = vld [vmem:[#allocation3 + $0x120] sm:$0xff]
    %v58 = vld [vmem:[#allocation3 + $0x128] sm:$0xff]
    %v59 = vld [vmem:[#allocation3 + $0x130] sm:$0xff]
    %v60 = vld [vmem:[#allocation3 + $0x138] sm:$0xff]
    %v61 = vld [vmem:[#allocation3 + $0x150] sm:$0xff]
    %v62 = vld [vmem:[#allocation3 + $0x158] sm:$0xff]
    %v63 = vld [vmem:[#allocation3 + $0x160] sm:$0xff]
    %v64 = vld [vmem:[#allocation3 + $0x168] sm:$0xff]
    %v65 = vld [vmem:[#allocation3 + $0x180] sm:$0xff]
    %v66 = vld [vmem:[#allocation3 + $0x188] sm:$0xff]
    %v67 = vld [vmem:[#allocation3 + $0x190] sm:$0xff]
    %v68 = vld [vmem:[#allocation3 + $0x198] sm:$0xff]
    %v69 = vld [vmem:[#allocation3 + $0x1b0] sm:$0xff]
    %v70 = vld [vmem:[#allocation3 + $0x1b8] sm:$0xff]
    %v71 = vld [vmem:[#allocation3 + $0x1c0] sm:$0xff]
    %v72 = vld [vmem:[#allocation3 + $0x1c8] sm:$0xff]
    %v73 = vld [vmem:[#allocation3 + $0x1e0] sm:$0xff]
    %v74 = vld [vmem:[#allocation3 + $0x1e8] sm:$0xff]
    %v75 = vld [vmem:[#allocation3 + $0x1f0] sm:$0xff]
    %v76 = vld [vmem:[#allocation3 + $0x1f8] sm:$0xff]
    %v77 = vld [vmem:[#allocation3 + $0x210] sm:$0xff]
    %v78 = vld [vmem:[#allocation3 + $0x218] sm:$0xff]
    %v79 = vld [vmem:[#allocation3 + $0x220] sm:$0xff]
    %v80 = vld [vmem:[#allocation3 + $0x228] sm:$0xff]
    %v81 = vld [vmem:[#allocation3 + $0x240] sm:$0xff]
    %v82 = vld [vmem:[#allocation3 + $0x248] sm:$0xff]
    %v83 = vld [vmem:[#allocation3 + $0x250] sm:$0xff]
    %v84 = vld [vmem:[#allocation3 + $0x258] sm:$0xff]
    %v85 = vld [vmem:[#allocation3 + $0x270] sm:$0xff]
    %v86 = vld [vmem:[#allocation3 + $0x278] sm:$0xff]
    %v87 = vld [vmem:[#allocation3 + $0x280] sm:$0xff]
    %v88 = vld [vmem:[#allocation3 + $0x288] sm:$0xff]
    %v89 = vld [vmem:[#allocation3 + $0x2a0] sm:$0xff]
    %v90 = vld [vmem:[#allocation3 + $0x2a8] sm:$0xff]
    %v91 = vld [vmem:[#allocation3 + $0x2b0] sm:$0xff]
    %v92 = vld [vmem:[#allocation3 + $0x2b8] sm:$0xff]
    %v93 = vld [vmem:[#allocation3 + $0x2d0] sm:$0xff]
    %v94 = vld [vmem:[#allocation3 + $0x2d8] sm:$0xff]
    %v95 = vld [vmem:[#allocation3 + $0x2e0] sm:$0xff]
    %v96 = vld [vmem:[#allocation3 + $0x2e8] sm:$0xff]
    %v97 = vld [vmem:[#allocation3 + $0x20] sm:$0xff]
    %v98 = vld [vmem:[#allocation3 + $0x50] sm:$0xff]
    %v99 = vld [vmem:[#allocation3 + $0x80] sm:$0xff]
    %v100 = vld [vmem:[#allocation3 + $0xb0] sm:$0xff]
    %v101 = vld [vmem:[#allocation3 + $0xe0] sm:$0xff]
    %v102 = vld [vmem:[#allocation3 + $0x110] sm:$0xff]
    %v103 = vld [vmem:[#allocation3 + $0x140] sm:$0xff]
    %v104 = vld [vmem:[#allocation3 + $0x170] sm:$0xff]
    %v105 = vld [vmem:[#allocation3 + $0x1a0] sm:$0xff]
    %v106 = vld [vmem:[#allocation3 + $0x1d0] sm:$0xff]
    %v107 = vld [vmem:[#allocation3 + $0x200] sm:$0xff]
    %v108 = vld [vmem:[#allocation3 + $0x230] sm:$0xff]
    %v109 = vld [vmem:[#allocation3 + $0x260] sm:$0xff]
    %v110 = vld [vmem:[#allocation3 + $0x290] sm:$0xff]
    %v111 = vld [vmem:[#allocation3 + $0x2c0] sm:$0xff]
    %v112 = vld [vmem:[#allocation3 + $0x2f0] sm:$0xff]
    %v113 = vld [vmem:[#allocation3 + $0x28] sm:$0xff]
    %v114 = vld [vmem:[#allocation3 + $0x58] sm:$0xff]
    %v115 = vld [vmem:[#allocation3 + $0x88] sm:$0xff]
    %v116 = vld [vmem:[#allocation3 + $0xb8] sm:$0xff]
    %v117 = vld [vmem:[#allocation3 + $0xe8] sm:$0xff]
    %v118 = vld [vmem:[#allocation3 + $0x118] sm:$0xff]
    %v119 = vld [vmem:[#allocation3 + $0x148] sm:$0xff]
    %v120 = vld [vmem:[#allocation3 + $0x178] sm:$0xff]
    %v121 = vld [vmem:[#allocation3 + $0x1a8] sm:$0xff]
    %v122 = vld [vmem:[#allocation3 + $0x1d8] sm:$0xff]
    %v123 = vld [vmem:[#allocation3 + $0x208] sm:$0xff]
    %v124 = vld [vmem:[#allocation3 + $0x238] sm:$0xff]
    %v125 = vld [vmem:[#allocation3 + $0x268] sm:$0xff]
    %v126 = vld [vmem:[#allocation3 + $0x298] sm:$0xff]
    %v127 = vld [vmem:[#allocation3 + $0x2c8] sm:$0xff]
    %v128 = vld [vmem:[#allocation3 + $0x2f8] sm:$0xff]
    %v129 = vld [vmem:[%s3] sm:$0xf]
    %v130 = vld [vmem:[%s3 + $0x4] sm:$0xf]
    %v131 = vld [vmem:[%s3 + $0x8] sm:$0x1]
    %v132 = vld [vmem:[%s3 + $0x9] sm:$0x1]
    %v133 = vld [vmem:[%s3 + $0xa] sm:$0x1]
    %v134 = vld [vmem:[%s3 + $0xb] sm:$0x1]
    %v135 = vld [vmem:[%s0] sm:$0xff]
    %v136 = vld [vmem:[%s0 + $0x8] sm:$0xff]
    %v137 = vld [vmem:[%s0 + $0x10] sm:$0xff]
    %v138 = vld [vmem:[%s0 + $0x18] sm:$0xff]
    %v139 = vld [vmem:[%s0 + $0x20] sm:$0xff]
    %v140 = vld [vmem:[%s0 + $0x28] sm:$0xff]
    %v141 = vld [vmem:[%s0 + $0x30] sm:$0xff]
    %v142 = vld [vmem:[%s0 + $0x38] sm:$0xff]
    %v143 = vld [vmem:[%s0 + $0x40] sm:$0xff]
    %v144 = vld [vmem:[%s0 + $0x48] sm:$0xff]
    %v145 = vld [vmem:[%s0 + $0x50] sm:$0xff]
    %v146 = vld [vmem:[%s0 + $0x58] sm:$0xff]
    %v147 = vld [vmem:[%s0 + $0x60] sm:$0xff]
    %v148 = vld [vmem:[%s0 + $0x68] sm:$0xff]
    %v149 = vld [vmem:[%s0 + $0x70] sm:$0xff]
    %v150 = vld [vmem:[%s0 + $0x78] sm:$0xff]
    %v152 = vlaneseq
    %v153 = vshrl.u32 %v152, 7
    %v154 = vsub.s32 0, %v153
    %v155 = vrot.slane %v130, %v154
    %v156 = vlaneseq
    %v157 = vshrl.u32 %v156, 7
    %v158 = vsub.s32 1, %v157
    %v159 = vrot.slane %v130, %v158
    %v160 = vlaneseq
    %v161 = vshrl.u32 %v160, 7
    %v162 = vsub.s32 2, %v161
    %v163 = vrot.slane %v130, %v162
    %v164 = vlaneseq
    %v165 = vshrl.u32 %v164, 7
    %v166 = vsub.s32 3, %v165
    %v167 = vrot.slane %v130, %v166
    %v173 = vlaneseq
    %v174 = vshrl.u32 %v173, 7
    %v175 = vsub.s32 0, %v174
    %v176 = vrot.slane %v129, %v175
    %v177 = vlaneseq
    %v178 = vshrl.u32 %v177, 7
    %v179 = vsub.s32 1, %v178
    %v180 = vrot.slane %v129, %v179
    %v181 = vlaneseq
    %v182 = vshrl.u32 %v181, 7
    %v183 = vsub.s32 2, %v182
    %v184 = vrot.slane %v129, %v183
    %v185 = vlaneseq
    %v186 = vshrl.u32 %v185, 7
    %v187 = vsub.s32 3, %v186
    %v188 = vrot.slane %v129, %v187
    %vm189 = vcmask 7168
    %v191 = vsel %vm189, %v135, 0
    %v194 = vsel %vm189, %v136, 0
    %v197 = vsel %vm189, %v137, 0
    %v200 = vsel %vm189, %v138, 0
    %v203 = vsel %vm189, %v139, 0
    %v206 = vsel %vm189, %v140, 0
    %v209 = vsel %vm189, %v141, 0
    %v212 = vsel %vm189, %v142, 0
    %v215 = vsel %vm189, %v143, 0
    %v218 = vsel %vm189, %v144, 0
    %v221 = vsel %vm189, %v145, 0
    %v224 = vsel %vm189, %v146, 0
    %v227 = vsel %vm189, %v147, 0
    %v230 = vsel %vm189, %v148, 0
    %v233 = vsel %vm189, %v149, 0
    %v236 = vsel %vm189, %v150, 0
    %vm238 = vcmask 1040384
    %v239 = vsel %vm238, %v176, 0
    %v241 = vsel %vm238, %v180, 0
    %v243 = vsel %vm238, %v184, 0
    %v245 = vsel %vm238, %v188, 0
    %247 = vmatprep.subr.mxu0 %v241
    %248 = vmatpush1.msra.mxu0 %v239
    %249 = vmatprep.subr.mxu0 0.0
    %250 = vmatpush1.msra.mxu0 0.0
    %251 = vmatprep.subr.mxu0 0.0
    %252 = vmatpush1.msra.mxu0 0.0
    %253 = vmatprep.subr.mxu0 0.0
    %254 = vmatpush1.msra.mxu0 0.0
    %255 = vmatprep.subr.mxu0 0.0
    %256 = vmatpush1.msra.mxu0 0.0
    %257 = vmatprep.subr.mxu0 0.0
    %258 = vmatpush1.msra.mxu0 0.0
    %259 = vmatprep.subr.mxu0 0.0
    %260 = vmatpush1.msra.mxu0 0.0
    %261 = vmatprep.subr.mxu0 0.0
    %262 = vmatpush1.msra.mxu0 0.0
    %263 = vmatprep.subr.mxu0 0.0
    %264 = vmatpush1.msra.mxu0 0.0
    %265 = vmatprep.subr.mxu0 0.0
    %266 = vmatpush1.msra.mxu0 0.0
    %267 = vmatprep.subr.mxu0 0.0
    %268 = vmatpush1.msra.mxu0 0.0
    %269 = vmatprep.subr.mxu0 0.0
    %270 = vmatpush1.msra.mxu0 0.0
    %271 = vmatprep.subr.mxu0 0.0
    %272 = vmatpush1.msra.mxu0 0.0
    %273 = vmatprep.subr.mxu0 0.0
    %274 = vmatpush1.msra.mxu0 0.0
    %275 = vmatprep.subr.mxu0 0.0
    %276 = vmatpush1.msra.mxu0 0.0
    %277 = vmatprep.subr.mxu0 0.0
    %278 = vmatpush1.msra.mxu0 0.0
    %279 = vmatprep.subr.mxu0 0.0
    %280 = vmatpush1.msra.mxu0 0.0
    %281 = vmatprep.subr.mxu0 0.0
    %282 = vmatpush1.msra.mxu0 0.0
    %283 = vmatprep.subr.mxu0 0.0
    %284 = vmatpush1.msra.mxu0 0.0
    %285 = vmatprep.subr.mxu0 0.0
    %286 = vmatpush1.msra.mxu0 0.0
    %287 = vmatprep.subr.mxu0 0.0
    %288 = vmatpush1.msra.mxu0 0.0
    %289 = vmatprep.subr.mxu0 0.0
    %290 = vmatpush1.msra.mxu0 0.0
    %291 = vmatprep.subr.mxu0 0.0
    %292 = vmatpush1.msra.mxu0 0.0
    %293 = vmatprep.subr.mxu0 0.0
    %294 = vmatpush1.msra.mxu0 0.0
    %295 = vmatprep.subr.mxu0 0.0
    %296 = vmatpush1.msra.mxu0 0.0
    %297 = vmatprep.subr.mxu0 0.0
    %298 = vmatpush1.msra.mxu0 0.0
    %299 = vmatprep.subr.mxu0 0.0
    %300 = vmatpush1.msra.mxu0 0.0
    %301 = vmatprep.subr.mxu0 0.0
    %302 = vmatpush1.msra.mxu0 0.0
    %303 = vmatprep.subr.mxu0 0.0
    %304 = vmatpush1.msra.mxu0 0.0
    %305 = vmatprep.subr.mxu0 0.0
    %306 = vmatpush1.msra.mxu0 0.0
    %307 = vmatprep.subr.mxu0 0.0
    %308 = vmatpush1.msra.mxu0 0.0
    %309 = vmatprep.subr.mxu0 0.0
    %310 = vmatpush1.msra.mxu0 0.0
    %311 = vmatprep.mubr.f32.mxu0 0.0
    %312 = vmatmul.mubr.f32.gmra.mrb[0].mxu0 %v191
    %v313 = vpop.f32.mrb[0].mxu0
    %v314 = vadd.f32 %v155, %v313
    %v315 = vpop.f32.mrb[0].mxu0
    %v316 = vadd.f32 %v159, %v315
    %317 = vmatprep.mubr.f32.mxu0 0.0
    %318 = vmatmul.mubr.f32.gmra.mrb[0].mxu0 %v194
    %v319 = vpop.f32.mrb[0].mxu0
    %v320 = vadd.f32 %v155, %v319
    %v321 = vpop.f32.mrb[0].mxu0
    %v322 = vadd.f32 %v159, %v321
    %323 = vmatprep.mubr.f32.mxu0 0.0
    %324 = vmatmul.mubr.f32.gmra.mrb[0].mxu0 %v197
    %v325 = vpop.f32.mrb[0].mxu0
    %v326 = vadd.f32 %v155, %v325
    %v327 = vpop.f32.mrb[0].mxu0
    %v328 = vadd.f32 %v159, %v327
    %329 = vmatprep.mubr.f32.mxu0 0.0
    %330 = vmatmul.mubr.f32.gmra.mrb[0].mxu0 %v200
    %v331 = vpop.f32.mrb[0].mxu0
    %v332 = vadd.f32 %v155, %v331
    %v333 = vpop.f32.mrb[0].mxu0
    %v334 = vadd.f32 %v159, %v333
    %335 = vmatprep.mubr.f32.mxu0 0.0
    %336 = vmatmul.mubr.f32.gmra.mrb[0].mxu0 %v203
    %v337 = vpop.f32.mrb[0].mxu0
    %v338 = vadd.f32 %v155, %v337
    %v339 = vpop.f32.mrb[0].mxu0
    %v340 = vadd.f32 %v159, %v339
    %341 = vmatprep.mubr.f32.mxu0 0.0
    %342 = vmatmul.mubr.f32.gmra.mrb[0].mxu0 %v206
    %v343 = vpop.f32.mrb[0].mxu0
    %v344 = vadd.f32 %v155, %v343
    %v345 = vpop.f32.mrb[0].mxu0
    %v346 = vadd.f32 %v159, %v345
    %347 = vmatprep.mubr.f32.mxu0 0.0
    %348 = vmatmul.mubr.f32.gmra.mrb[0].mxu0 %v209
    %v349 = vpop.f32.mrb[0].mxu0
    %v350 = vadd.f32 %v155, %v349
    %v351 = vpop.f32.mrb[0].mxu0
    %v352 = vadd.f32 %v159, %v351
    %353 = vmatprep.mubr.f32.mxu0 0.0
    %354 = vmatmul.mubr.f32.gmra.mrb[0].mxu0 %v212
    %v355 = vpop.f32.mrb[0].mxu0
    %v356 = vadd.f32 %v155, %v355
    %v357 = vpop.f32.mrb[0].mxu0
    %v358 = vadd.f32 %v159, %v357
    %359 = vmatprep.mubr.f32.mxu0 0.0
    %360 = vmatmul.mubr.f32.gmra.mrb[0].mxu0 %v215
    %v361 = vpop.f32.mrb[0].mxu0
    %v362 = vadd.f32 %v155, %v361
    %v363 = vpop.f32.mrb[0].mxu0
    %v364 = vadd.f32 %v159, %v363
    %365 = vmatprep.mubr.f32.mxu0 0.0
    %366 = vmatmul.mubr.f32.gmra.mrb[0].mxu0 %v218
    %v367 = vpop.f32.mrb[0].mxu0
    %v368 = vadd.f32 %v155, %v367
    %v369 = vpop.f32.mrb[0].mxu0
    %v370 = vadd.f32 %v159, %v369
    %371 = vmatprep.mubr.f32.mxu0 0.0
    %372 = vmatmul.mubr.f32.gmra.mrb[0].mxu0 %v221
    %v373 = vpop.f32.mrb[0].mxu0
    %v374 = vadd.f32 %v155, %v373
    %v375 = vpop.f32.mrb[0].mxu0
    %v376 = vadd.f32 %v159, %v375
    %377 = vmatprep.mubr.f32.mxu0 0.0
    %378 = vmatmul.mubr.f32.gmra.mrb[0].mxu0 %v224
    %v379 = vpop.f32.mrb[0].mxu0
    %v380 = vadd.f32 %v155, %v379
    %v381 = vpop.f32.mrb[0].mxu0
    %v382 = vadd.f32 %v159, %v381
    %383 = vmatprep.mubr.f32.mxu0 0.0
    %384 = vmatmul.mubr.f32.gmra.mrb[0].mxu0 %v227
    %v385 = vpop.f32.mrb[0].mxu0
    %v386 = vadd.f32 %v155, %v385
    %v387 = vpop.f32.mrb[0].mxu0
    %v388 = vadd.f32 %v159, %v387
    %389 = vmatprep.mubr.f32.mxu0 0.0
    %390 = vmatmul.mubr.f32.gmra.mrb[0].mxu0 %v230
    %v391 = vpop.f32.mrb[0].mxu0
    %v392 = vadd.f32 %v155, %v391
    %v393 = vpop.f32.mrb[0].mxu0
    %v394 = vadd.f32 %v159, %v393
    %395 = vmatprep.mubr.f32.mxu0 0.0
    %396 = vmatmul.mubr.f32.gmra.mrb[0].mxu0 %v233
    %v397 = vpop.f32.mrb[0].mxu0
    %v398 = vadd.f32 %v155, %v397
    %v399 = vpop.f32.mrb[0].mxu0
    %v400 = vadd.f32 %v159, %v399
    %401 = vmatprep.mubr.f32.mxu0 0.0
    %402 = vmatmul.mubr.f32.gmra.mrb[0].mxu0 %v236
    %v403 = vpop.f32.mrb[0].mxu0
    %v404 = vadd.f32 %v155, %v403
    %v405 = vpop.f32.mrb[0].mxu0
    %v406 = vadd.f32 %v159, %v405
    %407 = vdwg.mxu0
    %408 = vmatprep.subr.mxu0 %v245
    %409 = vmatpush1.msra.mxu0 %v243
    %410 = vmatprep.subr.mxu0 0.0
    %411 = vmatpush1.msra.mxu0 0.0
    %412 = vmatprep.subr.mxu0 0.0
    %413 = vmatpush1.msra.mxu0 0.0
    %414 = vmatprep.subr.mxu0 0.0
    %415 = vmatpush1.msra.mxu0 0.0
    %416 = vmatprep.subr.mxu0 0.0
    %417 = vmatpush1.msra.mxu0 0.0
    %418 = vmatprep.subr.mxu0 0.0
    %419 = vmatpush1.msra.mxu0 0.0
    %420 = vmatprep.subr.mxu0 0.0
    %421 = vmatpush1.msra.mxu0 0.0
    %422 = vmatprep.subr.mxu0 0.0
    %423 = vmatpush1.msra.mxu0 0.0
    %424 = vmatprep.subr.mxu0 0.0
    %425 = vmatpush1.msra.mxu0 0.0
    %426 = vmatprep.subr.mxu0 0.0
    %427 = vmatpush1.msra.mxu0 0.0
    %428 = vmatprep.subr.mxu0 0.0
    %429 = vmatpush1.msra.mxu0 0.0
    %430 = vmatprep.subr.mxu0 0.0
    %431 = vmatpush1.msra.mxu0 0.0
    %432 = vmatprep.subr.mxu0 0.0
    %433 = vmatpush1.msra.mxu0 0.0
    %434 = vmatprep.subr.mxu0 0.0
    %435 = vmatpush1.msra.mxu0 0.0
    %436 = vmatprep.subr.mxu0 0.0
    %437 = vmatpush1.msra.mxu0 0.0
    %438 = vmatprep.subr.mxu0 0.0
    %439 = vmatpush1.msra.mxu0 0.0
    %440 = vmatprep.subr.mxu0 0.0
    %441 = vmatpush1.msra.mxu0 0.0
    %442 = vmatprep.subr.mxu0 0.0
    %443 = vmatpush1.msra.mxu0 0.0
    %444 = vmatprep.subr.mxu0 0.0
    %445 = vmatpush1.msra.mxu0 0.0
    %446 = vmatprep.subr.mxu0 0.0
    %447 = vmatpush1.msra.mxu0 0.0
    %448 = vmatprep.subr.mxu0 0.0
    %449 = vmatpush1.msra.mxu0 0.0
    %450 = vmatprep.subr.mxu0 0.0
    %451 = vmatpush1.msra.mxu0 0.0
    %452 = vmatprep.subr.mxu0 0.0
    %453 = vmatpush1.msra.mxu0 0.0
    %454 = vmatprep.subr.mxu0 0.0
    %455 = vmatpush1.msra.mxu0 0.0
    %456 = vmatprep.subr.mxu0 0.0
    %457 = vmatpush1.msra.mxu0 0.0
    %458 = vmatprep.subr.mxu0 0.0
    %459 = vmatpush1.msra.mxu0 0.0
    %460 = vmatprep.subr.mxu0 0.0
    %461 = vmatpush1.msra.mxu0 0.0
    %462 = vmatprep.subr.mxu0 0.0
    %463 = vmatpush1.msra.mxu0 0.0
    %464 = vmatprep.subr.mxu0 0.0
    %465 = vmatpush1.msra.mxu0 0.0
    %466 = vmatprep.subr.mxu0 0.0
    %467 = vmatpush1.msra.mxu0 0.0
    %468 = vmatprep.subr.mxu0 0.0
    %469 = vmatpush1.msra.mxu0 0.0
    %470 = vmatprep.subr.mxu0 0.0
    %471 = vmatpush1.msra.mxu0 0.0
    %472 = vmatprep.mubr.f32.mxu0 0.0
    %473 = vmatmul.mubr.f32.gmra.mrb[0].mxu0 %v191
    %v474 = vpop.f32.mrb[0].mxu0
    %v475 = vadd.f32 %v163, %v474
    %v476 = vpop.f32.mrb[0].mxu0
    %v477 = vadd.f32 %v167, %v476
    %478 = vmatprep.mubr.f32.mxu0 0.0
    %479 = vmatmul.mubr.f32.gmra.mrb[0].mxu0 %v194
    %v480 = vpop.f32.mrb[0].mxu0
    %v481 = vadd.f32 %v163, %v480
    %v482 = vpop.f32.mrb[0].mxu0
    %v483 = vadd.f32 %v167, %v482
    %484 = vmatprep.mubr.f32.mxu0 0.0
    %485 = vmatmul.mubr.f32.gmra.mrb[0].mxu0 %v197
    %v486 = vpop.f32.mrb[0].mxu0
    %v487 = vadd.f32 %v163, %v486
    %v488 = vpop.f32.mrb[0].mxu0
    %v489 = vadd.f32 %v167, %v488
    %490 = vmatprep.mubr.f32.mxu0 0.0
    %491 = vmatmul.mubr.f32.gmra.mrb[0].mxu0 %v200
    %v492 = vpop.f32.mrb[0].mxu0
    %v493 = vadd.f32 %v163, %v492
    %v494 = vpop.f32.mrb[0].mxu0
    %v495 = vadd.f32 %v167, %v494
    %496 = vmatprep.mubr.f32.mxu0 0.0
    %497 = vmatmul.mubr.f32.gmra.mrb[0].mxu0 %v203
    %v498 = vpop.f32.mrb[0].mxu0
    %v499 = vadd.f32 %v163, %v498
    %v500 = vpop.f32.mrb[0].mxu0
    %v501 = vadd.f32 %v167, %v500
    %502 = vmatprep.mubr.f32.mxu0 0.0
    %503 = vmatmul.mubr.f32.gmra.mrb[0].mxu0 %v206
    %v504 = vpop.f32.mrb[0].mxu0
    %v505 = vadd.f32 %v163, %v504
    %v506 = vpop.f32.mrb[0].mxu0
    %v507 = vadd.f32 %v167, %v506
    %508 = vmatprep.mubr.f32.mxu0 0.0
    %509 = vmatmul.mubr.f32.gmra.mrb[0].mxu0 %v209
    %v510 = vpop.f32.mrb[0].mxu0
    %v511 = vadd.f32 %v163, %v510
    %v512 = vpop.f32.mrb[0].mxu0
    %v513 = vadd.f32 %v167, %v512
    %514 = vmatprep.mubr.f32.mxu0 0.0
    %515 = vmatmul.mubr.f32.gmra.mrb[0].mxu0 %v212
    %v516 = vpop.f32.mrb[0].mxu0
    %v517 = vadd.f32 %v163, %v516
    %v518 = vpop.f32.mrb[0].mxu0
    %v519 = vadd.f32 %v167, %v518
    %520 = vmatprep.mubr.f32.mxu0 0.0
    %521 = vmatmul.mubr.f32.gmra.mrb[0].mxu0 %v215
    %v522 = vpop.f32.mrb[0].mxu0
    %v523 = vadd.f32 %v163, %v522
    %v524 = vpop.f32.mrb[0].mxu0
    %v525 = vadd.f32 %v167, %v524
    %526 = vmatprep.mubr.f32.mxu0 0.0
    %527 = vmatmul.mubr.f32.gmra.mrb[0].mxu0 %v218
    %v528 = vpop.f32.mrb[0].mxu0
    %v529 = vadd.f32 %v163, %v528
    %v530 = vpop.f32.mrb[0].mxu0
    %v531 = vadd.f32 %v167, %v530
    %532 = vmatprep.mubr.f32.mxu0 0.0
    %533 = vmatmul.mubr.f32.gmra.mrb[0].mxu0 %v221
    %v534 = vpop.f32.mrb[0].mxu0
    %v535 = vadd.f32 %v163, %v534
    %v536 = vpop.f32.mrb[0].mxu0
    %v537 = vadd.f32 %v167, %v536
    %538 = vmatprep.mubr.f32.mxu0 0.0
    %539 = vmatmul.mubr.f32.gmra.mrb[0].mxu0 %v224
    %v540 = vpop.f32.mrb[0].mxu0
    %v541 = vadd.f32 %v163, %v540
    %v542 = vpop.f32.mrb[0].mxu0
    %v543 = vadd.f32 %v167, %v542
    %544 = vmatprep.mubr.f32.mxu0 0.0
    %545 = vmatmul.mubr.f32.gmra.mrb[0].mxu0 %v227
    %v546 = vpop.f32.mrb[0].mxu0
    %v547 = vadd.f32 %v163, %v546
    %v548 = vpop.f32.mrb[0].mxu0
    %v549 = vadd.f32 %v167, %v548
    %550 = vmatprep.mubr.f32.mxu0 0.0
    %551 = vmatmul.mubr.f32.gmra.mrb[0].mxu0 %v230
    %v552 = vpop.f32.mrb[0].mxu0
    %v553 = vadd.f32 %v163, %v552
    %v554 = vpop.f32.mrb[0].mxu0
    %v555 = vadd.f32 %v167, %v554
    %556 = vmatprep.mubr.f32.mxu0 0.0
    %557 = vmatmul.mubr.f32.gmra.mrb[0].mxu0 %v233
    %v558 = vpop.f32.mrb[0].mxu0
    %v559 = vadd.f32 %v163, %v558
    %v560 = vpop.f32.mrb[0].mxu0
    %v561 = vadd.f32 %v167, %v560
    %562 = vmatprep.mubr.f32.mxu0 0.0
    %563 = vmatmul.mubr.f32.gmra.mrb[0].mxu0 %v236
    %v564 = vpop.f32.mrb[0].mxu0
    %v565 = vadd.f32 %v163, %v564
    %v566 = vpop.f32.mrb[0].mxu0
    %v567 = vadd.f32 %v167, %v566
    %568 = vdwg.mxu0
    %569 = vst [vmem:[#allocation2] sm:$0xff] %v314
    %570 = vst [vmem:[#allocation2 + $0x8] sm:$0xff] %v316
    %571 = vst [vmem:[#allocation2 + $0x10] sm:$0xff] %v475
    %572 = vst [vmem:[#allocation2 + $0x18] sm:$0xff] %v477
    %573 = vst [vmem:[#allocation2 + $0x20] sm:$0xff] %v320
    %574 = vst [vmem:[#allocation2 + $0x28] sm:$0xff] %v322
    %575 = vst [vmem:[#allocation2 + $0x30] sm:$0xff] %v481
    %576 = vst [vmem:[#allocation2 + $0x38] sm:$0xff] %v483
    %577 = vst [vmem:[#allocation2 + $0x40] sm:$0xff] %v326
    %578 = vst [vmem:[#allocation2 + $0x48] sm:$0xff] %v328
    %579 = vst [vmem:[#allocation2 + $0x50] sm:$0xff] %v487
    %580 = vst [vmem:[#allocation2 + $0x58] sm:$0xff] %v489
    %581 = vst [vmem:[#allocation2 + $0x60] sm:$0xff] %v332
    %582 = vst [vmem:[#allocation2 + $0x68] sm:$0xff] %v334
    %583 = vst [vmem:[#allocation2 + $0x70] sm:$0xff] %v493
    %584 = vst [vmem:[#allocation2 + $0x78] sm:$0xff] %v495
    %585 = vst [vmem:[#allocation2 + $0x80] sm:$0xff] %v338
    %586 = vst [vmem:[#allocation2 + $0x88] sm:$0xff] %v340
    %587 = vst [vmem:[#allocation2 + $0x90] sm:$0xff] %v499
    %588 = vst [vmem:[#allocation2 + $0x98] sm:$0xff] %v501
    %589 = vst [vmem:[#allocation2 + $0xa0] sm:$0xff] %v344
    %590 = vst [vmem:[#allocation2 + $0xa8] sm:$0xff] %v346
    %591 = vst [vmem:[#allocation2 + $0xb0] sm:$0xff] %v505
    %592 = vst [vmem:[#allocation2 + $0xb8] sm:$0xff] %v507
    %593 = vst [vmem:[#allocation2 + $0xc0] sm:$0xff] %v350
    %594 = vst [vmem:[#allocation2 + $0xc8] sm:$0xff] %v352
    %595 = vst [vmem:[#allocation2 + $0xd0] sm:$0xff] %v511
    %596 = vst [vmem:[#allocation2 + $0xd8] sm:$0xff] %v513
    %597 = vst [vmem:[#allocation2 + $0xe0] sm:$0xff] %v356
    %598 = vst [vmem:[#allocation2 + $0xe8] sm:$0xff] %v358
    %599 = vst [vmem:[#allocation2 + $0xf0] sm:$0xff] %v517
    %600 = vst [vmem:[#allocation2 + $0xf8] sm:$0xff] %v519
    %601 = vst [vmem:[#allocation2 + $0x100] sm:$0xff] %v362
    %602 = vst [vmem:[#allocation2 + $0x108] sm:$0xff] %v364
    %603 = vst [vmem:[#allocation2 + $0x110] sm:$0xff] %v523
    %604 = vst [vmem:[#allocation2 + $0x118] sm:$0xff] %v525
    %605 = vst [vmem:[#allocation2 + $0x120] sm:$0xff] %v368
    %606 = vst [vmem:[#allocation2 + $0x128] sm:$0xff] %v370
    %607 = vst [vmem:[#allocation2 + $0x130] sm:$0xff] %v529
    %608 = vst [vmem:[#allocation2 + $0x138] sm:$0xff] %v531
    %609 = vst [vmem:[#allocation2 + $0x140] sm:$0xff] %v374
    %610 = vst [vmem:[#allocation2 + $0x148] sm:$0xff] %v376
    %611 = vst [vmem:[#allocation2 + $0x150] sm:$0xff] %v535
    %612 = vst [vmem:[#allocation2 + $0x158] sm:$0xff] %v537
    %613 = vst [vmem:[#allocation2 + $0x160] sm:$0xff] %v380
    %614 = vst [vmem:[#allocation2 + $0x168] sm:$0xff] %v382
    %615 = vst [vmem:[#allocation2 + $0x170] sm:$0xff] %v541
    %616 = vst [vmem:[#allocation2 + $0x178] sm:$0xff] %v543
    %617 = vst [vmem:[#allocation2 + $0x180] sm:$0xff] %v386
    %618 = vst [vmem:[#allocation2 + $0x188] sm:$0xff] %v388
    %619 = vst [vmem:[#allocation2 + $0x190] sm:$0xff] %v547
    %620 = vst [vmem:[#allocation2 + $0x198] sm:$0xff] %v549
    %621 = vst [vmem:[#allocation2 + $0x1a0] sm:$0xff] %v392
    %622 = vst [vmem:[#allocation2 + $0x1a8] sm:$0xff] %v394
    %623 = vst [vmem:[#allocation2 + $0x1b0] sm:$0xff] %v553
    %624 = vst [vmem:[#allocation2 + $0x1b8] sm:$0xff] %v555
    %625 = vst [vmem:[#allocation2 + $0x1c0] sm:$0xff] %v398
    %626 = vst [vmem:[#allocation2 + $0x1c8] sm:$0xff] %v400
    %627 = vst [vmem:[#allocation2 + $0x1d0] sm:$0xff] %v559
    %628 = vst [vmem:[#allocation2 + $0x1d8] sm:$0xff] %v561
    %629 = vst [vmem:[#allocation2 + $0x1e0] sm:$0xff] %v404
    %630 = vst [vmem:[#allocation2 + $0x1e8] sm:$0xff] %v406
    %631 = vst [vmem:[#allocation2 + $0x1f0] sm:$0xff] %v565
    %632 = vst [vmem:[#allocation2 + $0x1f8] sm:$0xff] %v567
    %v633 = vld [vmem:[#allocation2] sm:$0xff]
    %v634 = vld [vmem:[#allocation2 + $0x8] sm:$0xff]
    %v635 = vld [vmem:[#allocation2 + $0x10] sm:$0xff]
    %v636 = vld [vmem:[#allocation2 + $0x18] sm:$0xff]
    %v637 = vld [vmem:[#allocation2 + $0x20] sm:$0xff]
    %v638 = vld [vmem:[#allocation2 + $0x28] sm:$0xff]
    %v639 = vld [vmem:[#allocation2 + $0x30] sm:$0xff]
    %v640 = vld [vmem:[#allocation2 + $0x38] sm:$0xff]
    %641 = vmatprep.subr.mxu0 %v34
    %642 = vmatpush1.msra.mxu0 %v33
    %643 = vmatprep.subr.mxu0 %v38
    %644 = vmatpush1.msra.mxu0 %v37
    %645 = vmatprep.subr.mxu0 %v42
    %646 = vmatpush1.msra.mxu0 %v41
    %647 = vmatprep.subr.mxu0 %v46
    %648 = vmatpush1.msra.mxu0 %v45
    %649 = vmatprep.subr.mxu0 %v50
    %650 = vmatpush1.msra.mxu0 %v49
    %651 = vmatprep.subr.mxu0 %v54
    %652 = vmatpush1.msra.mxu0 %v53
    %653 = vmatprep.subr.mxu0 %v58
    %654 = vmatpush1.msra.mxu0 %v57
    %655 = vmatprep.subr.mxu0 %v62
    %656 = vmatpush1.msra.mxu0 %v61
    %657 = vmatprep.subr.mxu0 %v66
    %658 = vmatpush1.msra.mxu0 %v65
    %659 = vmatprep.subr.mxu0 %v70
    %660 = vmatpush1.msra.mxu0 %v69
    %661 = vmatprep.subr.mxu0 %v74
    %662 = vmatpush1.msra.mxu0 %v73
    %663 = vmatprep.subr.mxu0 %v78
    %664 = vmatpush1.msra.mxu0 %v77
    %665 = vmatprep.subr.mxu0 %v82
    %666 = vmatpush1.msra.mxu0 %v81
    %667 = vmatprep.subr.mxu0 %v86
    %668 = vmatpush1.msra.mxu0 %v85
    %669 = vmatprep.subr.mxu0 %v90
    %670 = vmatpush1.msra.mxu0 %v89
    %671 = vmatprep.subr.mxu0 %v94
    %672 = vmatpush1.msra.mxu0 %v93
    %673 = vmatprep.subr.mxu0 0.0
    %674 = vmatpush1.msra.mxu0 0.0
    %675 = vmatprep.subr.mxu0 0.0
    %676 = vmatpush1.msra.mxu0 0.0
    %677 = vmatprep.subr.mxu0 0.0
    %678 = vmatpush1.msra.mxu0 0.0
    %679 = vmatprep.subr.mxu0 0.0
    %680 = vmatpush1.msra.mxu0 0.0
    %681 = vmatprep.subr.mxu0 0.0
    %682 = vmatpush1.msra.mxu0 0.0
    %683 = vmatprep.subr.mxu0 0.0
    %684 = vmatpush1.msra.mxu0 0.0
    %685 = vmatprep.subr.mxu0 0.0
    %686 = vmatpush1.msra.mxu0 0.0
    %687 = vmatprep.subr.mxu0 0.0
    %688 = vmatpush1.msra.mxu0 0.0
    %689 = vmatprep.subr.mxu0 0.0
    %690 = vmatpush1.msra.mxu0 0.0
    %691 = vmatprep.subr.mxu0 0.0
    %692 = vmatpush1.msra.mxu0 0.0
    %693 = vmatprep.subr.mxu0 0.0
    %694 = vmatpush1.msra.mxu0 0.0
    %695 = vmatprep.subr.mxu0 0.0
    %696 = vmatpush1.msra.mxu0 0.0
    %697 = vmatprep.subr.mxu0 0.0
    %698 = vmatpush1.msra.mxu0 0.0
    %699 = vmatprep.subr.mxu0 0.0
    %700 = vmatpush1.msra.mxu0 0.0
    %701 = vmatprep.subr.mxu0 0.0
    %702 = vmatpush1.msra.mxu0 0.0
    %703 = vmatprep.subr.mxu0 0.0
    %704 = vmatpush1.msra.mxu0 0.0
    %705 = vmatprep.mubr.f32.mxu0 0.0
    %706 = vmatmul.mubr.f32.gmra.mrb[0].mxu0 0.0
    %v707 = vpop.f32.mrb[0].mxu0
    %v708 = vadd.f32 0.0, %v707
    %v709 = vpop.f32.mrb[0].mxu0
    %v710 = vadd.f32 0.0, %v709
    %711 = vmatprep.mubr.f32.mxu0 0.0
    %712 = vmatmul.mubr.f32.gmra.mrb[0].mxu0 0.0
    %v713 = vpop.f32.mrb[0].mxu0
    %v714 = vadd.f32 0.0, %v713
    %v715 = vpop.f32.mrb[0].mxu0
    %v716 = vadd.f32 0.0, %v715
    %717 = vdwg.mxu0
    %718 = vmatprep.subr.mxu0 %v36
    %719 = vmatpush1.msra.mxu0 %v35
    %720 = vmatprep.subr.mxu0 %v40
    %721 = vmatpush1.msra.mxu0 %v39
    %722 = vmatprep.subr.mxu0 %v44
    %723 = vmatpush1.msra.mxu0 %v43
    %724 = vmatprep.subr.mxu0 %v48
    %725 = vmatpush1.msra.mxu0 %v47
    %726 = vmatprep.subr.mxu0 %v52
    %727 = vmatpush1.msra.mxu0 %v51
    %728 = vmatprep.subr.mxu0 %v56
    %729 = vmatpush1.msra.mxu0 %v55
    %730 = vmatprep.subr.mxu0 %v60
    %731 = vmatpush1.msra.mxu0 %v59
    %732 = vmatprep.subr.mxu0 %v64
    %733 = vmatpush1.msra.mxu0 %v63
    %734 = vmatprep.subr.mxu0 %v68
    %735 = vmatpush1.msra.mxu0 %v67
    %736 = vmatprep.subr.mxu0 %v72
    %737 = vmatpush1.msra.mxu0 %v71
    %738 = vmatprep.subr.mxu0 %v76
    %739 = vmatpush1.msra.mxu0 %v75
    %740 = vmatprep.subr.mxu0 %v80
    %741 = vmatpush1.msra.mxu0 %v79
    %742 = vmatprep.subr.mxu0 %v84
    %743 = vmatpush1.msra.mxu0 %v83
    %744 = vmatprep.subr.mxu0 %v88
    %745 = vmatpush1.msra.mxu0 %v87
    %746 = vmatprep.subr.mxu0 %v92
    %747 = vmatpush1.msra.mxu0 %v91
    %748 = vmatprep.subr.mxu0 %v96
    %749 = vmatpush1.msra.mxu0 %v95
    %750 = vmatprep.subr.mxu0 0.0
    %751 = vmatpush1.msra.mxu0 0.0
    %752 = vmatprep.subr.mxu0 0.0
    %753 = vmatpush1.msra.mxu0 0.0
    %754 = vmatprep.subr.mxu0 0.0
    %755 = vmatpush1.msra.mxu0 0.0
    %756 = vmatprep.subr.mxu0 0.0
    %757 = vmatpush1.msra.mxu0 0.0
    %758 = vmatprep.subr.mxu0 0.0
    %759 = vmatpush1.msra.mxu0 0.0
    %760 = vmatprep.subr.mxu0 0.0
    %761 = vmatpush1.msra.mxu0 0.0
    %762 = vmatprep.subr.mxu0 0.0
    %763 = vmatpush1.msra.mxu0 0.0
    %764 = vmatprep.subr.mxu0 0.0
    %765 = vmatpush1.msra.mxu0 0.0
    %766 = vmatprep.subr.mxu0 0.0
    %767 = vmatpush1.msra.mxu0 0.0
    %768 = vmatprep.subr.mxu0 0.0
    %769 = vmatpush1.msra.mxu0 0.0
    %770 = vmatprep.subr.mxu0 0.0
    %771 = vmatpush1.msra.mxu0 0.0
    %772 = vmatprep.subr.mxu0 0.0
    %773 = vmatpush1.msra.mxu0 0.0
    %774 = vmatprep.subr.mxu0 0.0
    %775 = vmatpush1.msra.mxu0 0.0
    %776 = vmatprep.subr.mxu0 0.0
    %777 = vmatpush1.msra.mxu0 0.0
    %778 = vmatprep.subr.mxu0 0.0
    %779 = vmatpush1.msra.mxu0 0.0
    %780 = vmatprep.subr.mxu0 0.0
    %781 = vmatpush1.msra.mxu0 0.0
    %782 = vmatprep.mubr.f32.mxu0 0.0
    %783 = vmatmul.mubr.f32.gmra.mrb[0].mxu0 0.0
    %v784 = vpop.f32.mrb[0].mxu0
    %v785 = vadd.f32 0.0, %v784
    %v786 = vpop.f32.mrb[0].mxu0
    %v787 = vadd.f32 0.0, %v786
    %788 = vmatprep.mubr.f32.mxu0 0.0
    %789 = vmatmul.mubr.f32.gmra.mrb[0].mxu0 0.0
    %v790 = vpop.f32.mrb[0].mxu0
    %v791 = vadd.f32 0.0, %v790
    %v792 = vpop.f32.mrb[0].mxu0
    %v793 = vadd.f32 0.0, %v792
    %794 = vdwg.mxu0
    %v795 = vadd.f32 %v633, %v708
    %v796 = vadd.f32 %v634, %v710
    %v797 = vadd.f32 %v635, %v785
    %v798 = vadd.f32 %v636, %v787
    %v799 = vadd.f32 %v637, %v714
    %v800 = vadd.f32 %v638, %v716
    %v801 = vadd.f32 %v639, %v791
    %v802 = vadd.f32 %v640, %v793
    %v803 = vmul.f32 %v795, 0.5
    %v804 = vmul.f32 %v799, 0.5
    %v805 = vtanh.pop %v803
    %v806 = vtanh.pop %v804
    %v807 = vadd.f32 %v805, 1.0
    %v808 = vadd.f32 %v806, 1.0
    %v809 = vmul.f32 %v807, 0.5
    %v810 = vmul.f32 %v808, 0.5
    %v811 = vmul.f32 %v796, 0.5
    %v812 = vmul.f32 %v800, 0.5
    %v813 = vtanh.pop %v811
    %v814 = vtanh.pop %v812
    %v815 = vadd.f32 %v813, 1.0
    %v816 = vadd.f32 %v814, 1.0
    %v817 = vmul.f32 %v815, 0.5
    %v818 = vmul.f32 %v816, 0.5
    %v819 = vtanh.pop %v797
    %v820 = vtanh.pop %v801
    %v821 = vmul.f32 %v798, 0.5
    %v822 = vmul.f32 %v802, 0.5
    %v823 = vtanh.pop %v821
    %v824 = vtanh.pop %v822
    %v825 = vadd.f32 %v823, 1.0
    %v826 = vadd.f32 %v824, 1.0
    %v827 = vmul.f32 %v825, 0.5
    %v828 = vmul.f32 %v826, 0.5
    %v829 = vmul.f32 %v817, 0.0
    %v830 = vmul.f32 %v818, 0.0
    %v831 = vmul.f32 %v809, %v819
    %v832 = vmul.f32 %v810, %v820
    %v833 = vadd.f32 %v829, %v831
    %v834 = vadd.f32 %v830, %v832
    %v835 = vtanh.pop %v833
    %v836 = vtanh.pop %v834
    %v837 = vmul.f32 %v827, %v835
    %v838 = vmul.f32 %v828, %v836
    %vm839 = vcmp.eq.s32.totalorder %v31, 1
    %vm840 = vcmp.eq.s32.totalorder %v32, 1
    %v841 = vsel %vm839, 1, 0
    %v842 = vsel %vm840, 1, 0
    %843 = vset.pattern.permute.xlu0 0
    %844 = vperm.xlu0 %843, %v841
    %v845 = vpop.permute.xlu0 %844
    %846 = vset.pattern.permute.xlu0 0
    %847 = vperm.xlu0 %846, %v842
    %v848 = vpop.permute.xlu0 %847
    %vm849 = vcmp.eq.s32.totalorder %v845, 1
    %vm850 = vcmp.eq.s32.totalorder %v848, 1
    %v851 = vsel %vm849, %v837, 0.0
    %v852 = vsel %vm850, %v838, 0.0
    %v853 = vld [vmem:[#allocation2 + $0x40] sm:$0xff]
    %v854 = vld [vmem:[#allocation2 + $0x48] sm:$0xff]
    %v855 = vld [vmem:[#allocation2 + $0x50] sm:$0xff]
    %v856 = vld [vmem:[#allocation2 + $0x58] sm:$0xff]
    %v857 = vld [vmem:[#allocation2 + $0x60] sm:$0xff]
    %v858 = vld [vmem:[#allocation2 + $0x68] sm:$0xff]
    %v859 = vld [vmem:[#allocation2 + $0x70] sm:$0xff]
    %v860 = vld [vmem:[#allocation2 + $0x78] sm:$0xff]
    %861 = vmatprep.subr.mxu0 %v34
    %862 = vmatpush1.msra.mxu0 %v33
    %863 = vmatprep.subr.mxu0 %v38
    %864 = vmatpush1.msra.mxu0 %v37
    %865 = vmatprep.subr.mxu0 %v42
    %866 = vmatpush1.msra.mxu0 %v41
    %867 = vmatprep.subr.mxu0 %v46
    %868 = vmatpush1.msra.mxu0 %v45
    %869 = vmatprep.subr.mxu0 %v50
    %870 = vmatpush1.msra.mxu0 %v49
    %871 = vmatprep.subr.mxu0 %v54
    %872 = vmatpush1.msra.mxu0 %v53
    %873 = vmatprep.subr.mxu0 %v58
    %874 = vmatpush1.msra.mxu0 %v57
    %875 = vmatprep.subr.mxu0 %v62
    %876 = vmatpush1.msra.mxu0 %v61
    %877 = vmatprep.subr.mxu0 %v66
    %878 = vmatpush1.msra.mxu0 %v65
    %879 = vmatprep.subr.mxu0 %v70
    %880 = vmatpush1.msra.mxu0 %v69
    %881 = vmatprep.subr.mxu0 %v74
    %882 = vmatpush1.msra.mxu0 %v73
    %883 = vmatprep.subr.mxu0 %v78
    %884 = vmatpush1.msra.mxu0 %v77
    %885 = vmatprep.subr.mxu0 %v82
    %886 = vmatpush1.msra.mxu0 %v81
    %887 = vmatprep.subr.mxu0 %v86
    %888 = vmatpush1.msra.mxu0 %v85
    %889 = vmatprep.subr.mxu0 %v90
    %890 = vmatpush1.msra.mxu0 %v89
    %891 = vmatprep.subr.mxu0 %v94
    %892 = vmatpush1.msra.mxu0 %v93
    %893 = vmatprep.subr.mxu0 0.0
    %894 = vmatpush1.msra.mxu0 0.0
    %895 = vmatprep.subr.mxu0 0.0
    %896 = vmatpush1.msra.mxu0 0.0
    %897 = vmatprep.subr.mxu0 0.0
    %898 = vmatpush1.msra.mxu0 0.0
    %899 = vmatprep.subr.mxu0 0.0
    %900 = vmatpush1.msra.mxu0 0.0
    %901 = vmatprep.subr.mxu0 0.0
    %902 = vmatpush1.msra.mxu0 0.0
    %903 = vmatprep.subr.mxu0 0.0
    %904 = vmatpush1.msra.mxu0 0.0
    %905 = vmatprep.subr.mxu0 0.0
    %906 = vmatpush1.msra.mxu0 0.0
    %907 = vmatprep.subr.mxu0 0.0
    %908 = vmatpush1.msra.mxu0 0.0
    %909 = vmatprep.subr.mxu0 0.0
    %910 = vmatpush1.msra.mxu0 0.0
    %911 = vmatprep.subr.mxu0 0.0
    %912 = vmatpush1.msra.mxu0 0.0
    %913 = vmatprep.subr.mxu0 0.0
    %914 = vmatpush1.msra.mxu0 0.0
    %915 = vmatprep.subr.mxu0 0.0
    %916 = vmatpush1.msra.mxu0 0.0
    %917 = vmatprep.subr.mxu0 0.0
    %918 = vmatpush1.msra.mxu0 0.0
    %919 = vmatprep.subr.mxu0 0.0
    %920 = vmatpush1.msra.mxu0 0.0
    %921 = vmatprep.subr.mxu0 0.0
    %922 = vmatpush1.msra.mxu0 0.0
    %923 = vmatprep.subr.mxu0 0.0
    %924 = vmatpush1.msra.mxu0 0.0
    %925 = vmatprep.mubr.f32.mxu0 0.0
    %926 = vmatmul.mubr.f32.gmra.mrb[0].mxu0 %v837
    %v927 = vpop.f32.mrb[0].mxu0
    %v928 = vadd.f32 0.0, %v927
    %v929 = vpop.f32.mrb[0].mxu0
    %v930 = vadd.f32 0.0, %v929
    %931 = vmatprep.mubr.f32.mxu0 0.0
    %932 = vmatmul.mubr.f32.gmra.mrb[0].mxu0 %v838
    %v933 = vpop.f32.mrb[0].mxu0
    %v934 = vadd.f32 0.0, %v933
    %v935 = vpop.f32.mrb[0].mxu0
    %v936 = vadd.f32 0.0, %v935
    %937 = vdwg.mxu0
    %938 = vmatprep.subr.mxu0 %v36
    %939 = vmatpush1.msra.mxu0 %v35
    %940 = vmatprep.subr.mxu0 %v40
    %941 = vmatpush1.msra.mxu0 %v39
    %942 = vmatprep.subr.mxu0 %v44
    %943 = vmatpush1.msra.mxu0 %v43
    %944 = vmatprep.subr.mxu0 %v48
    %945 = vmatpush1.msra.mxu0 %v47
    %946 = vmatprep.subr.mxu0 %v52
    %947 = vmatpush1.msra.mxu0 %v51
    %948 = vmatprep.subr.mxu0 %v56
    %949 = vmatpush1.msra.mxu0 %v55
    %950 = vmatprep.subr.mxu0 %v60
    %951 = vmatpush1.msra.mxu0 %v59
    %952 = vmatprep.subr.mxu0 %v64
    %953 = vmatpush1.msra.mxu0 %v63
    %954 = vmatprep.subr.mxu0 %v68
    %955 = vmatpush1.msra.mxu0 %v67
    %956 = vmatprep.subr.mxu0 %v72
    %957 = vmatpush1.msra.mxu0 %v71
    %958 = vmatprep.subr.mxu0 %v76
    %959 = vmatpush1.msra.mxu0 %v75
    %960 = vmatprep.subr.mxu0 %v80
    %961 = vmatpush1.msra.mxu0 %v79
    %962 = vmatprep.subr.mxu0 %v84
    %963 = vmatpush1.msra.mxu0 %v83
    %964 = vmatprep.subr.mxu0 %v88
    %965 = vmatpush1.msra.mxu0 %v87
    %966 = vmatprep.subr.mxu0 %v92
    %967 = vmatpush1.msra.mxu0 %v91
    %968 = vmatprep.subr.mxu0 %v96
    %969 = vmatpush1.msra.mxu0 %v95
    %970 = vmatprep.subr.mxu0 0.0
    %971 = vmatpush1.msra.mxu0 0.0
    %972 = vmatprep.subr.mxu0 0.0
    %973 = vmatpush1.msra.mxu0 0.0
    %974 = vmatprep.subr.mxu0 0.0
    %975 = vmatpush1.msra.mxu0 0.0
    %976 = vmatprep.subr.mxu0 0.0
    %977 = vmatpush1.msra.mxu0 0.0
    %978 = vmatprep.subr.mxu0 0.0
    %979 = vmatpush1.msra.mxu0 0.0
    %980 = vmatprep.subr.mxu0 0.0
    %981 = vmatpush1.msra.mxu0 0.0
    %982 = vmatprep.subr.mxu0 0.0
    %983 = vmatpush1.msra.mxu0 0.0
    %984 = vmatprep.subr.mxu0 0.0
    %985 = vmatpush1.msra.mxu0 0.0
    %986 = vmatprep.subr.mxu0 0.0
    %987 = vmatpush1.msra.mxu0 0.0
    %988 = vmatprep.subr.mxu0 0.0
    %989 = vmatpush1.msra.mxu0 0.0
    %990 = vmatprep.subr.mxu0 0.0
    %991 = vmatpush1.msra.mxu0 0.0
    %992 = vmatprep.subr.mxu0 0.0
    %993 = vmatpush1.msra.mxu0 0.0
    %994 = vmatprep.subr.mxu0 0.0
    %995 = vmatpush1.msra.mxu0 0.0
    %996 = vmatprep.subr.mxu0 0.0
    %997 = vmatpush1.msra.mxu0 0.0
    %998 = vmatprep.subr.mxu0 0.0
    %999 = vmatpush1.msra.mxu0 0.0
    %1000 = vmatprep.subr.mxu0 0.0
    %1001 = vmatpush1.msra.mxu0 0.0
    %1002 = vmatprep.mubr.f32.mxu0 0.0
    %1003 = vmatmul.mubr.f32.gmra.mrb[0].mxu0 %v837
    %v1004 = vpop.f32.mrb[0].mxu0
    %v1005 = vadd.f32 0.0, %v1004
    %v1006 = vpop.f32.mrb[0].mxu0
    %v1007 = vadd.f32 0.0, %v1006
    %1008 = vmatprep.mubr.f32.mxu0 0.0
    %1009 = vmatmul.mubr.f32.gmra.mrb[0].mxu0 %v838
    %v1010 = vpop.f32.mrb[0].mxu0
    %v1011 = vadd.f32 0.0, %v1010
    %v1012 = vpop.f32.mrb[0].mxu0
    %v1013 = vadd.f32 0.0, %v1012
    %1014 = vdwg.mxu0
    %v1015 = vadd.f32 %v853, %v928
    %v1016 = vadd.f32 %v854, %v930
    %v1017 = vadd.f32 %v855, %v1005
    %v1018 = vadd.f32 %v856, %v1007
    %v1019 = vadd.f32 %v857, %v934
    %v1020 = vadd.f32 %v858, %v936
    %v1021 = vadd.f32 %v859, %v1011
    %v1022 = vadd.f32 %v860, %v1013
    %v1023 = vmul.f32 %v1015, 0.5
    %v1024 = vmul.f32 %v1019, 0.5
    %v1025 = vtanh.pop %v1023
    %v1026 = vtanh.pop %v1024
    %v1027 = vadd.f32 %v1025, 1.0
    %v1028 = vadd.f32 %v1026, 1.0
    %v1029 = vmul.f32 %v1027, 0.5
    %v1030 = vmul.f32 %v1028, 0.5
    %v1031 = vmul.f32 %v1016, 0.5
    %v1032 = vmul.f32 %v1020, 0.5
    %v1033 = vtanh.pop %v1031
    %v1034 = vtanh.pop %v1032
    %v1035 = vadd.f32 %v1033, 1.0
    %v1036 = vadd.f32 %v1034, 1.0
    %v1037 = vmul.f32 %v1035, 0.5
    %v1038 = vmul.f32 %v1036, 0.5
    %v1039 = vtanh.pop %v1017
    %v1040 = vtanh.pop %v1021
    %v1041 = vmul.f32 %v1018, 0.5
    %v1042 = vmul.f32 %v1022, 0.5
    %v1043 = vtanh.pop %v1041
    %v1044 = vtanh.pop %v1042
    %v1045 = vadd.f32 %v1043, 1.0
    %v1046 = vadd.f32 %v1044, 1.0
    %v1047 = vmul.f32 %v1045, 0.5
    %v1048 = vmul.f32 %v1046, 0.5
    %v1049 = vmul.f32 %v1037, %v833
    %v1050 = vmul.f32 %v1038, %v834
    %v1051 = vmul.f32 %v1029, %v1039
    %v1052 = vmul.f32 %v1030, %v1040
    %v1053 = vadd.f32 %v1049, %v1051
    %v1054 = vadd.f32 %v1050, %v1052
    %v1055 = vtanh.pop %v1053
    %v1056 = vtanh.pop %v1054
    %v1057 = vmul.f32 %v1047, %v1055
    %v1058 = vmul.f32 %v1048, %v1056
    %vm1059 = vcmp.eq.s32.totalorder %v31, 2
    %vm1060 = vcmp.eq.s32.totalorder %v32, 2
    %v1061 = vsel %vm1059, 1, 0
    %v1062 = vsel %vm1060, 1, 0
    %1063 = vset.pattern.permute.xlu0 0
    %1064 = vperm.xlu0 %1063, %v1061
    %v1065 = vpop.permute.xlu0 %1064
    %1066 = vset.pattern.permute.xlu0 0
    %1067 = vperm.xlu0 %1066, %v1062
    %v1068 = vpop.permute.xlu0 %1067
    %vm1069 = vcmp.eq.s32.totalorder %v1065, 1
    %vm1070 = vcmp.eq.s32.totalorder %v1068, 1
    %v1071 = vsel %vm1069, %v1057, %v851
    %v1072 = vsel %vm1070, %v1058, %v852
    %v1073 = vld [vmem:[#allocation2 + $0x80] sm:$0xff]
    %v1074 = vld [vmem:[#allocation2 + $0x88] sm:$0xff]
    %v1075 = vld [vmem:[#allocation2 + $0x90] sm:$0xff]
    %v1076 = vld [vmem:[#allocation2 + $0x98] sm:$0xff]
    %v1077 = vld [vmem:[#allocation2 + $0xa0] sm:$0xff]
    %v1078 = vld [vmem:[#allocation2 + $0xa8] sm:$0xff]
    %v1079 = vld [vmem:[#allocation2 + $0xb0] sm:$0xff]
    %v1080 = vld [vmem:[#allocation2 + $0xb8] sm:$0xff]
    %1081 = vmatprep.subr.mxu0 %v34
    %1082 = vmatpush1.msra.mxu0 %v33
    %1083 = vmatprep.subr.mxu0 %v38
    %1084 = vmatpush1.msra.mxu0 %v37
    %1085 = vmatprep.subr.mxu0 %v42
    %1086 = vmatpush1.msra.mxu0 %v41
    %1087 = vmatprep.subr.mxu0 %v46
    %1088 = vmatpush1.msra.mxu0 %v45
    %1089 = vmatprep.subr.mxu0 %v50
    %1090 = vmatpush1.msra.mxu0 %v49
    %1091 = vmatprep.subr.mxu0 %v54
    %1092 = vmatpush1.msra.mxu0 %v53
    %1093 = vmatprep.subr.mxu0 %v58
    %1094 = vmatpush1.msra.mxu0 %v57
    %1095 = vmatprep.subr.mxu0 %v62
    %1096 = vmatpush1.msra.mxu0 %v61
    %1097 = vmatprep.subr.mxu0 %v66
    %1098 = vmatpush1.msra.mxu0 %v65
    %1099 = vmatprep.subr.mxu0 %v70
    %1100 = vmatpush1.msra.mxu0 %v69
    %1101 = vmatprep.subr.mxu0 %v74
    %1102 = vmatpush1.msra.mxu0 %v73
    %1103 = vmatprep.subr.mxu0 %v78
    %1104 = vmatpush1.msra.mxu0 %v77
    %1105 = vmatprep.subr.mxu0 %v82
    %1106 = vmatpush1.msra.mxu0 %v81
    %1107 = vmatprep.subr.mxu0 %v86
    %1108 = vmatpush1.msra.mxu0 %v85
    %1109 = vmatprep.subr.mxu0 %v90
    %1110 = vmatpush1.msra.mxu0 %v89
    %1111 = vmatprep.subr.mxu0 %v94
    %1112 = vmatpush1.msra.mxu0 %v93
    %1113 = vmatprep.subr.mxu0 0.0
    %1114 = vmatpush1.msra.mxu0 0.0
    %1115 = vmatprep.subr.mxu0 0.0
    %1116 = vmatpush1.msra.mxu0 0.0
    %1117 = vmatprep.subr.mxu0 0.0
    %1118 = vmatpush1.msra.mxu0 0.0
    %1119 = vmatprep.subr.mxu0 0.0
    %1120 = vmatpush1.msra.mxu0 0.0
    %1121 = vmatprep.subr.mxu0 0.0
    %1122 = vmatpush1.msra.mxu0 0.0
    %1123 = vmatprep.subr.mxu0 0.0
    %1124 = vmatpush1.msra.mxu0 0.0
    %1125 = vmatprep.subr.mxu0 0.0
    %1126 = vmatpush1.msra.mxu0 0.0
    %1127 = vmatprep.subr.mxu0 0.0
    %1128 = vmatpush1.msra.mxu0 0.0
    %1129 = vmatprep.subr.mxu0 0.0
    %1130 = vmatpush1.msra.mxu0 0.0
    %1131 = vmatprep.subr.mxu0 0.0
    %1132 = vmatpush1.msra.mxu0 0.0
    %1133 = vmatprep.subr.mxu0 0.0
    %1134 = vmatpush1.msra.mxu0 0.0
    %1135 = vmatprep.subr.mxu0 0.0
    %1136 = vmatpush1.msra.mxu0 0.0
    %1137 = vmatprep.subr.mxu0 0.0
    %1138 = vmatpush1.msra.mxu0 0.0
    %1139 = vmatprep.subr.mxu0 0.0
    %1140 = vmatpush1.msra.mxu0 0.0
    %1141 = vmatprep.subr.mxu0 0.0
    %1142 = vmatpush1.msra.mxu0 0.0
    %1143 = vmatprep.subr.mxu0 0.0
    %1144 = vmatpush1.msra.mxu0 0.0
    %1145 = vmatprep.mubr.f32.mxu0 0.0
    %1146 = vmatmul.mubr.f32.gmra.mrb[0].mxu0 %v1057
    %v1147 = vpop.f32.mrb[0].mxu0
    %v1148 = vadd.f32 0.0, %v1147
    %v1149 = vpop.f32.mrb[0].mxu0
    %v1150 = vadd.f32 0.0, %v1149
    %1151 = vmatprep.mubr.f32.mxu0 0.0
    %1152 = vmatmul.mubr.f32.gmra.mrb[0].mxu0 %v1058
    %v1153 = vpop.f32.mrb[0].mxu0
    %v1154 = vadd.f32 0.0, %v1153
    %v1155 = vpop.f32.mrb[0].mxu0
    %v1156 = vadd.f32 0.0, %v1155
    %1157 = vdwg.mxu0
    %1158 = vmatprep.subr.mxu0 %v36
    %1159 = vmatpush1.msra.mxu0 %v35
    %1160 = vmatprep.subr.mxu0 %v40
    %1161 = vmatpush1.msra.mxu0 %v39
    %1162 = vmatprep.subr.mxu0 %v44
    %1163 = vmatpush1.msra.mxu0 %v43
    %1164 = vmatprep.subr.mxu0 %v48
    %1165 = vmatpush1.msra.mxu0 %v47
    %1166 = vmatprep.subr.mxu0 %v52
    %1167 = vmatpush1.msra.mxu0 %v51
    %1168 = vmatprep.subr.mxu0 %v56
    %1169 = vmatpush1.msra.mxu0 %v55
    %1170 = vmatprep.subr.mxu0 %v60
    %1171 = vmatpush1.msra.mxu0 %v59
    %1172 = vmatprep.subr.mxu0 %v64
    %1173 = vmatpush1.msra.mxu0 %v63
    %1174 = vmatprep.subr.mxu0 %v68
    %1175 = vmatpush1.msra.mxu0 %v67
    %1176 = vmatprep.subr.mxu0 %v72
    %1177 = vmatpush1.msra.mxu0 %v71
    %1178 = vmatprep.subr.mxu0 %v76
    %1179 = vmatpush1.msra.mxu0 %v75
    %1180 = vmatprep.subr.mxu0 %v80
    %1181 = vmatpush1.msra.mxu0 %v79
    %1182 = vmatprep.subr.mxu0 %v84
    %1183 = vmatpush1.msra.mxu0 %v83
    %1184 = vmatprep.subr.mxu0 %v88
    %1185 = vmatpush1.msra.mxu0 %v87
    %1186 = vmatprep.subr.mxu0 %v92
    %1187 = vmatpush1.msra.mxu0 %v91
    %1188 = vmatprep.subr.mxu0 %v96
    %1189 = vmatpush1.msra.mxu0 %v95
    %1190 = vmatprep.subr.mxu0 0.0
    %1191 = vmatpush1.msra.mxu0 0.0
    %1192 = vmatprep.subr.mxu0 0.0
    %1193 = vmatpush1.msra.mxu0 0.0
    %1194 = vmatprep.subr.mxu0 0.0
    %1195 = vmatpush1.msra.mxu0 0.0
    %1196 = vmatprep.subr.mxu0 0.0
    %1197 = vmatpush1.msra.mxu0 0.0
    %1198 = vmatprep.subr.mxu0 0.0
    %1199 = vmatpush1.msra.mxu0 0.0
    %1200 = vmatprep.subr.mxu0 0.0
    %1201 = vmatpush1.msra.mxu0 0.0
    %1202 = vmatprep.subr.mxu0 0.0
    %1203 = vmatpush1.msra.mxu0 0.0
    %1204 = vmatprep.subr.mxu0 0.0
    %1205 = vmatpush1.msra.mxu0 0.0
    %1206 = vmatprep.subr.mxu0 0.0
    %1207 = vmatpush1.msra.mxu0 0.0
    %1208 = vmatprep.subr.mxu0 0.0
    %1209 = vmatpush1.msra.mxu0 0.0
    %1210 = vmatprep.subr.mxu0 0.0
    %1211 = vmatpush1.msra.mxu0 0.0
    %1212 = vmatprep.subr.mxu0 0.0
    %1213 = vmatpush1.msra.mxu0 0.0
    %1214 = vmatprep.subr.mxu0 0.0
    %1215 = vmatpush1.msra.mxu0 0.0
    %1216 = vmatprep.subr.mxu0 0.0
    %1217 = vmatpush1.msra.mxu0 0.0
    %1218 = vmatprep.subr.mxu0 0.0
    %1219 = vmatpush1.msra.mxu0 0.0
    %1220 = vmatprep.subr.mxu0 0.0
    %1221 = vmatpush1.msra.mxu0 0.0
    %1222 = vmatprep.mubr.f32.mxu0 0.0
    %1223 = vmatmul.mubr.f32.gmra.mrb[0].mxu0 %v1057
    %v1224 = vpop.f32.mrb[0].mxu0
    %v1225 = vadd.f32 0.0, %v1224
    %v1226 = vpop.f32.mrb[0].mxu0
    %v1227 = vadd.f32 0.0, %v1226
    %1228 = vmatprep.mubr.f32.mxu0 0.0
    %1229 = vmatmul.mubr.f32.gmra.mrb[0].mxu0 %v1058
    %v1230 = vpop.f32.mrb[0].mxu0
    %v1231 = vadd.f32 0.0, %v1230
    %v1232 = vpop.f32.mrb[0].mxu0
    %v1233 = vadd.f32 0.0, %v1232
    %1234 = vdwg.mxu0
    %v1235 = vadd.f32 %v1073, %v1148
    %v1236 = vadd.f32 %v1074, %v1150
    %v1237 = vadd.f32 %v1075, %v1225
    %v1238 = vadd.f32 %v1076, %v1227
    %v1239 = vadd.f32 %v1077, %v1154
    %v1240 = vadd.f32 %v1078, %v1156
    %v1241 = vadd.f32 %v1079, %v1231
    %v1242 = vadd.f32 %v1080, %v1233
    %v1243 = vmul.f32 %v1235, 0.5
    %v1244 = vmul.f32 %v1239, 0.5
    %v1245 = vtanh.pop %v1243
    %v1246 = vtanh.pop %v1244
    %v1247 = vadd.f32 %v1245, 1.0
    %v1248 = vadd.f32 %v1246, 1.0
    %v1249 = vmul.f32 %v1247, 0.5
    %v1250 = vmul.f32 %v1248, 0.5
    %v1251 = vmul.f32 %v1236, 0.5
    %v1252 = vmul.f32 %v1240, 0.5
    %v1253 = vtanh.pop %v1251
    %v1254 = vtanh.pop %v1252
    %v1255 = vadd.f32 %v1253, 1.0
    %v1256 = vadd.f32 %v1254, 1.0
    %v1257 = vmul.f32 %v1255, 0.5
    %v1258 = vmul.f32 %v1256, 0.5
    %v1259 = vtanh.pop %v1237
    %v1260 = vtanh.pop %v1241
    %v1261 = vmul.f32 %v1238, 0.5
    %v1262 = vmul.f32 %v1242, 0.5
    %v1263 = vtanh.pop %v1261
    %v1264 = vtanh.pop %v1262
    %v1265 = vadd.f32 %v1263, 1.0
    %v1266 = vadd.f32 %v1264, 1.0
    %v1267 = vmul.f32 %v1265, 0.5
    %v1268 = vmul.f32 %v1266, 0.5
    %v1269 = vmul.f32 %v1257, %v1053
    %v1270 = vmul.f32 %v1258, %v1054
    %v1271 = vmul.f32 %v1249, %v1259
    %v1272 = vmul.f32 %v1250, %v1260
    %v1273 = vadd.f32 %v1269, %v1271
    %v1274 = vadd.f32 %v1270, %v1272
    %v1275 = vtanh.pop %v1273
    %v1276 = vtanh.pop %v1274
    %v1277 = vmul.f32 %v1267, %v1275
    %v1278 = vmul.f32 %v1268, %v1276
    %vm1279 = vcmp.eq.s32.totalorder %v31, 3
    %vm1280 = vcmp.eq.s32.totalorder %v32, 3
    %v1281 = vsel %vm1279, 1, 0
    %v1282 = vsel %vm1280, 1, 0
    %1283 = vset.pattern.permute.xlu0 0
    %1284 = vperm.xlu0 %1283, %v1281
    %v1285 = vpop.permute.xlu0 %1284
    %1286 = vset.pattern.permute.xlu0 0
    %1287 = vperm.xlu0 %1286, %v1282
    %v1288 = vpop.permute.xlu0 %1287
    %vm1289 = vcmp.eq.s32.totalorder %v1285, 1
    %vm1290 = vcmp.eq.s32.totalorder %v1288, 1
    %v1291 = vsel %vm1289, %v1277, %v1071
    %v1292 = vsel %vm1290, %v1278, %v1072
    %v1293 = vld [vmem:[#allocation2 + $0xc0] sm:$0xff]
    %v1294 = vld [vmem:[#allocation2 + $0xc8] sm:$0xff]
    %v1295 = vld [vmem:[#allocation2 + $0xd0] sm:$0xff]
    %v1296 = vld [vmem:[#allocation2 + $0xd8] sm:$0xff]
    %v1297 = vld [vmem:[#allocation2 + $0xe0] sm:$0xff]
    %v1298 = vld [vmem:[#allocation2 + $0xe8] sm:$0xff]
    %v1299 = vld [vmem:[#allocation2 + $0xf0] sm:$0xff]
    %v1300 = vld [vmem:[#allocation2 + $0xf8] sm:$0xff]
    %1301 = vmatprep.subr.mxu0 %v34
    %1302 = vmatpush1.msra.mxu0 %v33
    %1303 = vmatprep.subr.mxu0 %v38
    %1304 = vmatpush1.msra.mxu0 %v37
    %1305 = vmatprep.subr.mxu0 %v42
    %1306 = vmatpush1.msra.mxu0 %v41
    %1307 = vmatprep.subr.mxu0 %v46
    %1308 = vmatpush1.msra.mxu0 %v45
    %1309 = vmatprep.subr.mxu0 %v50
    %1310 = vmatpush1.msra.mxu0 %v49
    %1311 = vmatprep.subr.mxu0 %v54
    %1312 = vmatpush1.msra.mxu0 %v53
    %1313 = vmatprep.subr.mxu0 %v58
    %1314 = vmatpush1.msra.mxu0 %v57
    %1315 = vmatprep.subr.mxu0 %v62
    %1316 = vmatpush1.msra.mxu0 %v61
    %1317 = vmatprep.subr.mxu0 %v66
    %1318 = vmatpush1.msra.mxu0 %v65
    %1319 = vmatprep.subr.mxu0 %v70
    %1320 = vmatpush1.msra.mxu0 %v69
    %1321 = vmatprep.subr.mxu0 %v74
    %1322 = vmatpush1.msra.mxu0 %v73
    %1323 = vmatprep.subr.mxu0 %v78
    %1324 = vmatpush1.msra.mxu0 %v77
    %1325 = vmatprep.subr.mxu0 %v82
    %1326 = vmatpush1.msra.mxu0 %v81
    %1327 = vmatprep.subr.mxu0 %v86
    %1328 = vmatpush1.msra.mxu0 %v85
    %1329 = vmatprep.subr.mxu0 %v90
    %1330 = vmatpush1.msra.mxu0 %v89
    %1331 = vmatprep.subr.mxu0 %v94
    %1332 = vmatpush1.msra.mxu0 %v93
    %1333 = vmatprep.subr.mxu0 0.0
    %1334 = vmatpush1.msra.mxu0 0.0
    %1335 = vmatprep.subr.mxu0 0.0
    %1336 = vmatpush1.msra.mxu0 0.0
    %1337 = vmatprep.subr.mxu0 0.0
    %1338 = vmatpush1.msra.mxu0 0.0
    %1339 = vmatprep.subr.mxu0 0.0
    %1340 = vmatpush1.msra.mxu0 0.0
    %1341 = vmatprep.subr.mxu0 0.0
    %1342 = vmatpush1.msra.mxu0 0.0
    %1343 = vmatprep.subr.mxu0 0.0
    %1344 = vmatpush1.msra.mxu0 0.0
    %1345 = vmatprep.subr.mxu0 0.0
    %1346 = vmatpush1.msra.mxu0 0.0
    %1347 = vmatprep.subr.mxu0 0.0
    %1348 = vmatpush1.msra.mxu0 0.0
    %1349 = vmatprep.subr.mxu0 0.0
    %1350 = vmatpush1.msra.mxu0 0.0
    %1351 = vmatprep.subr.mxu0 0.0
    %1352 = vmatpush1.msra.mxu0 0.0
    %1353 = vmatprep.subr.mxu0 0.0
    %1354 = vmatpush1.msra.mxu0 0.0
    %1355 = vmatprep.subr.mxu0 0.0
    %1356 = vmatpush1.msra.mxu0 0.0
    %1357 = vmatprep.subr.mxu0 0.0
    %1358 = vmatpush1.msra.mxu0 0.0
    %1359 = vmatprep.subr.mxu0 0.0
    %1360 = vmatpush1.msra.mxu0 0.0
    %1361 = vmatprep.subr.mxu0 0.0
    %1362 = vmatpush1.msra.mxu0 0.0
    %1363 = vmatprep.subr.mxu0 0.0
    %1364 = vmatpush1.msra.mxu0 0.0
    %1365 = vmatprep.mubr.f32.mxu0 0.0
    %1366 = vmatmul.mubr.f32.gmra.mrb[0].mxu0 %v1277
    %v1367 = vpop.f32.mrb[0].mxu0
    %v1368 = vadd.f32 0.0, %v1367
    %v1369 = vpop.f32.mrb[0].mxu0
    %v1370 = vadd.f32 0.0, %v1369
    %1371 = vmatprep.mubr.f32.mxu0 0.0
    %1372 = vmatmul.mubr.f32.gmra.mrb[0].mxu0 %v1278
    %v1373 = vpop.f32.mrb[0].mxu0
    %v1374 = vadd.f32 0.0, %v1373
    %v1375 = vpop.f32.mrb[0].mxu0
    %v1376 = vadd.f32 0.0, %v1375
    %1377 = vdwg.mxu0
    %1378 = vmatprep.subr.mxu0 %v36
    %1379 = vmatpush1.msra.mxu0 %v35
    %1380 = vmatprep.subr.mxu0 %v40
    %1381 = vmatpush1.msra.mxu0 %v39
    %1382 = vmatprep.subr.mxu0 %v44
    %1383 = vmatpush1.msra.mxu0 %v43
    %1384 = vmatprep.subr.mxu0 %v48
    %1385 = vmatpush1.msra.mxu0 %v47
    %1386 = vmatprep.subr.mxu0 %v52
    %1387 = vmatpush1.msra.mxu0 %v51
    %1388 = vmatprep.subr.mxu0 %v56
    %1389 = vmatpush1.msra.mxu0 %v55
    %1390 = vmatprep.subr.mxu0 %v60
    %1391 = vmatpush1.msra.mxu0 %v59
    %1392 = vmatprep.subr.mxu0 %v64
    %1393 = vmatpush1.msra.mxu0 %v63
    %1394 = vmatprep.subr.mxu0 %v68
    %1395 = vmatpush1.msra.mxu0 %v67
    %1396 = vmatprep.subr.mxu0 %v72
    %1397 = vmatpush1.msra.mxu0 %v71
    %1398 = vmatprep.subr.mxu0 %v76
    %1399 = vmatpush1.msra.mxu0 %v75
    %1400 = vmatprep.subr.mxu0 %v80
    %1401 = vmatpush1.msra.mxu0 %v79
    %1402 = vmatprep.subr.mxu0 %v84
    %1403 = vmatpush1.msra.mxu0 %v83
    %1404 = vmatprep.subr.mxu0 %v88
    %1405 = vmatpush1.msra.mxu0 %v87
    %1406 = vmatprep.subr.mxu0 %v92
    %1407 = vmatpush1.msra.mxu0 %v91
    %1408 = vmatprep.subr.mxu0 %v96
    %1409 = vmatpush1.msra.mxu0 %v95
    %1410 = vmatprep.subr.mxu0 0.0
    %1411 = vmatpush1.msra.mxu0 0.0
    %1412 = vmatprep.subr.mxu0 0.0
    %1413 = vmatpush1.msra.mxu0 0.0
    %1414 = vmatprep.subr.mxu0 0.0
    %1415 = vmatpush1.msra.mxu0 0.0
    %1416 = vmatprep.subr.mxu0 0.0
    %1417 = vmatpush1.msra.mxu0 0.0
    %1418 = vmatprep.subr.mxu0 0.0
    %1419 = vmatpush1.msra.mxu0 0.0
    %1420 = vmatprep.subr.mxu0 0.0
    %1421 = vmatpush1.msra.mxu0 0.0
    %1422 = vmatprep.subr.mxu0 0.0
    %1423 = vmatpush1.msra.mxu0 0.0
    %1424 = vmatprep.subr.mxu0 0.0
    %1425 = vmatpush1.msra.mxu0 0.0
    %1426 = vmatprep.subr.mxu0 0.0
    %1427 = vmatpush1.msra.mxu0 0.0
    %1428 = vmatprep.subr.mxu0 0.0
    %1429 = vmatpush1.msra.mxu0 0.0
    %1430 = vmatprep.subr.mxu0 0.0
    %1431 = vmatpush1.msra.mxu0 0.0
    %1432 = vmatprep.subr.mxu0 0.0
    %1433 = vmatpush1.msra.mxu0 0.0
    %1434 = vmatprep.subr.mxu0 0.0
    %1435 = vmatpush1.msra.mxu0 0.0
    %1436 = vmatprep.subr.mxu0 0.0
    %1437 = vmatpush1.msra.mxu0 0.0
    %1438 = vmatprep.subr.mxu0 0.0
    %1439 = vmatpush1.msra.mxu0 0.0
    %1440 = vmatprep.subr.mxu0 0.0
    %1441 = vmatpush1.msra.mxu0 0.0
    %1442 = vmatprep.mubr.f32.mxu0 0.0
    %1443 = vmatmul.mubr.f32.gmra.mrb[0].mxu0 %v1277
    %v1444 = vpop.f32.mrb[0].mxu0
    %v1445 = vadd.f32 0.0, %v1444
    %v1446 = vpop.f32.mrb[0].mxu0
    %v1447 = vadd.f32 0.0, %v1446
    %1448 = vmatprep.mubr.f32.mxu0 0.0
    %1449 = vmatmul.mubr.f32.gmra.mrb[0].mxu0 %v1278
    %v1450 = vpop.f32.mrb[0].mxu0
    %v1451 = vadd.f32 0.0, %v1450
    %v1452 = vpop.f32.mrb[0].mxu0
    %v1453 = vadd.f32 0.0, %v1452
    %1454 = vdwg.mxu0
    %v1455 = vadd.f32 %v1293, %v1368
    %v1456 = vadd.f32 %v1294, %v1370
    %v1457 = vadd.f32 %v1295, %v1445
    %v1458 = vadd.f32 %v1296, %v1447
    %v1459 = vadd.f32 %v1297, %v1374
    %v1460 = vadd.f32 %v1298, %v1376
    %v1461 = vadd.f32 %v1299, %v1451
    %v1462 = vadd.f32 %v1300, %v1453
    %v1463 = vmul.f32 %v1455, 0.5
    %v1464 = vmul.f32 %v1459, 0.5
    %v1465 = vtanh.pop %v1463
    %v1466 = vtanh.pop %v1464
    %v1467 = vadd.f32 %v1465, 1.0
    %v1468 = vadd.f32 %v1466, 1.0
    %v1469 = vmul.f32 %v1467, 0.5
    %v1470 = vmul.f32 %v1468, 0.5
    %v1471 = vmul.f32 %v1456, 0.5
    %v1472 = vmul.f32 %v1460, 0.5
    %v1473 = vtanh.pop %v1471
    %v1474 = vtanh.pop %v1472
    %v1475 = vadd.f32 %v1473, 1.0
    %v1476 = vadd.f32 %v1474, 1.0
    %v1477 = vmul.f32 %v1475, 0.5
    %v1478 = vmul.f32 %v1476, 0.5
    %v1479 = vtanh.pop %v1457
    %v1480 = vtanh.pop %v1461
    %v1481 = vmul.f32 %v1458, 0.5
    %v1482 = vmul.f32 %v1462, 0.5
    %v1483 = vtanh.pop %v1481
    %v1484 = vtanh.pop %v1482
    %v1485 = vadd.f32 %v1483, 1.0
    %v1486 = vadd.f32 %v1484, 1.0
    %v1487 = vmul.f32 %v1485, 0.5
    %v1488 = vmul.f32 %v1486, 0.5
    %v1489 = vmul.f32 %v1477, %v1273
    %v1490 = vmul.f32 %v1478, %v1274
    %v1491 = vmul.f32 %v1469, %v1479
    %v1492 = vmul.f32 %v1470, %v1480
    %v1493 = vadd.f32 %v1489, %v1491
    %v1494 = vadd.f32 %v1490, %v1492
    %v1495 = vtanh.pop %v1493
    %v1496 = vtanh.pop %v1494
    %v1497 = vmul.f32 %v1487, %v1495
    %v1498 = vmul.f32 %v1488, %v1496
    %vm1499 = vcmp.eq.s32.totalorder %v31, 4
    %vm1500 = vcmp.eq.s32.totalorder %v32, 4
    %v1501 = vsel %vm1499, 1, 0
    %v1502 = vsel %vm1500, 1, 0
    %1503 = vset.pattern.permute.xlu0 0
    %1504 = vperm.xlu0 %1503, %v1501
    %v1505 = vpop.permute.xlu0 %1504
    %1506 = vset.pattern.permute.xlu0 0
    %1507 = vperm.xlu0 %1506, %v1502
    %v1508 = vpop.permute.xlu0 %1507
    %vm1509 = vcmp.eq.s32.totalorder %v1505, 1
    %vm1510 = vcmp.eq.s32.totalorder %v1508, 1
    %v1511 = vsel %vm1509, %v1497, %v1291
    %v1512 = vsel %vm1510, %v1498, %v1292
    %v1513 = vld [vmem:[#allocation2 + $0x100] sm:$0xff]
    %v1514 = vld [vmem:[#allocation2 + $0x108] sm:$0xff]
    %v1515 = vld [vmem:[#allocation2 + $0x110] sm:$0xff]
    %v1516 = vld [vmem:[#allocation2 + $0x118] sm:$0xff]
    %v1517 = vld [vmem:[#allocation2 + $0x120] sm:$0xff]
    %v1518 = vld [vmem:[#allocation2 + $0x128] sm:$0xff]
    %v1519 = vld [vmem:[#allocation2 + $0x130] sm:$0xff]
    %v1520 = vld [vmem:[#allocation2 + $0x138] sm:$0xff]
    %1521 = vmatprep.subr.mxu0 %v34
    %1522 = vmatpush1.msra.mxu0 %v33
    %1523 = vmatprep.subr.mxu0 %v38
    %1524 = vmatpush1.msra.mxu0 %v37
    %1525 = vmatprep.subr.mxu0 %v42
    %1526 = vmatpush1.msra.mxu0 %v41
    %1527 = vmatprep.subr.mxu0 %v46
    %1528 = vmatpush1.msra.mxu0 %v45
    %1529 = vmatprep.subr.mxu0 %v50
    %1530 = vmatpush1.msra.mxu0 %v49
    %1531 = vmatprep.subr.mxu0 %v54
    %1532 = vmatpush1.msra.mxu0 %v53
    %1533 = vmatprep.subr.mxu0 %v58
    %1534 = vmatpush1.msra.mxu0 %v57
    %1535 = vmatprep.subr.mxu0 %v62
    %1536 = vmatpush1.msra.mxu0 %v61
    %1537 = vmatprep.subr.mxu0 %v66
    %1538 = vmatpush1.msra.mxu0 %v65
    %1539 = vmatprep.subr.mxu0 %v70
    %1540 = vmatpush1.msra.mxu0 %v69
    %1541 = vmatprep.subr.mxu0 %v74
    %1542 = vmatpush1.msra.mxu0 %v73
    %1543 = vmatprep.subr.mxu0 %v78
    %1544 = vmatpush1.msra.mxu0 %v77
    %1545 = vmatprep.subr.mxu0 %v82
    %1546 = vmatpush1.msra.mxu0 %v81
    %1547 = vmatprep.subr.mxu0 %v86
    %1548 = vmatpush1.msra.mxu0 %v85
    %1549 = vmatprep.subr.mxu0 %v90
    %1550 = vmatpush1.msra.mxu0 %v89
    %1551 = vmatprep.subr.mxu0 %v94
    %1552 = vmatpush1.msra.mxu0 %v93
    %1553 = vmatprep.subr.mxu0 0.0
    %1554 = vmatpush1.msra.mxu0 0.0
    %1555 = vmatprep.subr.mxu0 0.0
    %1556 = vmatpush1.msra.mxu0 0.0
    %1557 = vmatprep.subr.mxu0 0.0
    %1558 = vmatpush1.msra.mxu0 0.0
    %1559 = vmatprep.subr.mxu0 0.0
    %1560 = vmatpush1.msra.mxu0 0.0
    %1561 = vmatprep.subr.mxu0 0.0
    %1562 = vmatpush1.msra.mxu0 0.0
    %1563 = vmatprep.subr.mxu0 0.0
    %1564 = vmatpush1.msra.mxu0 0.0
    %1565 = vmatprep.subr.mxu0 0.0
    %1566 = vmatpush1.msra.mxu0 0.0
    %1567 = vmatprep.subr.mxu0 0.0
    %1568 = vmatpush1.msra.mxu0 0.0
    %1569 = vmatprep.subr.mxu0 0.0
    %1570 = vmatpush1.msra.mxu0 0.0
    %1571 = vmatprep.subr.mxu0 0.0
    %1572 = vmatpush1.msra.mxu0 0.0
    %1573 = vmatprep.subr.mxu0 0.0
    %1574 = vmatpush1.msra.mxu0 0.0
    %1575 = vmatprep.subr.mxu0 0.0
    %1576 = vmatpush1.msra.mxu0 0.0
    %1577 = vmatprep.subr.mxu0 0.0
    %1578 = vmatpush1.msra.mxu0 0.0
    %1579 = vmatprep.subr.mxu0 0.0
    %1580 = vmatpush1.msra.mxu0 0.0
    %1581 = vmatprep.subr.mxu0 0.0
    %1582 = vmatpush1.msra.mxu0 0.0
    %1583 = vmatprep.subr.mxu0 0.0
    %1584 = vmatpush1.msra.mxu0 0.0
    %1585 = vmatprep.mubr.f32.mxu0 0.0
    %1586 = vmatmul.mubr.f32.gmra.mrb[0].mxu0 %v1497
    %v1587 = vpop.f32.mrb[0].mxu0
    %v1588 = vadd.f32 0.0, %v1587
    %v1589 = vpop.f32.mrb[0].mxu0
    %v1590 = vadd.f32 0.0, %v1589
    %1591 = vmatprep.mubr.f32.mxu0 0.0
    %1592 = vmatmul.mubr.f32.gmra.mrb[0].mxu0 %v1498
    %v1593 = vpop.f32.mrb[0].mxu0
    %v1594 = vadd.f32 0.0, %v1593
    %v1595 = vpop.f32.mrb[0].mxu0
    %v1596 = vadd.f32 0.0, %v1595
    %1597 = vdwg.mxu0
    %1598 = vmatprep.subr.mxu0 %v36
    %1599 = vmatpush1.msra.mxu0 %v35
    %1600 = vmatprep.subr.mxu0 %v40
    %1601 = vmatpush1.msra.mxu0 %v39
    %1602 = vmatprep.subr.mxu0 %v44
    %1603 = vmatpush1.msra.mxu0 %v43
    %1604 = vmatprep.subr.mxu0 %v48
    %1605 = vmatpush1.msra.mxu0 %v47
    %1606 = vmatprep.subr.mxu0 %v52
    %1607 = vmatpush1.msra.mxu0 %v51
    %1608 = vmatprep.subr.mxu0 %v56
    %1609 = vmatpush1.msra.mxu0 %v55
    %1610 = vmatprep.subr.mxu0 %v60
    %1611 = vmatpush1.msra.mxu0 %v59
    %1612 = vmatprep.subr.mxu0 %v64
    %1613 = vmatpush1.msra.mxu0 %v63
    %1614 = vmatprep.subr.mxu0 %v68
    %1615 = vmatpush1.msra.mxu0 %v67
    %1616 = vmatprep.subr.mxu0 %v72
    %1617 = vmatpush1.msra.mxu0 %v71
    %1618 = vmatprep.subr.mxu0 %v76
    %1619 = vmatpush1.msra.mxu0 %v75
    %1620 = vmatprep.subr.mxu0 %v80
    %1621 = vmatpush1.msra.mxu0 %v79
    %1622 = vmatprep.subr.mxu0 %v84
    %1623 = vmatpush1.msra.mxu0 %v83
    %1624 = vmatprep.subr.mxu0 %v88
    %1625 = vmatpush1.msra.mxu0 %v87
    %1626 = vmatprep.subr.mxu0 %v92
    %1627 = vmatpush1.msra.mxu0 %v91
    %1628 = vmatprep.subr.mxu0 %v96
    %1629 = vmatpush1.msra.mxu0 %v95
    %1630 = vmatprep.subr.mxu0 0.0
    %1631 = vmatpush1.msra.mxu0 0.0
    %1632 = vmatprep.subr.mxu0 0.0
    %1633 = vmatpush1.msra.mxu0 0.0
    %1634 = vmatprep.subr.mxu0 0.0
    %1635 = vmatpush1.msra.mxu0 0.0
    %1636 = vmatprep.subr.mxu0 0.0
    %1637 = vmatpush1.msra.mxu0 0.0
    %1638 = vmatprep.subr.mxu0 0.0
    %1639 = vmatpush1.msra.mxu0 0.0
    %1640 = vmatprep.subr.mxu0 0.0
    %1641 = vmatpush1.msra.mxu0 0.0
    %1642 = vmatprep.subr.mxu0 0.0
    %1643 = vmatpush1.msra.mxu0 0.0
    %1644 = vmatprep.subr.mxu0 0.0
    %1645 = vmatpush1.msra.mxu0 0.0
    %1646 = vmatprep.subr.mxu0 0.0
    %1647 = vmatpush1.msra.mxu0 0.0
    %1648 = vmatprep.subr.mxu0 0.0
    %1649 = vmatpush1.msra.mxu0 0.0
    %1650 = vmatprep.subr.mxu0 0.0
    %1651 = vmatpush1.msra.mxu0 0.0
    %1652 = vmatprep.subr.mxu0 0.0
    %1653 = vmatpush1.msra.mxu0 0.0
    %1654 = vmatprep.subr.mxu0 0.0
    %1655 = vmatpush1.msra.mxu0 0.0
    %1656 = vmatprep.subr.mxu0 0.0
    %1657 = vmatpush1.msra.mxu0 0.0
    %1658 = vmatprep.subr.mxu0 0.0
    %1659 = vmatpush1.msra.mxu0 0.0
    %1660 = vmatprep.subr.mxu0 0.0
    %1661 = vmatpush1.msra.mxu0 0.0
    %1662 = vmatprep.mubr.f32.mxu0 0.0
    %1663 = vmatmul.mubr.f32.gmra.mrb[0].mxu0 %v1497
    %v1664 = vpop.f32.mrb[0].mxu0
    %v1665 = vadd.f32 0.0, %v1664
    %v1666 = vpop.f32.mrb[0].mxu0
    %v1667 = vadd.f32 0.0, %v1666
    %1668 = vmatprep.mubr.f32.mxu0 0.0
    %1669 = vmatmul.mubr.f32.gmra.mrb[0].mxu0 %v1498
    %v1670 = vpop.f32.mrb[0].mxu0
    %v1671 = vadd.f32 0.0, %v1670
    %v1672 = vpop.f32.mrb[0].mxu0
    %v1673 = vadd.f32 0.0, %v1672
    %1674 = vdwg.mxu0
    %v1675 = vadd.f32 %v1513, %v1588
    %v1676 = vadd.f32 %v1514, %v1590
    %v1677 = vadd.f32 %v1515, %v1665
    %v1678 = vadd.f32 %v1516, %v1667
    %v1679 = vadd.f32 %v1517, %v1594
    %v1680 = vadd.f32 %v1518, %v1596
    %v1681 = vadd.f32 %v1519, %v1671
    %v1682 = vadd.f32 %v1520, %v1673
    %v1683 = vmul.f32 %v1675, 0.5
    %v1684 = vmul.f32 %v1679, 0.5
    %v1685 = vtanh.pop %v1683
    %v1686 = vtanh.pop %v1684
    %v1687 = vadd.f32 %v1685, 1.0
    %v1688 = vadd.f32 %v1686, 1.0
    %v1689 = vmul.f32 %v1687, 0.5
    %v1690 = vmul.f32 %v1688, 0.5
    %v1691 = vmul.f32 %v1676, 0.5
    %v1692 = vmul.f32 %v1680, 0.5
    %v1693 = vtanh.pop %v1691
    %v1694 = vtanh.pop %v1692
    %v1695 = vadd.f32 %v1693, 1.0
    %v1696 = vadd.f32 %v1694, 1.0
    %v1697 = vmul.f32 %v1695, 0.5
    %v1698 = vmul.f32 %v1696, 0.5
    %v1699 = vtanh.pop %v1677
    %v1700 = vtanh.pop %v1681
    %v1701 = vmul.f32 %v1678, 0.5
    %v1702 = vmul.f32 %v1682, 0.5
    %v1703 = vtanh.pop %v1701
    %v1704 = vtanh.pop %v1702
    %v1705 = vadd.f32 %v1703, 1.0
    %v1706 = vadd.f32 %v1704, 1.0
    %v1707 = vmul.f32 %v1705, 0.5
    %v1708 = vmul.f32 %v1706, 0.5
    %v1709 = vmul.f32 %v1697, %v1493
    %v1710 = vmul.f32 %v1698, %v1494
    %v1711 = vmul.f32 %v1689, %v1699
    %v1712 = vmul.f32 %v1690, %v1700
    %v1713 = vadd.f32 %v1709, %v1711
    %v1714 = vadd.f32 %v1710, %v1712
    %v1715 = vtanh.pop %v1713
    %v1716 = vtanh.pop %v1714
    %v1717 = vmul.f32 %v1707, %v1715
    %v1718 = vmul.f32 %v1708, %v1716
    %vm1719 = vcmp.eq.s32.totalorder %v31, 5
    %vm1720 = vcmp.eq.s32.totalorder %v32, 5
    %v1721 = vsel %vm1719, 1, 0
    %v1722 = vsel %vm1720, 1, 0
    %1723 = vset.pattern.permute.xlu0 0
    %1724 = vperm.xlu0 %1723, %v1721
    %v1725 = vpop.permute.xlu0 %1724
    %1726 = vset.pattern.permute.xlu0 0
    %1727 = vperm.xlu0 %1726, %v1722
    %v1728 = vpop.permute.xlu0 %1727
    %vm1729 = vcmp.eq.s32.totalorder %v1725, 1
    %vm1730 = vcmp.eq.s32.totalorder %v1728, 1
    %v1731 = vsel %vm1729, %v1717, %v1511
    %v1732 = vsel %vm1730, %v1718, %v1512
    %v1733 = vld [vmem:[#allocation2 + $0x140] sm:$0xff]
    %v1734 = vld [vmem:[#allocation2 + $0x148] sm:$0xff]
    %v1735 = vld [vmem:[#allocation2 + $0x150] sm:$0xff]
    %v1736 = vld [vmem:[#allocation2 + $0x158] sm:$0xff]
    %v1737 = vld [vmem:[#allocation2 + $0x160] sm:$0xff]
    %v1738 = vld [vmem:[#allocation2 + $0x168] sm:$0xff]
    %v1739 = vld [vmem:[#allocation2 + $0x170] sm:$0xff]
    %v1740 = vld [vmem:[#allocation2 + $0x178] sm:$0xff]
    %1741 = vmatprep.subr.mxu0 %v34
    %1742 = vmatpush1.msra.mxu0 %v33
    %1743 = vmatprep.subr.mxu0 %v38
    %1744 = vmatpush1.msra.mxu0 %v37
    %1745 = vmatprep.subr.mxu0 %v42
    %1746 = vmatpush1.msra.mxu0 %v41
    %1747 = vmatprep.subr.mxu0 %v46
    %1748 = vmatpush1.msra.mxu0 %v45
    %1749 = vmatprep.subr.mxu0 %v50
    %1750 = vmatpush1.msra.mxu0 %v49
    %1751 = vmatprep.subr.mxu0 %v54
    %1752 = vmatpush1.msra.mxu0 %v53
    %1753 = vmatprep.subr.mxu0 %v58
    %1754 = vmatpush1.msra.mxu0 %v57
    %1755 = vmatprep.subr.mxu0 %v62
    %1756 = vmatpush1.msra.mxu0 %v61
    %1757 = vmatprep.subr.mxu0 %v66
    %1758 = vmatpush1.msra.mxu0 %v65
    %1759 = vmatprep.subr.mxu0 %v70
    %1760 = vmatpush1.msra.mxu0 %v69
    %1761 = vmatprep.subr.mxu0 %v74
    %1762 = vmatpush1.msra.mxu0 %v73
    %1763 = vmatprep.subr.mxu0 %v78
    %1764 = vmatpush1.msra.mxu0 %v77
    %1765 = vmatprep.subr.mxu0 %v82
    %1766 = vmatpush1.msra.mxu0 %v81
    %1767 = vmatprep.subr.mxu0 %v86
    %1768 = vmatpush1.msra.mxu0 %v85
    %1769 = vmatprep.subr.mxu0 %v90
    %1770 = vmatpush1.msra.mxu0 %v89
    %1771 = vmatprep.subr.mxu0 %v94
    %1772 = vmatpush1.msra.mxu0 %v93
    %1773 = vmatprep.subr.mxu0 0.0
    %1774 = vmatpush1.msra.mxu0 0.0
    %1775 = vmatprep.subr.mxu0 0.0
    %1776 = vmatpush1.msra.mxu0 0.0
    %1777 = vmatprep.subr.mxu0 0.0
    %1778 = vmatpush1.msra.mxu0 0.0
    %1779 = vmatprep.subr.mxu0 0.0
    %1780 = vmatpush1.msra.mxu0 0.0
    %1781 = vmatprep.subr.mxu0 0.0
    %1782 = vmatpush1.msra.mxu0 0.0
    %1783 = vmatprep.subr.mxu0 0.0
    %1784 = vmatpush1.msra.mxu0 0.0
    %1785 = vmatprep.subr.mxu0 0.0
    %1786 = vmatpush1.msra.mxu0 0.0
    %1787 = vmatprep.subr.mxu0 0.0
    %1788 = vmatpush1.msra.mxu0 0.0
    %1789 = vmatprep.subr.mxu0 0.0
    %1790 = vmatpush1.msra.mxu0 0.0
    %1791 = vmatprep.subr.mxu0 0.0
    %1792 = vmatpush1.msra.mxu0 0.0
    %1793 = vmatprep.subr.mxu0 0.0
    %1794 = vmatpush1.msra.mxu0 0.0
    %1795 = vmatprep.subr.mxu0 0.0
    %1796 = vmatpush1.msra.mxu0 0.0
    %1797 = vmatprep.subr.mxu0 0.0
    %1798 = vmatpush1.msra.mxu0 0.0
    %1799 = vmatprep.subr.mxu0 0.0
    %1800 = vmatpush1.msra.mxu0 0.0
    %1801 = vmatprep.subr.mxu0 0.0
    %1802 = vmatpush1.msra.mxu0 0.0
    %1803 = vmatprep.subr.mxu0 0.0
    %1804 = vmatpush1.msra.mxu0 0.0
    %1805 = vmatprep.mubr.f32.mxu0 0.0
    %1806 = vmatmul.mubr.f32.gmra.mrb[0].mxu0 %v1717
    %v1807 = vpop.f32.mrb[0].mxu0
    %v1808 = vadd.f32 0.0, %v1807
    %v1809 = vpop.f32.mrb[0].mxu0
    %v1810 = vadd.f32 0.0, %v1809
    %1811 = vmatprep.mubr.f32.mxu0 0.0
    %1812 = vmatmul.mubr.f32.gmra.mrb[0].mxu0 %v1718
    %v1813 = vpop.f32.mrb[0].mxu0
    %v1814 = vadd.f32 0.0, %v1813
    %v1815 = vpop.f32.mrb[0].mxu0
    %v1816 = vadd.f32 0.0, %v1815
    %1817 = vdwg.mxu0
    %1818 = vmatprep.subr.mxu0 %v36
    %1819 = vmatpush1.msra.mxu0 %v35
    %1820 = vmatprep.subr.mxu0 %v40
    %1821 = vmatpush1.msra.mxu0 %v39
    %1822 = vmatprep.subr.mxu0 %v44
    %1823 = vmatpush1.msra.mxu0 %v43
    %1824 = vmatprep.subr.mxu0 %v48
    %1825 = vmatpush1.msra.mxu0 %v47
    %1826 = vmatprep.subr.mxu0 %v52
    %1827 = vmatpush1.msra.mxu0 %v51
    %1828 = vmatprep.subr.mxu0 %v56
    %1829 = vmatpush1.msra.mxu0 %v55
    %1830 = vmatprep.subr.mxu0 %v60
    %1831 = vmatpush1.msra.mxu0 %v59
    %1832 = vmatprep.subr.mxu0 %v64
    %1833 = vmatpush1.msra.mxu0 %v63
    %1834 = vmatprep.subr.mxu0 %v68
    %1835 = vmatpush1.msra.mxu0 %v67
    %1836 = vmatprep.subr.mxu0 %v72
    %1837 = vmatpush1.msra.mxu0 %v71
    %1838 = vmatprep.subr.mxu0 %v76
    %1839 = vmatpush1.msra.mxu0 %v75
    %1840 = vmatprep.subr.mxu0 %v80
    %1841 = vmatpush1.msra.mxu0 %v79
    %1842 = vmatprep.subr.mxu0 %v84
    %1843 = vmatpush1.msra.mxu0 %v83
    %1844 = vmatprep.subr.mxu0 %v88
    %1845 = vmatpush1.msra.mxu0 %v87
    %1846 = vmatprep.subr.mxu0 %v92
    %1847 = vmatpush1.msra.mxu0 %v91
    %1848 = vmatprep.subr.mxu0 %v96
    %1849 = vmatpush1.msra.mxu0 %v95
    %1850 = vmatprep.subr.mxu0 0.0
    %1851 = vmatpush1.msra.mxu0 0.0
    %1852 = vmatprep.subr.mxu0 0.0
    %1853 = vmatpush1.msra.mxu0 0.0
    %1854 = vmatprep.subr.mxu0 0.0
    %1855 = vmatpush1.msra.mxu0 0.0
    %1856 = vmatprep.subr.mxu0 0.0
    %1857 = vmatpush1.msra.mxu0 0.0
    %1858 = vmatprep.subr.mxu0 0.0
    %1859 = vmatpush1.msra.mxu0 0.0
    %1860 = vmatprep.subr.mxu0 0.0
    %1861 = vmatpush1.msra.mxu0 0.0
    %1862 = vmatprep.subr.mxu0 0.0
    %1863 = vmatpush1.msra.mxu0 0.0
    %1864 = vmatprep.subr.mxu0 0.0
    %1865 = vmatpush1.msra.mxu0 0.0
    %1866 = vmatprep.subr.mxu0 0.0
    %1867 = vmatpush1.msra.mxu0 0.0
    %1868 = vmatprep.subr.mxu0 0.0
    %1869 = vmatpush1.msra.mxu0 0.0
    %1870 = vmatprep.subr.mxu0 0.0
    %1871 = vmatpush1.msra.mxu0 0.0
    %1872 = vmatprep.subr.mxu0 0.0
    %1873 = vmatpush1.msra.mxu0 0.0
    %1874 = vmatprep.subr.mxu0 0.0
    %1875 = vmatpush1.msra.mxu0 0.0
    %1876 = vmatprep.subr.mxu0 0.0
    %1877 = vmatpush1.msra.mxu0 0.0
    %1878 = vmatprep.subr.mxu0 0.0
    %1879 = vmatpush1.msra.mxu0 0.0
    %1880 = vmatprep.subr.mxu0 0.0
    %1881 = vmatpush1.msra.mxu0 0.0
    %1882 = vmatprep.mubr.f32.mxu0 0.0
    %1883 = vmatmul.mubr.f32.gmra.mrb[0].mxu0 %v1717
    %v1884 = vpop.f32.mrb[0].mxu0
    %v1885 = vadd.f32 0.0, %v1884
    %v1886 = vpop.f32.mrb[0].mxu0
    %v1887 = vadd.f32 0.0, %v1886
    %1888 = vmatprep.mubr.f32.mxu0 0.0
    %1889 = vmatmul.mubr.f32.gmra.mrb[0].mxu0 %v1718
    %v1890 = vpop.f32.mrb[0].mxu0
    %v1891 = vadd.f32 0.0, %v1890
    %v1892 = vpop.f32.mrb[0].mxu0
    %v1893 = vadd.f32 0.0, %v1892
    %1894 = vdwg.mxu0
    %v1895 = vadd.f32 %v1733, %v1808
    %v1896 = vadd.f32 %v1734, %v1810
    %v1897 = vadd.f32 %v1735, %v1885
    %v1898 = vadd.f32 %v1736, %v1887
    %v1899 = vadd.f32 %v1737, %v1814
    %v1900 = vadd.f32 %v1738, %v1816
    %v1901 = vadd.f32 %v1739, %v1891
    %v1902 = vadd.f32 %v1740, %v1893
    %v1903 = vmul.f32 %v1895, 0.5
    %v1904 = vmul.f32 %v1899, 0.5
    %v1905 = vtanh.pop %v1903
    %v1906 = vtanh.pop %v1904
    %v1907 = vadd.f32 %v1905, 1.0
    %v1908 = vadd.f32 %v1906, 1.0
    %v1909 = vmul.f32 %v1907, 0.5
    %v1910 = vmul.f32 %v1908, 0.5
    %v1911 = vmul.f32 %v1896, 0.5
    %v1912 = vmul.f32 %v1900, 0.5
    %v1913 = vtanh.pop %v1911
    %v1914 = vtanh.pop %v1912
    %v1915 = vadd.f32 %v1913, 1.0
    %v1916 = vadd.f32 %v1914, 1.0
    %v1917 = vmul.f32 %v1915, 0.5
    %v1918 = vmul.f32 %v1916, 0.5
    %v1919 = vtanh.pop %v1897
    %v1920 = vtanh.pop %v1901
    %v1921 = vmul.f32 %v1898, 0.5
    %v1922 = vmul.f32 %v1902, 0.5
    %v1923 = vtanh.pop %v1921
    %v1924 = vtanh.pop %v1922
    %v1925 = vadd.f32 %v1923, 1.0
    %v1926 = vadd.f32 %v1924, 1.0
    %v1927 = vmul.f32 %v1925, 0.5
    %v1928 = vmul.f32 %v1926, 0.5
    %v1929 = vmul.f32 %v1917, %v1713
    %v1930 = vmul.f32 %v1918, %v1714
    %v1931 = vmul.f32 %v1909, %v1919
    %v1932 = vmul.f32 %v1910, %v1920
    %v1933 = vadd.f32 %v1929, %v1931
    %v1934 = vadd.f32 %v1930, %v1932
    %v1935 = vtanh.pop %v1933
    %v1936 = vtanh.pop %v1934
    %v1937 = vmul.f32 %v1927, %v1935
    %v1938 = vmul.f32 %v1928, %v1936
    %vm1939 = vcmp.eq.s32.totalorder %v31, 6
    %vm1940 = vcmp.eq.s32.totalorder %v32, 6
    %v1941 = vsel %vm1939, 1, 0
    %v1942 = vsel %vm1940, 1, 0
    %1943 = vset.pattern.permute.xlu0 0
    %1944 = vperm.xlu0 %1943, %v1941
    %v1945 = vpop.permute.xlu0 %1944
    %1946 = vset.pattern.permute.xlu0 0
    %1947 = vperm.xlu0 %1946, %v1942
    %v1948 = vpop.permute.xlu0 %1947
    %vm1949 = vcmp.eq.s32.totalorder %v1945, 1
    %vm1950 = vcmp.eq.s32.totalorder %v1948, 1
    %v1951 = vsel %vm1949, %v1937, %v1731
    %v1952 = vsel %vm1950, %v1938, %v1732
    %v1953 = vld [vmem:[#allocation2 + $0x180] sm:$0xff]
    %v1954 = vld [vmem:[#allocation2 + $0x188] sm:$0xff]
    %v1955 = vld [vmem:[#allocation2 + $0x190] sm:$0xff]
    %v1956 = vld [vmem:[#allocation2 + $0x198] sm:$0xff]
    %v1957 = vld [vmem:[#allocation2 + $0x1a0] sm:$0xff]
    %v1958 = vld [vmem:[#allocation2 + $0x1a8] sm:$0xff]
    %v1959 = vld [vmem:[#allocation2 + $0x1b0] sm:$0xff]
    %v1960 = vld [vmem:[#allocation2 + $0x1b8] sm:$0xff]
    %1961 = vmatprep.subr.mxu0 %v34
    %1962 = vmatpush1.msra.mxu0 %v33
    %1963 = vmatprep.subr.mxu0 %v38
    %1964 = vmatpush1.msra.mxu0 %v37
    %1965 = vmatprep.subr.mxu0 %v42
    %1966 = vmatpush1.msra.mxu0 %v41
    %1967 = vmatprep.subr.mxu0 %v46
    %1968 = vmatpush1.msra.mxu0 %v45
    %1969 = vmatprep.subr.mxu0 %v50
    %1970 = vmatpush1.msra.mxu0 %v49
    %1971 = vmatprep.subr.mxu0 %v54
    %1972 = vmatpush1.msra.mxu0 %v53
    %1973 = vmatprep.subr.mxu0 %v58
    %1974 = vmatpush1.msra.mxu0 %v57
    %1975 = vmatprep.subr.mxu0 %v62
    %1976 = vmatpush1.msra.mxu0 %v61
    %1977 = vmatprep.subr.mxu0 %v66
    %1978 = vmatpush1.msra.mxu0 %v65
    %1979 = vmatprep.subr.mxu0 %v70
    %1980 = vmatpush1.msra.mxu0 %v69
    %1981 = vmatprep.subr.mxu0 %v74
    %1982 = vmatpush1.msra.mxu0 %v73
    %1983 = vmatprep.subr.mxu0 %v78
    %1984 = vmatpush1.msra.mxu0 %v77
    %1985 = vmatprep.subr.mxu0 %v82
    %1986 = vmatpush1.msra.mxu0 %v81
    %1987 = vmatprep.subr.mxu0 %v86
    %1988 = vmatpush1.msra.mxu0 %v85
    %1989 = vmatprep.subr.mxu0 %v90
    %1990 = vmatpush1.msra.mxu0 %v89
    %1991 = vmatprep.subr.mxu0 %v94
    %1992 = vmatpush1.msra.mxu0 %v93
    %1993 = vmatprep.subr.mxu0 0.0
    %1994 = vmatpush1.msra.mxu0 0.0
    %1995 = vmatprep.subr.mxu0 0.0
    %1996 = vmatpush1.msra.mxu0 0.0
    %1997 = vmatprep.subr.mxu0 0.0
    %1998 = vmatpush1.msra.mxu0 0.0
    %1999 = vmatprep.subr.mxu0 0.0
    %2000 = vmatpush1.msra.mxu0 0.0
    %2001 = vmatprep.subr.mxu0 0.0
    %2002 = vmatpush1.msra.mxu0 0.0
    %2003 = vmatprep.subr.mxu0 0.0
    %2004 = vmatpush1.msra.mxu0 0.0
    %2005 = vmatprep.subr.mxu0 0.0
    %2006 = vmatpush1.msra.mxu0 0.0
    %2007 = vmatprep.subr.mxu0 0.0
    %2008 = vmatpush1.msra.mxu0 0.0
    %2009 = vmatprep.subr.mxu0 0.0
    %2010 = vmatpush1.msra.mxu0 0.0
    %2011 = vmatprep.subr.mxu0 0.0
    %2012 = vmatpush1.msra.mxu0 0.0
    %2013 = vmatprep.subr.mxu0 0.0
    %2014 = vmatpush1.msra.mxu0 0.0
    %2015 = vmatprep.subr.mxu0 0.0
    %2016 = vmatpush1.msra.mxu0 0.0
    %2017 = vmatprep.subr.mxu0 0.0
    %2018 = vmatpush1.msra.mxu0 0.0
    %2019 = vmatprep.subr.mxu0 0.0
    %2020 = vmatpush1.msra.mxu0 0.0
    %2021 = vmatprep.subr.mxu0 0.0
    %2022 = vmatpush1.msra.mxu0 0.0
    %2023 = vmatprep.subr.mxu0 0.0
    %2024 = vmatpush1.msra.mxu0 0.0
    %2025 = vmatprep.mubr.f32.mxu0 0.0
    %2026 = vmatmul.mubr.f32.gmra.mrb[0].mxu0 %v1937
    %v2027 = vpop.f32.mrb[0].mxu0
    %v2028 = vadd.f32 0.0, %v2027
    %v2029 = vpop.f32.mrb[0].mxu0
    %v2030 = vadd.f32 0.0, %v2029
    %2031 = vmatprep.mubr.f32.mxu0 0.0
    %2032 = vmatmul.mubr.f32.gmra.mrb[0].mxu0 %v1938
    %v2033 = vpop.f32.mrb[0].mxu0
    %v2034 = vadd.f32 0.0, %v2033
    %v2035 = vpop.f32.mrb[0].mxu0
    %v2036 = vadd.f32 0.0, %v2035
    %2037 = vdwg.mxu0
    %2038 = vmatprep.subr.mxu0 %v36
    %2039 = vmatpush1.msra.mxu0 %v35
    %2040 = vmatprep.subr.mxu0 %v40
    %2041 = vmatpush1.msra.mxu0 %v39
    %2042 = vmatprep.subr.mxu0 %v44
    %2043 = vmatpush1.msra.mxu0 %v43
    %2044 = vmatprep.subr.mxu0 %v48
    %2045 = vmatpush1.msra.mxu0 %v47
    %2046 = vmatprep.subr.mxu0 %v52
    %2047 = vmatpush1.msra.mxu0 %v51
    %2048 = vmatprep.subr.mxu0 %v56
    %2049 = vmatpush1.msra.mxu0 %v55
    %2050 = vmatprep.subr.mxu0 %v60
    %2051 = vmatpush1.msra.mxu0 %v59
    %2052 = vmatprep.subr.mxu0 %v64
    %2053 = vmatpush1.msra.mxu0 %v63
    %2054 = vmatprep.subr.mxu0 %v68
    %2055 = vmatpush1.msra.mxu0 %v67
    %2056 = vmatprep.subr.mxu0 %v72
    %2057 = vmatpush1.msra.mxu0 %v71
    %2058 = vmatprep.subr.mxu0 %v76
    %2059 = vmatpush1.msra.mxu0 %v75
    %2060 = vmatprep.subr.mxu0 %v80
    %2061 = vmatpush1.msra.mxu0 %v79
    %2062 = vmatprep.subr.mxu0 %v84
    %2063 = vmatpush1.msra.mxu0 %v83
    %2064 = vmatprep.subr.mxu0 %v88
    %2065 = vmatpush1.msra.mxu0 %v87
    %2066 = vmatprep.subr.mxu0 %v92
    %2067 = vmatpush1.msra.mxu0 %v91
    %2068 = vmatprep.subr.mxu0 %v96
    %2069 = vmatpush1.msra.mxu0 %v95
    %2070 = vmatprep.subr.mxu0 0.0
    %2071 = vmatpush1.msra.mxu0 0.0
    %2072 = vmatprep.subr.mxu0 0.0
    %2073 = vmatpush1.msra.mxu0 0.0
    %2074 = vmatprep.subr.mxu0 0.0
    %2075 = vmatpush1.msra.mxu0 0.0
    %2076 = vmatprep.subr.mxu0 0.0
    %2077 = vmatpush1.msra.mxu0 0.0
    %2078 = vmatprep.subr.mxu0 0.0
    %2079 = vmatpush1.msra.mxu0 0.0
    %2080 = vmatprep.subr.mxu0 0.0
    %2081 = vmatpush1.msra.mxu0 0.0
    %2082 = vmatprep.subr.mxu0 0.0
    %2083 = vmatpush1.msra.mxu0 0.0
    %2084 = vmatprep.subr.mxu0 0.0
    %2085 = vmatpush1.msra.mxu0 0.0
    %2086 = vmatprep.subr.mxu0 0.0
    %2087 = vmatpush1.msra.mxu0 0.0
    %2088 = vmatprep.subr.mxu0 0.0
    %2089 = vmatpush1.msra.mxu0 0.0
    %2090 = vmatprep.subr.mxu0 0.0
    %2091 = vmatpush1.msra.mxu0 0.0
    %2092 = vmatprep.subr.mxu0 0.0
    %2093 = vmatpush1.msra.mxu0 0.0
    %2094 = vmatprep.subr.mxu0 0.0
    %2095 = vmatpush1.msra.mxu0 0.0
    %2096 = vmatprep.subr.mxu0 0.0
    %2097 = vmatpush1.msra.mxu0 0.0
    %2098 = vmatprep.subr.mxu0 0.0
    %2099 = vmatpush1.msra.mxu0 0.0
    %2100 = vmatprep.subr.mxu0 0.0
    %2101 = vmatpush1.msra.mxu0 0.0
    %2102 = vmatprep.mubr.f32.mxu0 0.0
    %2103 = vmatmul.mubr.f32.gmra.mrb[0].mxu0 %v1937
    %v2104 = vpop.f32.mrb[0].mxu0
    %v2105 = vadd.f32 0.0, %v2104
    %v2106 = vpop.f32.mrb[0].mxu0
    %v2107 = vadd.f32 0.0, %v2106
    %2108 = vmatprep.mubr.f32.mxu0 0.0
    %2109 = vmatmul.mubr.f32.gmra.mrb[0].mxu0 %v1938
    %v2110 = vpop.f32.mrb[0].mxu0
    %v2111 = vadd.f32 0.0, %v2110
    %v2112 = vpop.f32.mrb[0].mxu0
    %v2113 = vadd.f32 0.0, %v2112
    %2114 = vdwg.mxu0
    %v2115 = vadd.f32 %v1953, %v2028
    %v2116 = vadd.f32 %v1954, %v2030
    %v2117 = vadd.f32 %v1955, %v2105
    %v2118 = vadd.f32 %v1956, %v2107
    %v2119 = vadd.f32 %v1957, %v2034
    %v2120 = vadd.f32 %v1958, %v2036
    %v2121 = vadd.f32 %v1959, %v2111
    %v2122 = vadd.f32 %v1960, %v2113
    %v2123 = vmul.f32 %v2115, 0.5
    %v2124 = vmul.f32 %v2119, 0.5
    %v2125 = vtanh.pop %v2123
    %v2126 = vtanh.pop %v2124
    %v2127 = vadd.f32 %v2125, 1.0
    %v2128 = vadd.f32 %v2126, 1.0
    %v2129 = vmul.f32 %v2127, 0.5
    %v2130 = vmul.f32 %v2128, 0.5
    %v2131 = vmul.f32 %v2116, 0.5
    %v2132 = vmul.f32 %v2120, 0.5
    %v2133 = vtanh.pop %v2131
    %v2134 = vtanh.pop %v2132
    %v2135 = vadd.f32 %v2133, 1.0
    %v2136 = vadd.f32 %v2134, 1.0
    %v2137 = vmul.f32 %v2135, 0.5
    %v2138 = vmul.f32 %v2136, 0.5
    %v2139 = vtanh.pop %v2117
    %v2140 = vtanh.pop %v2121
    %v2141 = vmul.f32 %v2118, 0.5
    %v2142 = vmul.f32 %v2122, 0.5
    %v2143 = vtanh.pop %v2141
    %v2144 = vtanh.pop %v2142
    %v2145 = vadd.f32 %v2143, 1.0
    %v2146 = vadd.f32 %v2144, 1.0
    %v2147 = vmul.f32 %v2145, 0.5
    %v2148 = vmul.f32 %v2146, 0.5
    %v2149 = vmul.f32 %v2137, %v1933
    %v2150 = vmul.f32 %v2138, %v1934
    %v2151 = vmul.f32 %v2129, %v2139
    %v2152 = vmul.f32 %v2130, %v2140
    %v2153 = vadd.f32 %v2149, %v2151
    %v2154 = vadd.f32 %v2150, %v2152
    %v2155 = vtanh.pop %v2153
    %v2156 = vtanh.pop %v2154
    %v2157 = vmul.f32 %v2147, %v2155
    %v2158 = vmul.f32 %v2148, %v2156
    %vm2159 = vcmp.eq.s32.totalorder %v31, 7
    %vm2160 = vcmp.eq.s32.totalorder %v32, 7
    %v2161 = vsel %vm2159, 1, 0
    %v2162 = vsel %vm2160, 1, 0
    %2163 = vset.pattern.permute.xlu0 0
    %2164 = vperm.xlu0 %2163, %v2161
    %v2165 = vpop.permute.xlu0 %2164
    %2166 = vset.pattern.permute.xlu0 0
    %2167 = vperm.xlu0 %2166, %v2162
    %v2168 = vpop.permute.xlu0 %2167
    %vm2169 = vcmp.eq.s32.totalorder %v2165, 1
    %vm2170 = vcmp.eq.s32.totalorder %v2168, 1
    %v2171 = vsel %vm2169, %v2157, %v1951
    %v2172 = vsel %vm2170, %v2158, %v1952
    %v2173 = vld [vmem:[#allocation2 + $0x1c0] sm:$0xff]
    %v2174 = vld [vmem:[#allocation2 + $0x1c8] sm:$0xff]
    %v2175 = vld [vmem:[#allocation2 + $0x1d0] sm:$0xff]
    %v2176 = vld [vmem:[#allocation2 + $0x1d8] sm:$0xff]
    %v2177 = vld [vmem:[#allocation2 + $0x1e0] sm:$0xff]
    %v2178 = vld [vmem:[#allocation2 + $0x1e8] sm:$0xff]
    %v2179 = vld [vmem:[#allocation2 + $0x1f0] sm:$0xff]
    %v2180 = vld [vmem:[#allocation2 + $0x1f8] sm:$0xff]
    %2181 = vmatprep.subr.mxu0 %v34
    %2182 = vmatpush1.msra.mxu0 %v33
    %2183 = vmatprep.subr.mxu0 %v38
    %2184 = vmatpush1.msra.mxu0 %v37
    %2185 = vmatprep.subr.mxu0 %v42
    %2186 = vmatpush1.msra.mxu0 %v41
    %2187 = vmatprep.subr.mxu0 %v46
    %2188 = vmatpush1.msra.mxu0 %v45
    %2189 = vmatprep.subr.mxu0 %v50
    %2190 = vmatpush1.msra.mxu0 %v49
    %2191 = vmatprep.subr.mxu0 %v54
    %2192 = vmatpush1.msra.mxu0 %v53
    %2193 = vmatprep.subr.mxu0 %v58
    %2194 = vmatpush1.msra.mxu0 %v57
    %2195 = vmatprep.subr.mxu0 %v62
    %2196 = vmatpush1.msra.mxu0 %v61
    %2197 = vmatprep.subr.mxu0 %v66
    %2198 = vmatpush1.msra.mxu0 %v65
    %2199 = vmatprep.subr.mxu0 %v70
    %2200 = vmatpush1.msra.mxu0 %v69
    %2201 = vmatprep.subr.mxu0 %v74
    %2202 = vmatpush1.msra.mxu0 %v73
    %2203 = vmatprep.subr.mxu0 %v78
    %2204 = vmatpush1.msra.mxu0 %v77
    %2205 = vmatprep.subr.mxu0 %v82
    %2206 = vmatpush1.msra.mxu0 %v81
    %2207 = vmatprep.subr.mxu0 %v86
    %2208 = vmatpush1.msra.mxu0 %v85
    %2209 = vmatprep.subr.mxu0 %v90
    %2210 = vmatpush1.msra.mxu0 %v89
    %2211 = vmatprep.subr.mxu0 %v94
    %2212 = vmatpush1.msra.mxu0 %v93
    %2213 = vmatprep.subr.mxu0 0.0
    %2214 = vmatpush1.msra.mxu0 0.0
    %2215 = vmatprep.subr.mxu0 0.0
    %2216 = vmatpush1.msra.mxu0 0.0
    %2217 = vmatprep.subr.mxu0 0.0
    %2218 = vmatpush1.msra.mxu0 0.0
    %2219 = vmatprep.subr.mxu0 0.0
    %2220 = vmatpush1.msra.mxu0 0.0
    %2221 = vmatprep.subr.mxu0 0.0
    %2222 = vmatpush1.msra.mxu0 0.0
    %2223 = vmatprep.subr.mxu0 0.0
    %2224 = vmatpush1.msra.mxu0 0.0
    %2225 = vmatprep.subr.mxu0 0.0
    %2226 = vmatpush1.msra.mxu0 0.0
    %2227 = vmatprep.subr.mxu0 0.0
    %2228 = vmatpush1.msra.mxu0 0.0
    %2229 = vmatprep.subr.mxu0 0.0
    %2230 = vmatpush1.msra.mxu0 0.0
    %2231 = vmatprep.subr.mxu0 0.0
    %2232 = vmatpush1.msra.mxu0 0.0
    %2233 = vmatprep.subr.mxu0 0.0
    %2234 = vmatpush1.msra.mxu0 0.0
    %2235 = vmatprep.subr.mxu0 0.0
    %2236 = vmatpush1.msra.mxu0 0.0
    %2237 = vmatprep.subr.mxu0 0.0
    %2238 = vmatpush1.msra.mxu0 0.0
    %2239 = vmatprep.subr.mxu0 0.0
    %2240 = vmatpush1.msra.mxu0 0.0
    %2241 = vmatprep.subr.mxu0 0.0
    %2242 = vmatpush1.msra.mxu0 0.0
    %2243 = vmatprep.subr.mxu0 0.0
    %2244 = vmatpush1.msra.mxu0 0.0
    %2245 = vmatprep.mubr.f32.mxu0 0.0
    %2246 = vmatmul.mubr.f32.gmra.mrb[0].mxu0 %v2157
    %v2247 = vpop.f32.mrb[0].mxu0
    %v2248 = vadd.f32 0.0, %v2247
    %v2249 = vpop.f32.mrb[0].mxu0
    %v2250 = vadd.f32 0.0, %v2249
    %2251 = vmatprep.mubr.f32.mxu0 0.0
    %2252 = vmatmul.mubr.f32.gmra.mrb[0].mxu0 %v2158
    %v2253 = vpop.f32.mrb[0].mxu0
    %v2254 = vadd.f32 0.0, %v2253
    %v2255 = vpop.f32.mrb[0].mxu0
    %v2256 = vadd.f32 0.0, %v2255
    %2257 = vdwg.mxu0
    %2258 = vmatprep.subr.mxu0 %v36
    %2259 = vmatpush1.msra.mxu0 %v35
    %2260 = vmatprep.subr.mxu0 %v40
    %2261 = vmatpush1.msra.mxu0 %v39
    %2262 = vmatprep.subr.mxu0 %v44
    %2263 = vmatpush1.msra.mxu0 %v43
    %2264 = vmatprep.subr.mxu0 %v48
    %2265 = vmatpush1.msra.mxu0 %v47
    %2266 = vmatprep.subr.mxu0 %v52
    %2267 = vmatpush1.msra.mxu0 %v51
    %2268 = vmatprep.subr.mxu0 %v56
    %2269 = vmatpush1.msra.mxu0 %v55
    %2270 = vmatprep.subr.mxu0 %v60
    %2271 = vmatpush1.msra.mxu0 %v59
    %2272 = vmatprep.subr.mxu0 %v64
    %2273 = vmatpush1.msra.mxu0 %v63
    %2274 = vmatprep.subr.mxu0 %v68
    %2275 = vmatpush1.msra.mxu0 %v67
    %2276 = vmatprep.subr.mxu0 %v72
    %2277 = vmatpush1.msra.mxu0 %v71
    %2278 = vmatprep.subr.mxu0 %v76
    %2279 = vmatpush1.msra.mxu0 %v75
    %2280 = vmatprep.subr.mxu0 %v80
    %2281 = vmatpush1.msra.mxu0 %v79
    %2282 = vmatprep.subr.mxu0 %v84
    %2283 = vmatpush1.msra.mxu0 %v83
    %2284 = vmatprep.subr.mxu0 %v88
    %2285 = vmatpush1.msra.mxu0 %v87
    %2286 = vmatprep.subr.mxu0 %v92
    %2287 = vmatpush1.msra.mxu0 %v91
    %2288 = vmatprep.subr.mxu0 %v96
    %2289 = vmatpush1.msra.mxu0 %v95
    %2290 = vmatprep.subr.mxu0 0.0
    %2291 = vmatpush1.msra.mxu0 0.0
    %2292 = vmatprep.subr.mxu0 0.0
    %2293 = vmatpush1.msra.mxu0 0.0
    %2294 = vmatprep.subr.mxu0 0.0
    %2295 = vmatpush1.msra.mxu0 0.0
    %2296 = vmatprep.subr.mxu0 0.0
    %2297 = vmatpush1.msra.mxu0 0.0
    %2298 = vmatprep.subr.mxu0 0.0
    %2299 = vmatpush1.msra.mxu0 0.0
    %2300 = vmatprep.subr.mxu0 0.0
    %2301 = vmatpush1.msra.mxu0 0.0
    %2302 = vmatprep.subr.mxu0 0.0
    %2303 = vmatpush1.msra.mxu0 0.0
    %2304 = vmatprep.subr.mxu0 0.0
    %2305 = vmatpush1.msra.mxu0 0.0
    %2306 = vmatprep.subr.mxu0 0.0
    %2307 = vmatpush1.msra.mxu0 0.0
    %2308 = vmatprep.subr.mxu0 0.0
    %2309 = vmatpush1.msra.mxu0 0.0
    %2310 = vmatprep.subr.mxu0 0.0
    %2311 = vmatpush1.msra.mxu0 0.0
    %2312 = vmatprep.subr.mxu0 0.0
    %2313 = vmatpush1.msra.mxu0 0.0
    %2314 = vmatprep.subr.mxu0 0.0
    %2315 = vmatpush1.msra.mxu0 0.0
    %2316 = vmatprep.subr.mxu0 0.0
    %2317 = vmatpush1.msra.mxu0 0.0
    %2318 = vmatprep.subr.mxu0 0.0
    %2319 = vmatpush1.msra.mxu0 0.0
    %2320 = vmatprep.subr.mxu0 0.0
    %2321 = vmatpush1.msra.mxu0 0.0
    %2322 = vmatprep.mubr.f32.mxu0 0.0
    %2323 = vmatmul.mubr.f32.gmra.mrb[0].mxu0 %v2157
    %v2324 = vpop.f32.mrb[0].mxu0
    %v2325 = vadd.f32 0.0, %v2324
    %v2326 = vpop.f32.mrb[0].mxu0
    %v2327 = vadd.f32 0.0, %v2326
    %2328 = vmatprep.mubr.f32.mxu0 0.0
    %2329 = vmatmul.mubr.f32.gmra.mrb[0].mxu0 %v2158
    %v2330 = vpop.f32.mrb[0].mxu0
    %v2331 = vadd.f32 0.0, %v2330
    %v2332 = vpop.f32.mrb[0].mxu0
    %v2333 = vadd.f32 0.0, %v2332
    %2334 = vdwg.mxu0
    %v2335 = vadd.f32 %v2173, %v2248
    %v2336 = vadd.f32 %v2174, %v2250
    %v2337 = vadd.f32 %v2175, %v2325
    %v2338 = vadd.f32 %v2176, %v2327
    %v2339 = vadd.f32 %v2177, %v2254
    %v2340 = vadd.f32 %v2178, %v2256
    %v2341 = vadd.f32 %v2179, %v2331
    %v2342 = vadd.f32 %v2180, %v2333
    %v2343 = vmul.f32 %v2335, 0.5
    %v2344 = vmul.f32 %v2339, 0.5
    %v2345 = vtanh.pop %v2343
    %v2346 = vtanh.pop %v2344
    %v2347 = vadd.f32 %v2345, 1.0
    %v2348 = vadd.f32 %v2346, 1.0
    %v2349 = vmul.f32 %v2347, 0.5
    %v2350 = vmul.f32 %v2348, 0.5
    %v2351 = vmul.f32 %v2336, 0.5
    %v2352 = vmul.f32 %v2340, 0.5
    %v2353 = vtanh.pop %v2351
    %v2354 = vtanh.pop %v2352
    %v2355 = vadd.f32 %v2353, 1.0
    %v2356 = vadd.f32 %v2354, 1.0
    %v2357 = vmul.f32 %v2355, 0.5
    %v2358 = vmul.f32 %v2356, 0.5
    %v2359 = vtanh.pop %v2337
    %v2360 = vtanh.pop %v2341
    %v2361 = vmul.f32 %v2338, 0.5
    %v2362 = vmul.f32 %v2342, 0.5
    %v2363 = vtanh.pop %v2361
    %v2364 = vtanh.pop %v2362
    %v2365 = vadd.f32 %v2363, 1.0
    %v2366 = vadd.f32 %v2364, 1.0
    %v2367 = vmul.f32 %v2365, 0.5
    %v2368 = vmul.f32 %v2366, 0.5
    %v2369 = vmul.f32 %v2357, %v2153
    %v2370 = vmul.f32 %v2358, %v2154
    %v2371 = vmul.f32 %v2349, %v2359
    %v2372 = vmul.f32 %v2350, %v2360
    %v2373 = vadd.f32 %v2369, %v2371
    %v2374 = vadd.f32 %v2370, %v2372
    %v2375 = vtanh.pop %v2373
    %v2376 = vtanh.pop %v2374
    %v2377 = vmul.f32 %v2367, %v2375
    %v2378 = vmul.f32 %v2368, %v2376
    %vm2379 = vcmp.eq.s32.totalorder %v31, 8
    %vm2380 = vcmp.eq.s32.totalorder %v32, 8
    %v2381 = vsel %vm2379, 1, 0
    %v2382 = vsel %vm2380, 1, 0
    %2383 = vset.pattern.permute.xlu0 0
    %2384 = vperm.xlu0 %2383, %v2381
    %v2385 = vpop.permute.xlu0 %2384
    %2386 = vset.pattern.permute.xlu0 0
    %2387 = vperm.xlu0 %2386, %v2382
    %v2388 = vpop.permute.xlu0 %2387
    %vm2389 = vcmp.eq.s32.totalorder %v2385, 1
    %vm2390 = vcmp.eq.s32.totalorder %v2388, 1
    %v2391 = vsel %vm2389, %v2377, %v2171
    %v2392 = vsel %vm2390, %v2378, %v2172
    %v2394 = vlaneseq
    %v2395 = vshrl.u32 %v2394, 7
    %v2396 = vsub.s32 0, %v2395
    %v2397 = vrot.slane %v131, %v2396
    %2399 = vmatprep.subr.mxu0 0.0
    %2400 = vmatpush1.msra.mxu0 %v97
    %2401 = vmatprep.subr.mxu0 0.0
    %2402 = vmatpush1.msra.mxu0 %v98
    %2403 = vmatprep.subr.mxu0 0.0
    %2404 = vmatpush1.msra.mxu0 %v99
    %2405 = vmatprep.subr.mxu0 0.0
    %2406 = vmatpush1.msra.mxu0 %v100
    %2407 = vmatprep.subr.mxu0 0.0
    %2408 = vmatpush1.msra.mxu0 %v101
    %2409 = vmatprep.subr.mxu0 0.0
    %2410 = vmatpush1.msra.mxu0 %v102
    %2411 = vmatprep.subr.mxu0 0.0
    %2412 = vmatpush1.msra.mxu0 %v103
    %2413 = vmatprep.subr.mxu0 0.0
    %2414 = vmatpush1.msra.mxu0 %v104
    %2415 = vmatprep.subr.mxu0 0.0
    %2416 = vmatpush1.msra.mxu0 %v105
    %2417 = vmatprep.subr.mxu0 0.0
    %2418 = vmatpush1.msra.mxu0 %v106
    %2419 = vmatprep.subr.mxu0 0.0
    %2420 = vmatpush1.msra.mxu0 %v107
    %2421 = vmatprep.subr.mxu0 0.0
    %2422 = vmatpush1.msra.mxu0 %v108
    %2423 = vmatprep.subr.mxu0 0.0
    %2424 = vmatpush1.msra.mxu0 %v109
    %2425 = vmatprep.subr.mxu0 0.0
    %2426 = vmatpush1.msra.mxu0 %v110
    %2427 = vmatprep.subr.mxu0 0.0
    %2428 = vmatpush1.msra.mxu0 %v111
    %2429 = vmatprep.subr.mxu0 0.0
    %2430 = vmatpush1.msra.mxu0 %v112
    %2431 = vmatprep.subr.mxu0 0.0
    %2432 = vmatpush1.msra.mxu0 0.0
    %2433 = vmatprep.subr.mxu0 0.0
    %2434 = vmatpush1.msra.mxu0 0.0
    %2435 = vmatprep.subr.mxu0 0.0
    %2436 = vmatpush1.msra.mxu0 0.0
    %2437 = vmatprep.subr.mxu0 0.0
    %2438 = vmatpush1.msra.mxu0 0.0
    %2439 = vmatprep.subr.mxu0 0.0
    %2440 = vmatpush1.msra.mxu0 0.0
    %2441 = vmatprep.subr.mxu0 0.0
    %2442 = vmatpush1.msra.mxu0 0.0
    %2443 = vmatprep.subr.mxu0 0.0
    %2444 = vmatpush1.msra.mxu0 0.0
    %2445 = vmatprep.subr.mxu0 0.0
    %2446 = vmatpush1.msra.mxu0 0.0
    %2447 = vmatprep.subr.mxu0 0.0
    %2448 = vmatpush1.msra.mxu0 0.0
    %2449 = vmatprep.subr.mxu0 0.0
    %2450 = vmatpush1.msra.mxu0 0.0
    %2451 = vmatprep.subr.mxu0 0.0
    %2452 = vmatpush1.msra.mxu0 0.0
    %2453 = vmatprep.subr.mxu0 0.0
    %2454 = vmatpush1.msra.mxu0 0.0
    %2455 = vmatprep.subr.mxu0 0.0
    %2456 = vmatpush1.msra.mxu0 0.0
    %2457 = vmatprep.subr.mxu0 0.0
    %2458 = vmatpush1.msra.mxu0 0.0
    %2459 = vmatprep.subr.mxu0 0.0
    %2460 = vmatpush1.msra.mxu0 0.0
    %2461 = vmatprep.subr.mxu0 0.0
    %2462 = vmatpush1.msra.mxu0 0.0
    %2463 = vmatprep.mubr.f32.mxu0 0.0
    %2464 = vmatmul.mubr.f32.gmra.mrb[0].mxu0 %v2391
    %v2465 = vpop.f32.mrb[0].mxu0
    %v2466 = vadd.f32 %v2397, %v2465
    %v2467 = vpop.f32.mrb[0].mxu0
    %2468 = vmatprep.mubr.f32.mxu0 0.0
    %2469 = vmatmul.mubr.f32.gmra.mrb[0].mxu0 %v2392
    %v2470 = vpop.f32.mrb[0].mxu0
    %v2471 = vadd.f32 %v2397, %v2470
    %v2472 = vpop.f32.mrb[0].mxu0
    %2473 = vdwg.mxu0
    %v2474 = vmax.f32 %v2466, 0.0
    %v2475 = vmax.f32 %v2471, 0.0
    %v2477 = vlaneseq
    %v2478 = vshrl.u32 %v2477, 7
    %v2479 = vsub.s32 0, %v2478
    %v2480 = vrot.slane %v132, %v2479
    %2482 = vmatprep.subr.mxu0 0.0
    %2483 = vmatpush1.msra.mxu0 %v113
    %2484 = vmatprep.subr.mxu0 0.0
    %2485 = vmatpush1.msra.mxu0 %v114
    %2486 = vmatprep.subr.mxu0 0.0
    %2487 = vmatpush1.msra.mxu0 %v115
    %2488 = vmatprep.subr.mxu0 0.0
    %2489 = vmatpush1.msra.mxu0 %v116
    %2490 = vmatprep.subr.mxu0 0.0
    %2491 = vmatpush1.msra.mxu0 %v117
    %2492 = vmatprep.subr.mxu0 0.0
    %2493 = vmatpush1.msra.mxu0 %v118
    %2494 = vmatprep.subr.mxu0 0.0
    %2495 = vmatpush1.msra.mxu0 %v119
    %2496 = vmatprep.subr.mxu0 0.0
    %2497 = vmatpush1.msra.mxu0 %v120
    %2498 = vmatprep.subr.mxu0 0.0
    %2499 = vmatpush1.msra.mxu0 %v121
    %2500 = vmatprep.subr.mxu0 0.0
    %2501 = vmatpush1.msra.mxu0 %v122
    %2502 = vmatprep.subr.mxu0 0.0
    %2503 = vmatpush1.msra.mxu0 %v123
    %2504 = vmatprep.subr.mxu0 0.0
    %2505 = vmatpush1.msra.mxu0 %v124
    %2506 = vmatprep.subr.mxu0 0.0
    %2507 = vmatpush1.msra.mxu0 %v125
    %2508 = vmatprep.subr.mxu0 0.0
    %2509 = vmatpush1.msra.mxu0 %v126
    %2510 = vmatprep.subr.mxu0 0.0
    %2511 = vmatpush1.msra.mxu0 %v127
    %2512 = vmatprep.subr.mxu0 0.0
    %2513 = vmatpush1.msra.mxu0 %v128
    %2514 = vmatprep.subr.mxu0 0.0
    %2515 = vmatpush1.msra.mxu0 0.0
    %2516 = vmatprep.subr.mxu0 0.0
    %2517 = vmatpush1.msra.mxu0 0.0
    %2518 = vmatprep.subr.mxu0 0.0
    %2519 = vmatpush1.msra.mxu0 0.0
    %2520 = vmatprep.subr.mxu0 0.0
    %2521 = vmatpush1.msra.mxu0 0.0
    %2522 = vmatprep.subr.mxu0 0.0
    %2523 = vmatpush1.msra.mxu0 0.0
    %2524 = vmatprep.subr.mxu0 0.0
    %2525 = vmatpush1.msra.mxu0 0.0
    %2526 = vmatprep.subr.mxu0 0.0
    %2527 = vmatpush1.msra.mxu0 0.0
    %2528 = vmatprep.subr.mxu0 0.0
    %2529 = vmatpush1.msra.mxu0 0.0
    %2530 = vmatprep.subr.mxu0 0.0
    %2531 = vmatpush1.msra.mxu0 0.0
    %2532 = vmatprep.subr.mxu0 0.0
    %2533 = vmatpush1.msra.mxu0 0.0
    %2534 = vmatprep.subr.mxu0 0.0
    %2535 = vmatpush1.msra.mxu0 0.0
    %2536 = vmatprep.subr.mxu0 0.0
    %2537 = vmatpush1.msra.mxu0 0.0
    %2538 = vmatprep.subr.mxu0 0.0
    %2539 = vmatpush1.msra.mxu0 0.0
    %2540 = vmatprep.subr.mxu0 0.0
    %2541 = vmatpush1.msra.mxu0 0.0
    %2542 = vmatprep.subr.mxu0 0.0
    %2543 = vmatpush1.msra.mxu0 0.0
    %2544 = vmatprep.subr.mxu0 0.0
    %2545 = vmatpush1.msra.mxu0 0.0
    %2546 = vmatprep.mubr.f32.mxu0 0.0
    %2547 = vmatmul.mubr.f32.gmra.mrb[0].mxu0 %v2474
    %v2548 = vpop.f32.mrb[0].mxu0
    %v2549 = vadd.f32 %v2480, %v2548
    %v2550 = vpop.f32.mrb[0].mxu0
    %2551 = vmatprep.mubr.f32.mxu0 0.0
    %2552 = vmatmul.mubr.f32.gmra.mrb[0].mxu0 %v2475
    %v2553 = vpop.f32.mrb[0].mxu0
    %v2554 = vadd.f32 %v2480, %v2553
    %v2555 = vpop.f32.mrb[0].mxu0
    %2556 = vdwg.mxu0
    %v2557 = vmax.f32 %v2549, 0.0
    %v2558 = vmax.f32 %v2554, 0.0
    %v2560 = vlaneseq
    %v2561 = vshrl.u32 %v2560, 7
    %v2562 = vsub.s32 0, %v2561
    %v2563 = vrot.slane %v133, %v2562
    %v2565 = vmul.f32 %v2557, %v2563
    %v2566 = vmul.f32 %v2558, %v2563
    %2567 = vadd.xlane.f32.xlu0 %v2565
    %v2568 = vpop.xlane.xlu0 %2567
    %2569 = vadd.xlane.f32.xlu0 %v2566
    %v2570 = vpop.xlane.xlu0 %2569
    %v2572 = vlaneseq
    %v2573 = vshrl.u32 %v2572, 7
    %v2574 = vsub.s32 0, %v2573
    %v2575 = vrot.slane %v134, %v2574
    %v2577 = vadd.f32 %v2568, %v2575
    %v2578 = vadd.f32 %v2570, %v2575
    %v2579 = vmax.f32 %v2577, %v2578
    %2581 = vrot.lane.b32.xlu0 %v2579, 1
    %v2582 = vpop.permute.xlu0 %2581
    %v2584 = vmul.f32 %v2575, %v2582
    %2585 = vrot.lane.b32.xlu0 %v2575, 127
    %v2586 = vpop.permute.xlu0 %2585
    %v2588 = vadd.f32 %v2584, %v2586
    %v2589 = vmul.f32 %v2588, 0.5
    %v2590 = vtanh.pop %v2589
    %v2591 = vsub.f32 1.0, %v2590
    %v2592 = vmul.f32 %v2591, 0.5
    %2594 = vrot.lane.b32.xlu0 %v2592, 127
    %v2595 = vpop.permute.xlu0 %2594
    %2597 = vst.msk [vmem:[%s4] sm:$0xff] %vm189, %v2595
    // Predicated region
    $region22: #{word_confidence_be_forward.1} parent=1 // pred_check
      _
    $region23: #{word_confidence_be_forward.1} parent=1 // pred_check_branch
      %2599 = sbr.rel (0) target = $region25
    $region24: #{word_confidence_be_forward.1} parent=1 // pred_region
      _
    $region25: #{word_confidence_be_forward.1} parent=1 // pred_fallthru
      _
    // Predicated region
    $region26: #{word_confidence_be_forward.1} parent=1 // pred_check
      _
    $region27: #{word_confidence_be_forward.1} parent=1 // pred_check_branch
      %2601 = sbr.rel (0) target = $region29
    $region28: #{word_confidence_be_forward.1} parent=1 // pred_region
      _
    $region29: #{word_confidence_be_forward.1} parent=1 // pred_fallthru
      _
    %2602 = vsyncpa [#allocation4], 1

</llo_original>
